<compile_context>
chip_gen: v6e
topology: v6e:2x2x1
jax: 0.10.0
libtpu: 0.0.40
codegen_flags: <defaults>
</compile_context>

<pallas_src>
import functools
import math

import jax
import jax.numpy as jnp
from jax.experimental import pallas as pl
from jax.experimental.pallas import tpu as pltpu

# ---- hyperparameters (the PyTorch module's module-level globals) ----
d_model = 32
d_k = 8
d_v = 8
n_heads = 4


def _mha_kernel(xq_ref, xk_ref, xv_ref, mask_ref,
                wq_ref, wk_ref, wv_ref, wfc_ref, gamma_ref, beta_ref,
                out_ref, attn_ref):
    """One grid step = (batch block b, query block q).

    xq_ref   : (Bt, Sq, d_model)  query-block activations (also the residual)
    xk_ref   : (Bt, S,  d_model)  full-length key activations
    xv_ref   : (Bt, S,  d_model)  full-length value activations
    mask_ref : (Bt, Sq, S) int8   nonzero = masked
    wq_ref   : (d_model, H*d_k)   W_Q pre-scaled by 1/sqrt(d_k)
    wk_ref   : (d_model, H*d_k)
    wv_ref   : (d_model, H*d_v)
    wfc_ref  : (H*d_v, d_model)
    out_ref  : (Bt, Sq, d_model)
    attn_ref : (Bt, H, Sq, S)     probs written directly in (B,H,S,S) layout
    """
    Bt, Sq, D = xq_ref.shape
    S = xk_ref.shape[1]
    H = n_heads

    xq = xq_ref[...]
    residual = xq

    # ---- projections: fold (batch, seq) into the matmul M dimension ----
    q2 = jnp.dot(xq.reshape(Bt * Sq, D), wq_ref[...],
                 preferred_element_type=jnp.float32)            # (Bt*Sq, H*d_k)
    k2 = jnp.dot(xk_ref[...].reshape(Bt * S, D), wk_ref[...],
                 preferred_element_type=jnp.float32)            # (Bt*S,  H*d_k)
    v2 = jnp.dot(xv_ref[...].reshape(Bt * S, D), wv_ref[...],
                 preferred_element_type=jnp.float32)            # (Bt*S,  H*d_v)

    def head_major(x2, rows, d):
        # (Bt*rows, H*d) -> (Bt*H, rows, d): static lane slices stacked on a
        # leading axis (axis-1 concat sits above the tiled dims — no lane concat).
        parts = [x2[:, h * d:(h + 1) * d].reshape(Bt, 1, rows, d)
                 for h in range(H)]
        return jnp.concatenate(parts, axis=1).reshape(Bt * H, rows, d)

    qh = head_major(q2, Sq, d_k)            # (Bt*H, Sq, d_k)
    kh = head_major(k2, S, d_k)             # (Bt*H, S,  d_k)
    vh = head_major(v2, S, d_v)             # (Bt*H, S,  d_v)

    # ---- head-batched scores + masked softmax (all f32) ----
    scores = jnp.einsum("bqd,bkd->bqk", qh, kh,
                        preferred_element_type=jnp.float32)     # (Bt*H, Sq, S)
    scores = scores.reshape(Bt, H, Sq, S)
    masked = (mask_ref[...] != 0)[:, None, :, :]                # (Bt, 1, Sq, S)
    scores = jnp.where(masked, jnp.float32(-1e9), scores)

    m = jnp.max(scores, axis=-1, keepdims=True)
    e = jnp.exp(scores - m)
    denom = jnp.sum(e, axis=-1, keepdims=True)
    r = pl.reciprocal(denom, approx=True)                       # EUP slot
    r = r * (2.0 - denom * r)                                   # one Newton step
    probs = e * r                                               # (Bt, H, Sq, S)

    # Single store, already in (B, H, S, S) layout — no wrapper transpose needed.
    attn_ref[...] = probs.astype(attn_ref.dtype)

    # ---- context + output projection (per-head accumulation, no lane concat) ----
    ctx = jnp.einsum("bqk,bkd->bqd", probs.reshape(Bt * H, Sq, S), vh,
                     preferred_element_type=jnp.float32)        # (Bt*H, Sq, d_v)
    ctx = ctx.reshape(Bt, H, Sq, d_v)

    wfc = wfc_ref[...]
    y = None
    for h in range(H):                                          # static unroll, H=4
        part = jnp.dot(ctx[:, h].reshape(Bt * Sq, d_v),
                       wfc[h * d_v:(h + 1) * d_v, :],
                       preferred_element_type=jnp.float32)
        y = part if y is None else y + part

    y = y.reshape(Bt, Sq, D) + residual

    # ---- LayerNorm (eps=1e-5, biased variance) ----
    mean = jnp.mean(y, axis=-1, keepdims=True)
    var = jnp.mean((y - mean) ** 2, axis=-1, keepdims=True)
    y_norm = (y - mean) * jax.lax.rsqrt(var + 1e-5)
    out_ref[...] = (y_norm * gamma_ref[0] + beta_ref[0]).astype(out_ref.dtype)


def _divisors(n):
    return [d for d in range(1, n + 1) if n % d == 0]


def _pick_block_q(S, cap=256):
    """Largest divisor of S that is either S itself or a multiple of 32
    (keeps the int8-mask and f32 blocks tile-aligned), capped at `cap`."""
    best = S
    for d in _divisors(S):
        if d <= cap and (d == S or d % 32 == 0):
            best = d
    return best


def _pick_block_b(B, S, Sq, budget_bytes=6 * 1024 * 1024):
    """Largest divisor Bt of B whose double-buffered working set stays under
    `budget_bytes`, keeping >= 2 total grid steps when possible (v7x has 2 TCs)."""
    def step_bytes(bt):
        attn = bt * n_heads * Sq * S * 4          # probs block (f32)
        kv = 2 * bt * S * d_model * 4             # xk + xv blocks
        qo = 2 * bt * Sq * d_model * 4            # xq + out blocks
        msk = bt * Sq * S                         # int8 mask block
        return 2 * (attn + kv + qo + msk)         # x2: double buffering
    best = 1
    for bt in _divisors(B):
        if step_bytes(bt) <= budget_bytes:
            best = bt
    if (B // best) * (S // Sq) < 2:
        smaller = [d for d in _divisors(B)
                   if d < best and (B // d) * (S // Sq) >= 2]
        if smaller:
            best = smaller[-1]
    return best


def prepare_weights(w_q, w_k, w_v, w_fc):
    """One-time weight preparation (hoisted out of the per-call jitted path):
    pre-scale W_Q by 1/sqrt(d_k) so the kernel needs no separate score scaling."""
    inv_sqrt_dk = 1.0 / math.sqrt(float(d_k))
    return (jnp.asarray(w_q, jnp.float32) * inv_sqrt_dk,
            jnp.asarray(w_k, jnp.float32),
            jnp.asarray(w_v, jnp.float32),
            jnp.asarray(w_fc, jnp.float32))


@functools.partial(jax.jit, static_argnames=("block_b", "block_q"))
def multi_head_attention(input_Q, input_K, input_V, attn_mask,
                         w_q_scaled, w_k, w_v, w_fc, gamma, beta,
                         block_b=None, block_q=None):
    """Pallas MultiHeadAttention forward.

    input_Q/K/V : (B, S, d_model) float32
    attn_mask   : (B, S, S), nonzero / True = masked (bool or int8 preferred)
    w_q_scaled  : (d_model, n_heads*d_k)  W_Q^T pre-scaled by 1/sqrt(d_k)
                  (see prepare_weights)
    w_k, w_v    : (d_model, n_heads*d_k), (d_model, n_heads*d_v)
    w_fc        : (n_heads*d_v, d_model)
    gamma/beta  : (1, d_model)
    returns (output (B, S, d_model), attn (B, n_heads, S, S))
    """
    B, S, _ = input_Q.shape
    Sq = block_q if block_q is not None else _pick_block_q(S)
    Bt = block_b if block_b is not None else _pick_block_b(B, S, Sq)
    assert B % Bt == 0 and S % Sq == 0
    assert Sq == S or Sq % 32 == 0      # keeps int8/f32 blocks tile-aligned
    grid = (B // Bt, S // Sq)

    Hdk = n_heads * d_k
    Hdv = n_heads * d_v

    xq = input_Q.astype(jnp.float32)
    xk = input_K.astype(jnp.float32)
    xv = input_V.astype(jnp.float32)
    # int8 mask: 4x less HBM traffic than a f32 mask; no-op if already int8.
    mask = attn_mask if attn_mask.dtype == jnp.int8 else attn_mask.astype(jnp.int8)

    out_shapes = (
        jax.ShapeDtypeStruct((B, S, d_model), jnp.float32),
        # TODO(synk): emit bf16 probs on v7x if VMEM-tight at very large S.
        jax.ShapeDtypeStruct((B, n_heads, S, S), jnp.float32),
    )

    out, attn = pl.pallas_call(
        _mha_kernel,
        out_shape=out_shapes,
        grid_spec=pltpu.PrefetchScalarGridSpec(
            num_scalar_prefetch=0,
            grid=grid,
            in_specs=[
                pl.BlockSpec((Bt, Sq, d_model), lambda b, q: (b, q, 0)),
                pl.BlockSpec((Bt, S, d_model), lambda b, q: (b, 0, 0)),
                pl.BlockSpec((Bt, S, d_model), lambda b, q: (b, 0, 0)),
                pl.BlockSpec((Bt, Sq, S), lambda b, q: (b, q, 0)),
                pl.BlockSpec((d_model, Hdk), lambda b, q: (0, 0)),
                pl.BlockSpec((d_model, Hdk), lambda b, q: (0, 0)),
                pl.BlockSpec((d_model, Hdv), lambda b, q: (0, 0)),
                pl.BlockSpec((Hdv, d_model), lambda b, q: (0, 0)),
                pl.BlockSpec((1, d_model), lambda b, q: (0, 0)),
                pl.BlockSpec((1, d_model), lambda b, q: (0, 0)),
            ],
            out_specs=(
                pl.BlockSpec((Bt, Sq, d_model), lambda b, q: (b, q, 0)),
                pl.BlockSpec((Bt, n_heads, Sq, S), lambda b, q: (b, 0, q, 0)),
            ),
        ),
        compiler_params=pltpu.CompilerParams(
            dimension_semantics=("parallel", "parallel"),
            vmem_limit_bytes=32 * 1024 * 1024,
        ),
    )(xq, xk, xv, mask, w_q_scaled, w_k, w_v, w_fc, gamma, beta)

    return out, attn


def _reference(input_Q, input_K, input_V, attn_mask,
               w_q, w_k, w_v, w_fc, gamma, beta):
    """Pure-JAX reference mirroring the PyTorch module (uses the UNscaled W_Q)."""
    B, S, _ = input_Q.shape
    Q = (input_Q @ w_q).reshape(B, S, n_heads, d_k).transpose(0, 2, 1, 3)
    K = (input_K @ w_k).reshape(B, S, n_heads, d_k).transpose(0, 2, 1, 3)
    V = (input_V @ w_v).reshape(B, S, n_heads, d_v).transpose(0, 2, 1, 3)
    mask = (attn_mask != 0)[:, None, :, :]
    scores = jnp.einsum("bhqd,bhkd->bhqk", Q, K) / jnp.sqrt(jnp.float32(d_k))
    scores = jnp.where(mask, -1e9, scores)
    attn = jax.nn.softmax(scores, axis=-1)
    ctx = jnp.einsum("bhqk,bhkd->bhqd", attn, V)
    ctx = ctx.transpose(0, 2, 1, 3).reshape(B, S, n_heads * d_v)
    out = ctx @ w_fc + input_Q
    mean = out.mean(-1, keepdims=True)
    var = ((out - mean) ** 2).mean(-1, keepdims=True)
    out = (out - mean) * jax.lax.rsqrt(var + 1e-5) * gamma[0] + beta[0]
    return out, attn


if __name__ == "__main__":
    B, S = 4, 64        # small, but grid = (2, 2) exercises batch- and query-tiling
    key = jax.random.PRNGKey(0)
    k1, k2, k3, k4, k5, k6, k7 = jax.random.split(key, 7)

    input_Q = jax.random.normal(k1, (B, S, d_model), jnp.float32)
    input_K = jax.random.normal(k2, (B, S, d_model), jnp.float32)
    input_V = jax.random.normal(k3, (B, S, d_model), jnp.float32)

    # causal mask: 1 above the diagonal -> masked out (int8, broadcast over batch)
    causal = jnp.triu(jnp.ones((S, S), jnp.int8), k=1)
    attn_mask = jnp.broadcast_to(causal, (B, S, S))

    # deterministic parameter init (torch Linear weight is (out,in); we store W^T)
    scale = 0.1
    w_q = scale * jax.random.normal(k4, (d_model, n_heads * d_k), jnp.float32)
    w_k = scale * jax.random.normal(k5, (d_model, n_heads * d_k), jnp.float32)
    w_v = scale * jax.random.normal(k6, (d_model, n_heads * d_v), jnp.float32)
    w_fc = scale * jax.random.normal(k7, (n_heads * d_v, d_model), jnp.float32)
    gamma = jnp.ones((1, d_model), jnp.float32)
    beta = jnp.zeros((1, d_model), jnp.float32)

    # one-time weight prep (outside the per-call path)
    w_q_s, w_k_p, w_v_p, w_fc_p = prepare_weights(w_q, w_k, w_v, w_fc)

    out, attn = multi_head_attention(input_Q, input_K, input_V, attn_mask,
                                     w_q_s, w_k_p, w_v_p, w_fc_p, gamma, beta,
                                     block_b=2, block_q=32)
    jax.block_until_ready((out, attn))

    ref_out, ref_attn = _reference(input_Q, input_K, input_V, attn_mask,
                                   w_q, w_k, w_v, w_fc, gamma, beta)
    assert out.shape == (B, S, d_model) and attn.shape == (B, n_heads, S, S)
    assert jnp.allclose(out, ref_out, atol=1e-4, rtol=1e-4)
    assert jnp.allclose(attn, ref_attn, atol=1e-4, rtol=1e-4)

    print("KERNEL_OK")
</pallas_src>

<mosaic_0001>
module attributes {stable_mosaic.version = 11 : i64} {
  func.func @_mha_kernel(%arg0: i32, %arg1: i32, %arg2: memref<2x32x32xf32, #tpu.memory_space<vmem>>, %arg3: memref<2x64x32xf32, #tpu.memory_space<vmem>>, %arg4: memref<2x64x32xf32, #tpu.memory_space<vmem>>, %arg5: memref<2x32x64xi8, #tpu.memory_space<vmem>>, %arg6: memref<32x32xf32, #tpu.memory_space<vmem>>, %arg7: memref<32x32xf32, #tpu.memory_space<vmem>>, %arg8: memref<32x32xf32, #tpu.memory_space<vmem>>, %arg9: memref<32x32xf32, #tpu.memory_space<vmem>>, %arg10: memref<1x32xf32, #tpu.memory_space<vmem>>, %arg11: memref<1x32xf32, #tpu.memory_space<vmem>>, %arg12: memref<2x32x32xf32, #tpu.memory_space<vmem>>, %arg13: memref<2x4x32x64xf32, #tpu.memory_space<vmem>>) attributes {dimension_semantics = [#tpu.dimension_semantics<parallel>, #tpu.dimension_semantics<parallel>], iteration_bounds = array<i64: 2, 2>, scalar_prefetch = 0 : i64, scratch_operands = 0 : i64, tpu.core_type = #tpu.core_type<tc>, window_params = [{transform_indices = @transform_0, window_bounds = array<i64: 2, 32, 32>}, {transform_indices = @transform_1, window_bounds = array<i64: 2, 64, 32>}, {transform_indices = @transform_2, window_bounds = array<i64: 2, 64, 32>}, {transform_indices = @transform_3, window_bounds = array<i64: 2, 32, 64>}, {pipeline_mode = #tpu.pipeline_mode<synchronous>, transform_indices = @transform_4, window_bounds = array<i64: 32, 32>}, {pipeline_mode = #tpu.pipeline_mode<synchronous>, transform_indices = @transform_5, window_bounds = array<i64: 32, 32>}, {pipeline_mode = #tpu.pipeline_mode<synchronous>, transform_indices = @transform_6, window_bounds = array<i64: 32, 32>}, {pipeline_mode = #tpu.pipeline_mode<synchronous>, transform_indices = @transform_7, window_bounds = array<i64: 32, 32>}, {pipeline_mode = #tpu.pipeline_mode<synchronous>, transform_indices = @transform_8, window_bounds = array<i64: 1, 32>}, {pipeline_mode = #tpu.pipeline_mode<synchronous>, transform_indices = @transform_9, window_bounds = array<i64: 1, 32>}, {transform_indices = @transform_10, window_bounds = array<i64: 2, 32, 32>}, {transform_indices = @transform_11, window_bounds = array<i64: 2, 4, 32, 64>}]} {
    %c0 = arith.constant 0 : index
    %c0_0 = arith.constant 0 : index
    %c0_1 = arith.constant 0 : index
    %0 = vector.load %arg2[%c0, %c0_0, %c0_1] : memref<2x32x32xf32, #tpu.memory_space<vmem>>, vector<2x32x32xf32>
    %1 = vector.shape_cast %0 : vector<2x32x32xf32> to vector<64x32xf32>
    %c0_2 = arith.constant 0 : index
    %c0_3 = arith.constant 0 : index
    %2 = vector.load %arg6[%c0_2, %c0_3] : memref<32x32xf32, #tpu.memory_space<vmem>>, vector<32x32xf32>
    %cst = arith.constant dense<0.000000e+00> : vector<64x32xf32>
    %3 = tpu.matmul %1, %2, %cst {dimension_numbers = #tpu.dot_dimension_numbers<[1], [0], [0], [1], [0, 0, 1, 1], [], []>} : vector<64x32xf32>, vector<32x32xf32>, vector<64x32xf32> -> vector<64x32xf32>
    %c0_4 = arith.constant 0 : index
    %c0_5 = arith.constant 0 : index
    %c0_6 = arith.constant 0 : index
    %4 = vector.load %arg3[%c0_4, %c0_5, %c0_6] : memref<2x64x32xf32, #tpu.memory_space<vmem>>, vector<2x64x32xf32>
    %5 = vector.shape_cast %4 : vector<2x64x32xf32> to vector<128x32xf32>
    %c0_7 = arith.constant 0 : index
    %c0_8 = arith.constant 0 : index
    %6 = vector.load %arg7[%c0_7, %c0_8] : memref<32x32xf32, #tpu.memory_space<vmem>>, vector<32x32xf32>
    %cst_9 = arith.constant dense<0.000000e+00> : vector<128x32xf32>
    %7 = tpu.matmul %5, %6, %cst_9 {dimension_numbers = #tpu.dot_dimension_numbers<[1], [0], [0], [1], [0, 0, 1, 1], [], []>} : vector<128x32xf32>, vector<32x32xf32>, vector<128x32xf32> -> vector<128x32xf32>
    %c0_10 = arith.constant 0 : index
    %c0_11 = arith.constant 0 : index
    %c0_12 = arith.constant 0 : index
    %8 = vector.load %arg4[%c0_10, %c0_11, %c0_12] : memref<2x64x32xf32, #tpu.memory_space<vmem>>, vector<2x64x32xf32>
    %9 = vector.shape_cast %8 : vector<2x64x32xf32> to vector<128x32xf32>
    %c0_13 = arith.constant 0 : index
    %c0_14 = arith.constant 0 : index
    %10 = vector.load %arg8[%c0_13, %c0_14] : memref<32x32xf32, #tpu.memory_space<vmem>>, vector<32x32xf32>
    %cst_15 = arith.constant dense<0.000000e+00> : vector<128x32xf32>
    %11 = tpu.matmul %9, %10, %cst_15 {dimension_numbers = #tpu.dot_dimension_numbers<[1], [0], [0], [1], [0, 0, 1, 1], [], []>} : vector<128x32xf32>, vector<32x32xf32>, vector<128x32xf32> -> vector<128x32xf32>
    %12 = vector.extract_strided_slice %3 {offsets = [0, 0], sizes = [64, 8], strides = [1, 1]} : vector<64x32xf32> to vector<64x8xf32>
    %13 = vector.shape_cast %12 : vector<64x8xf32> to vector<2x1x32x8xf32>
    %14 = vector.extract_strided_slice %3 {offsets = [0, 8], sizes = [64, 8], strides = [1, 1]} : vector<64x32xf32> to vector<64x8xf32>
    %15 = vector.shape_cast %14 : vector<64x8xf32> to vector<2x1x32x8xf32>
    %16 = vector.extract_strided_slice %3 {offsets = [0, 16], sizes = [64, 8], strides = [1, 1]} : vector<64x32xf32> to vector<64x8xf32>
    %17 = vector.shape_cast %16 : vector<64x8xf32> to vector<2x1x32x8xf32>
    %18 = vector.extract_strided_slice %3 {offsets = [0, 24], sizes = [64, 8], strides = [1, 1]} : vector<64x32xf32> to vector<64x8xf32>
    %19 = vector.shape_cast %18 : vector<64x8xf32> to vector<2x1x32x8xf32>
    %20 = tpu.concatenate %13, %15, %17, %19 in 1 : vector<2x1x32x8xf32>, vector<2x1x32x8xf32>, vector<2x1x32x8xf32>, vector<2x1x32x8xf32> -> vector<2x4x32x8xf32>
    %21 = vector.shape_cast %20 : vector<2x4x32x8xf32> to vector<8x32x8xf32>
    %22 = vector.extract_strided_slice %7 {offsets = [0, 0], sizes = [128, 8], strides = [1, 1]} : vector<128x32xf32> to vector<128x8xf32>
    %23 = vector.shape_cast %22 : vector<128x8xf32> to vector<2x1x64x8xf32>
    %24 = vector.extract_strided_slice %7 {offsets = [0, 8], sizes = [128, 8], strides = [1, 1]} : vector<128x32xf32> to vector<128x8xf32>
    %25 = vector.shape_cast %24 : vector<128x8xf32> to vector<2x1x64x8xf32>
    %26 = vector.extract_strided_slice %7 {offsets = [0, 16], sizes = [128, 8], strides = [1, 1]} : vector<128x32xf32> to vector<128x8xf32>
    %27 = vector.shape_cast %26 : vector<128x8xf32> to vector<2x1x64x8xf32>
    %28 = vector.extract_strided_slice %7 {offsets = [0, 24], sizes = [128, 8], strides = [1, 1]} : vector<128x32xf32> to vector<128x8xf32>
    %29 = vector.shape_cast %28 : vector<128x8xf32> to vector<2x1x64x8xf32>
    %30 = tpu.concatenate %23, %25, %27, %29 in 1 : vector<2x1x64x8xf32>, vector<2x1x64x8xf32>, vector<2x1x64x8xf32>, vector<2x1x64x8xf32> -> vector<2x4x64x8xf32>
    %31 = vector.shape_cast %30 : vector<2x4x64x8xf32> to vector<8x64x8xf32>
    %32 = vector.extract_strided_slice %11 {offsets = [0, 0], sizes = [128, 8], strides = [1, 1]} : vector<128x32xf32> to vector<128x8xf32>
    %33 = vector.shape_cast %32 : vector<128x8xf32> to vector<2x1x64x8xf32>
    %34 = vector.extract_strided_slice %11 {offsets = [0, 8], sizes = [128, 8], strides = [1, 1]} : vector<128x32xf32> to vector<128x8xf32>
    %35 = vector.shape_cast %34 : vector<128x8xf32> to vector<2x1x64x8xf32>
    %36 = vector.extract_strided_slice %11 {offsets = [0, 16], sizes = [128, 8], strides = [1, 1]} : vector<128x32xf32> to vector<128x8xf32>
    %37 = vector.shape_cast %36 : vector<128x8xf32> to vector<2x1x64x8xf32>
    %38 = vector.extract_strided_slice %11 {offsets = [0, 24], sizes = [128, 8], strides = [1, 1]} : vector<128x32xf32> to vector<128x8xf32>
    %39 = vector.shape_cast %38 : vector<128x8xf32> to vector<2x1x64x8xf32>
    %40 = tpu.concatenate %33, %35, %37, %39 in 1 : vector<2x1x64x8xf32>, vector<2x1x64x8xf32>, vector<2x1x64x8xf32>, vector<2x1x64x8xf32> -> vector<2x4x64x8xf32>
    %41 = vector.shape_cast %40 : vector<2x4x64x8xf32> to vector<8x64x8xf32>
    "tpu.trace_start"() <{level = 10 : i32, message = "bqd,bkd->bqk"}> : () -> ()
    %cst_16 = arith.constant dense<0.000000e+00> : vector<8x32x64xf32>
    %42 = tpu.matmul %21, %31, %cst_16 {dimension_numbers = #tpu.dot_dimension_numbers<[2], [2], [1], [1], [0, 0, 0, 1, 1, 1], [0], [0]>} : vector<8x32x8xf32>, vector<8x64x8xf32>, vector<8x32x64xf32> -> vector<8x32x64xf32>
    "tpu.trace_stop"() : () -> ()
    %43 = vector.shape_cast %42 : vector<8x32x64xf32> to vector<2x4x32x64xf32>
    %c0_17 = arith.constant 0 : index
    %c0_18 = arith.constant 0 : index
    %c0_19 = arith.constant 0 : index
    %44 = vector.load %arg5[%c0_17, %c0_18, %c0_19] : memref<2x32x64xi8, #tpu.memory_space<vmem>>, vector<2x32x64xi8>
    %c0_i8 = arith.constant 0 : i8
    %45 = vector.broadcast %c0_i8 : i8 to vector<2x32x64xi8>
    %46 = arith.cmpi ne, %44, %45 : vector<2x32x64xi8>
    %47 = vector.shape_cast %46 : vector<2x32x64xi1> to vector<2x1x32x64xi1>
    %cst_20 = arith.constant -1.000000e+09 : f32
    %48 = vector.shape_cast %47 : vector<2x1x32x64xi1> to vector<2x1x32x64xi1>
    %49 = vector.broadcast %48 : vector<2x1x32x64xi1> to vector<2x4x32x64xi1>
    %50 = vector.broadcast %cst_20 : f32 to vector<2x4x32x64xf32>
    %51 = arith.select %49, %50, %43 : vector<2x4x32x64xi1>, vector<2x4x32x64xf32>
    %cst_21 = arith.constant dense<0xFF800000> : vector<2x4x32xf32>
    %52 = vector.multi_reduction <maximumf>, %51, %cst_21 [3] : vector<2x4x32x64xf32> to vector<2x4x32xf32>
    %53 = vector.shape_cast %52 : vector<2x4x32xf32> to vector<2x4x32x1xf32>
    %54 = vector.broadcast %53 : vector<2x4x32x1xf32> to vector<2x4x32x64xf32>
    %55 = arith.subf %51, %54 : vector<2x4x32x64xf32>
    %56 = math.exp %55 : vector<2x4x32x64xf32>
    %cst_22 = arith.constant dense<0.000000e+00> : vector<2x4x32xf32>
    %57 = vector.multi_reduction <add>, %56, %cst_22 [3] : vector<2x4x32x64xf32> to vector<2x4x32xf32>
    %58 = vector.shape_cast %57 : vector<2x4x32xf32> to vector<2x4x32x1xf32>
    %59 = tpu.reciprocal %58 {approx = true} : vector<2x4x32x1xf32> -> vector<2x4x32x1xf32>
    %60 = arith.mulf %58, %59 : vector<2x4x32x1xf32>
    %cst_23 = arith.constant 2.000000e+00 : f32
    %61 = vector.broadcast %cst_23 : f32 to vector<2x4x32x1xf32>
    %62 = arith.subf %61, %60 : vector<2x4x32x1xf32>
    %63 = arith.mulf %59, %62 : vector<2x4x32x1xf32>
    %64 = vector.broadcast %63 : vector<2x4x32x1xf32> to vector<2x4x32x64xf32>
    %65 = arith.mulf %56, %64 : vector<2x4x32x64xf32>
    %c0_24 = arith.constant 0 : index
    %c0_25 = arith.constant 0 : index
    %c0_26 = arith.constant 0 : index
    %c0_27 = arith.constant 0 : index
    %66 = vector.load %arg13[%c0_24, %c0_25, %c0_26, %c0_27] : memref<2x4x32x64xf32, #tpu.memory_space<vmem>>, vector<2x4x32x64xf32>
    tpu.vector_store %arg13[%c0_24, %c0_25, %c0_26, %c0_27], %65 {strides = array<i32>} : memref<2x4x32x64xf32, #tpu.memory_space<vmem>>, vector<2x4x32x64xf32>,
    %67 = vector.shape_cast %65 : vector<2x4x32x64xf32> to vector<8x32x64xf32>
    "tpu.trace_start"() <{level = 10 : i32, message = "bqk,bkd->bqd"}> : () -> ()
    %cst_28 = arith.constant dense<0.000000e+00> : vector<8x32x8xf32>
    %68 = tpu.matmul %67, %41, %cst_28 {dimension_numbers = #tpu.dot_dimension_numbers<[2], [1], [1], [2], [0, 0, 0, 1, 1, 2], [0], [0]>} : vector<8x32x64xf32>, vector<8x64x8xf32>, vector<8x32x8xf32> -> vector<8x32x8xf32>
    "tpu.trace_stop"() : () -> ()
    %69 = vector.shape_cast %68 : vector<8x32x8xf32> to vector<2x4x32x8xf32>
    %c0_29 = arith.constant 0 : index
    %c0_30 = arith.constant 0 : index
    %70 = vector.load %arg9[%c0_29, %c0_30] : memref<32x32xf32, #tpu.memory_space<vmem>>, vector<32x32xf32>
    %71 = vector.extract_strided_slice %69 {offsets = [0, 0, 0, 0], sizes = [2, 1, 32, 8], strides = [1, 1, 1, 1]} : vector<2x4x32x8xf32> to vector<2x1x32x8xf32>
    %72 = vector.shape_cast %71 : vector<2x1x32x8xf32> to vector<2x32x8xf32>
    %73 = vector.shape_cast %72 : vector<2x32x8xf32> to vector<64x8xf32>
    %74 = vector.extract_strided_slice %70 {offsets = [0, 0], sizes = [8, 32], strides = [1, 1]} : vector<32x32xf32> to vector<8x32xf32>
    %cst_31 = arith.constant dense<0.000000e+00> : vector<64x32xf32>
    %75 = tpu.matmul %73, %74, %cst_31 {dimension_numbers = #tpu.dot_dimension_numbers<[1], [0], [0], [1], [0, 0, 1, 1], [], []>} : vector<64x8xf32>, vector<8x32xf32>, vector<64x32xf32> -> vector<64x32xf32>
    %76 = vector.extract_strided_slice %69 {offsets = [0, 1, 0, 0], sizes = [2, 1, 32, 8], strides = [1, 1, 1, 1]} : vector<2x4x32x8xf32> to vector<2x1x32x8xf32>
    %77 = vector.shape_cast %76 : vector<2x1x32x8xf32> to vector<2x32x8xf32>
    %78 = vector.shape_cast %77 : vector<2x32x8xf32> to vector<64x8xf32>
    %79 = vector.extract_strided_slice %70 {offsets = [8, 0], sizes = [8, 32], strides = [1, 1]} : vector<32x32xf32> to vector<8x32xf32>
    %cst_32 = arith.constant dense<0.000000e+00> : vector<64x32xf32>
    %80 = tpu.matmul %78, %79, %cst_32 {dimension_numbers = #tpu.dot_dimension_numbers<[1], [0], [0], [1], [0, 0, 1, 1], [], []>} : vector<64x8xf32>, vector<8x32xf32>, vector<64x32xf32> -> vector<64x32xf32>
    %81 = arith.addf %75, %80 : vector<64x32xf32>
    %82 = vector.extract_strided_slice %69 {offsets = [0, 2, 0, 0], sizes = [2, 1, 32, 8], strides = [1, 1, 1, 1]} : vector<2x4x32x8xf32> to vector<2x1x32x8xf32>
    %83 = vector.shape_cast %82 : vector<2x1x32x8xf32> to vector<2x32x8xf32>
    %84 = vector.shape_cast %83 : vector<2x32x8xf32> to vector<64x8xf32>
    %85 = vector.extract_strided_slice %70 {offsets = [16, 0], sizes = [8, 32], strides = [1, 1]} : vector<32x32xf32> to vector<8x32xf32>
    %cst_33 = arith.constant dense<0.000000e+00> : vector<64x32xf32>
    %86 = tpu.matmul %84, %85, %cst_33 {dimension_numbers = #tpu.dot_dimension_numbers<[1], [0], [0], [1], [0, 0, 1, 1], [], []>} : vector<64x8xf32>, vector<8x32xf32>, vector<64x32xf32> -> vector<64x32xf32>
    %87 = arith.addf %81, %86 : vector<64x32xf32>
    %88 = vector.extract_strided_slice %69 {offsets = [0, 3, 0, 0], sizes = [2, 1, 32, 8], strides = [1, 1, 1, 1]} : vector<2x4x32x8xf32> to vector<2x1x32x8xf32>
    %89 = vector.shape_cast %88 : vector<2x1x32x8xf32> to vector<2x32x8xf32>
    %90 = vector.shape_cast %89 : vector<2x32x8xf32> to vector<64x8xf32>
    %91 = vector.extract_strided_slice %70 {offsets = [24, 0], sizes = [8, 32], strides = [1, 1]} : vector<32x32xf32> to vector<8x32xf32>
    %cst_34 = arith.constant dense<0.000000e+00> : vector<64x32xf32>
    %92 = tpu.matmul %90, %91, %cst_34 {dimension_numbers = #tpu.dot_dimension_numbers<[1], [0], [0], [1], [0, 0, 1, 1], [], []>} : vector<64x8xf32>, vector<8x32xf32>, vector<64x32xf32> -> vector<64x32xf32>
    %93 = arith.addf %87, %92 : vector<64x32xf32>
    %94 = vector.shape_cast %93 : vector<64x32xf32> to vector<2x32x32xf32>
    %95 = arith.addf %94, %0 : vector<2x32x32xf32>
    %cst_35 = arith.constant dense<0.000000e+00> : vector<2x32xf32>
    %96 = vector.multi_reduction <add>, %95, %cst_35 [2] : vector<2x32x32xf32> to vector<2x32xf32>
    %97 = vector.shape_cast %96 : vector<2x32xf32> to vector<2x32x1xf32>
    %cst_36 = arith.constant 3.200000e+01 : f32
    %98 = vector.broadcast %cst_36 : f32 to vector<2x32x1xf32>
    %99 = arith.divf %97, %98 : vector<2x32x1xf32>
    %100 = vector.broadcast %99 : vector<2x32x1xf32> to vector<2x32x32xf32>
    %101 = arith.subf %95, %100 : vector<2x32x32xf32>
    %102 = arith.mulf %101, %101 : vector<2x32x32xf32>
    %cst_37 = arith.constant dense<0.000000e+00> : vector<2x32xf32>
    %103 = vector.multi_reduction <add>, %102, %cst_37 [2] : vector<2x32x32xf32> to vector<2x32xf32>
    %104 = vector.shape_cast %103 : vector<2x32xf32> to vector<2x32x1xf32>
    %cst_38 = arith.constant 3.200000e+01 : f32
    %105 = vector.broadcast %cst_38 : f32 to vector<2x32x1xf32>
    %106 = arith.divf %104, %105 : vector<2x32x1xf32>
    %107 = vector.broadcast %99 : vector<2x32x1xf32> to vector<2x32x32xf32>
    %108 = arith.subf %95, %107 : vector<2x32x32xf32>
    %cst_39 = arith.constant 9.99999974E-6 : f32
    %109 = vector.broadcast %cst_39 : f32 to vector<2x32x1xf32>
    %110 = arith.addf %106, %109 : vector<2x32x1xf32>
    %111 = math.rsqrt %110 : vector<2x32x1xf32>
    %112 = vector.broadcast %111 : vector<2x32x1xf32> to vector<2x32x32xf32>
    %113 = arith.mulf %108, %112 : vector<2x32x32xf32>
    %c0_40 = arith.constant 0 : index
    %c0_41 = arith.constant 0 : index
    %114 = vector.load %arg10[%c0_40, %c0_41] : memref<1x32xf32, #tpu.memory_space<vmem>>, vector<1x32xf32>
    %115 = vector.shape_cast %114 : vector<1x32xf32> to vector<32xf32>
    %116 = vector.shape_cast %115 : vector<32xf32> to vector<1x1x32xf32>
    %117 = vector.broadcast %116 : vector<1x1x32xf32> to vector<2x32x32xf32>
    %118 = arith.mulf %113, %117 : vector<2x32x32xf32>
    %c0_42 = arith.constant 0 : index
    %c0_43 = arith.constant 0 : index
    %119 = vector.load %arg11[%c0_42, %c0_43] : memref<1x32xf32, #tpu.memory_space<vmem>>, vector<1x32xf32>
    %120 = vector.shape_cast %119 : vector<1x32xf32> to vector<32xf32>
    %121 = vector.shape_cast %120 : vector<32xf32> to vector<1x1x32xf32>
    %122 = vector.broadcast %121 : vector<1x1x32xf32> to vector<2x32x32xf32>
    %123 = arith.addf %118, %122 : vector<2x32x32xf32>
    %c0_44 = arith.constant 0 : index
    %c0_45 = arith.constant 0 : index
    %c0_46 = arith.constant 0 : index
    %124 = vector.load %arg12[%c0_44, %c0_45, %c0_46] : memref<2x32x32xf32, #tpu.memory_space<vmem>>, vector<2x32x32xf32>
    tpu.vector_store %arg12[%c0_44, %c0_45, %c0_46], %123 {strides = array<i32>} : memref<2x32x32xf32, #tpu.memory_space<vmem>>, vector<2x32x32xf32>,
    return
  }
  func.func @transform_0(%arg0: i32, %arg1: i32) -> (i32, i32, i32) {
    %c0_i32 = arith.constant 0 : i32
    %c0_i32_0 = arith.constant 0 : i32
    return %arg0, %arg1, %c0_i32 : i32, i32, i32
  }
  func.func @transform_1(%arg0: i32, %arg1: i32) -> (i32, i32, i32) {
    %c0_i32 = arith.constant 0 : i32
    %c0_i32_0 = arith.constant 0 : i32
    %c0_i32_1 = arith.constant 0 : i32
    return %arg0, %c0_i32, %c0_i32_0 : i32, i32, i32
  }
  func.func @transform_2(%arg0: i32, %arg1: i32) -> (i32, i32, i32) {
    %c0_i32 = arith.constant 0 : i32
    %c0_i32_0 = arith.constant 0 : i32
    %c0_i32_1 = arith.constant 0 : i32
    return %arg0, %c0_i32, %c0_i32_0 : i32, i32, i32
  }
  func.func @transform_3(%arg0: i32, %arg1: i32) -> (i32, i32, i32) {
    %c0_i32 = arith.constant 0 : i32
    %c0_i32_0 = arith.constant 0 : i32
    return %arg0, %arg1, %c0_i32 : i32, i32, i32
  }
  func.func @transform_4(%arg0: i32, %arg1: i32) -> (i32, i32) {
    %c0_i32 = arith.constant 0 : i32
    %c0_i32_0 = arith.constant 0 : i32
    %c0_i32_1 = arith.constant 0 : i32
    return %c0_i32, %c0_i32_0 : i32, i32
  }
  func.func @transform_5(%arg0: i32, %arg1: i32) -> (i32, i32) {
    %c0_i32 = arith.constant 0 : i32
    %c0_i32_0 = arith.constant 0 : i32
    %c0_i32_1 = arith.constant 0 : i32
    return %c0_i32, %c0_i32_0 : i32, i32
  }
  func.func @transform_6(%arg0: i32, %arg1: i32) -> (i32, i32) {
    %c0_i32 = arith.constant 0 : i32
    %c0_i32_0 = arith.constant 0 : i32
    %c0_i32_1 = arith.constant 0 : i32
    return %c0_i32, %c0_i32_0 : i32, i32
  }
  func.func @transform_7(%arg0: i32, %arg1: i32) -> (i32, i32) {
    %c0_i32 = arith.constant 0 : i32
    %c0_i32_0 = arith.constant 0 : i32
    %c0_i32_1 = arith.constant 0 : i32
    return %c0_i32, %c0_i32_0 : i32, i32
  }
  func.func @transform_8(%arg0: i32, %arg1: i32) -> (i32, i32) {
    %c0_i32 = arith.constant 0 : i32
    %c0_i32_0 = arith.constant 0 : i32
    %c0_i32_1 = arith.constant 0 : i32
    return %c0_i32, %c0_i32_0 : i32, i32
  }
  func.func @transform_9(%arg0: i32, %arg1: i32) -> (i32, i32) {
    %c0_i32 = arith.constant 0 : i32
    %c0_i32_0 = arith.constant 0 : i32
    %c0_i32_1 = arith.constant 0 : i32
    return %c0_i32, %c0_i32_0 : i32, i32
  }
  func.func @transform_10(%arg0: i32, %arg1: i32) -> (i32, i32, i32) {
    %c0_i32 = arith.constant 0 : i32
    %c0_i32_0 = arith.constant 0 : i32
    return %arg0, %arg1, %c0_i32 : i32, i32, i32
  }
  func.func @transform_11(%arg0: i32, %arg1: i32) -> (i32, i32, i32, i32) {
    %c0_i32 = arith.constant 0 : i32
    %c0_i32_0 = arith.constant 0 : i32
    %c0_i32_1 = arith.constant 0 : i32
    return %arg0, %c0_i32, %arg1, %c0_i32_0 : i32, i32, i32, i32
  }
}

</mosaic_0001>

<llo_original>
// kernel: multi_head_attention.1
$region0: #{multi_head_attention.1}
  #allocation0 [shape = 'u32[]', space=smem, size = 0x4, offset = 0x4, fixed_abs, tag = 'smem constant byte address 0x4 - core index']
  #allocation1 [shape = 'u32[144,128]{1,0:T(1,128)}', space=vmem, size = 0x12000, scoped, tag = 'internal scratch']
  #allocation7 [shape = 's32[]', space=sflag, size = 0x4, offset = 0, fixed_abs, tag = 'sflag constant byte address 0x0 - dummy sync flag']
  %s0 = inlined_call_operand.vmem [shape: f32[4,64,32], index: 0, kind: input, shape index: {}]
  %s1 = inlined_call_operand.vmem [shape: f32[4,64,32], index: 1, kind: input, shape index: {}]
  %s2 = inlined_call_operand.vmem [shape: f32[4,64,32], index: 2, kind: input, shape index: {}]
  %s3 = inlined_call_operand.vmem [shape: s8[4,64,64], index: 3, kind: input, shape index: {}]
  %s4 = inlined_call_operand.vmem [shape: f32[32,32], index: 4, kind: input, shape index: {}]
  %s5 = inlined_call_operand.vmem [shape: f32[32,32], index: 5, kind: input, shape index: {}]
  %s6 = inlined_call_operand.vmem [shape: f32[32,32], index: 6, kind: input, shape index: {}]
  %s7 = inlined_call_operand.vmem [shape: f32[32,32], index: 7, kind: input, shape index: {}]
  %s8 = inlined_call_operand.vmem [shape: f32[1,32], index: 8, kind: input, shape index: {}]
  %s9 = inlined_call_operand.vmem [shape: f32[1,32], index: 9, kind: input, shape index: {}]
  %s10 = inlined_call_operand.vmem [shape: f32[4,64,32], index: 10, kind: output, shape index: {0}]
  %s11 = inlined_call_operand.hbm [shape: f32[4,4,64,64], index: 11, kind: output, shape index: {1}]
  %12 = xla_tuple %s10, %s11
  %s13 = sld [smem:[#allocation0]]
  $region191: #{multi_head_attention.1} parent=0
    _
  %s15 = ssub.s32 1, %s13
  %s16 = scalar_select 0, %s15, %s13
  $region1: #{multi_head_attention.1} parent=0
    #allocation2 [shape = 'u8[65536]{0}', space=vmem, size = 0x10000, scoped, tag = 'input window, operand 0']
    #allocation3 [shape = 'u8[16384]{0}', space=vmem, size = 0x4000, scoped, tag = 'input window, operand 3']
    #allocation4 [shape = 'u8[65536]{0}', space=vmem, size = 0x10000, scoped, tag = 'output window, operand 0']
    #allocation5 [shape = 'u8[262144]{0}', space=vmem, size = 0x40000, scoped, tag = 'output window, operand 1']
    #allocation6 [shape = 's32[2]{0}', space=sflag, size = 0x8, scoped, tag = 'scoped memory for multi_head_attention.1']
    %17 = vsyncpa [#allocation6], 0
    %s18 = scalar_lea.sflag [#allocation6], 1
    %19 = vsyncpa %s18, 0
    loop: start=0, step=1, limit=6
    $region2: #{multi_head_attention.1} parent=1 // loop_pre_header
      _
    $region3: #{multi_head_attention.1} parent=1 // loop_header
      %s21 = sphi 0, %s25
      %p22 = scmp.ge.s32.totalorder %s21, 6
      %s28 = sphi 0, %s40
      %s29 = sphi 0, %s36
      %s30 = sphi 0, %s28
      %s31 = sphi 0, %s29
      %s32 = sphi 0, %s30
      %s33 = sphi 0, %s31
      %s45 = sphi 0, %s47
      %s48 = sphi 0, %s45
      %s49 = sphi 0, %s48
      %s65 = sphi 0, %s49
      %s71 = sphi 0, %s73
      %s74 = sphi 0, %s71
      %s75 = sphi 0, %s74
      %s91 = sphi 0, %s75
      %s97 = sphi 0, %s99
      %s100 = sphi 0, %s97
      %s101 = sphi 0, %s100
      %s117 = sphi 0, %s101
      %s125 = sphi 0, %s127
      %s128 = sphi 0, %s125
      %s129 = sphi 0, %s128
      %s145 = sphi 0, %s129
      %s149 = sphi 0, %s149
      %s151 = sphi 0, %s149
      %s152 = sphi 0, %s151
      %s166 = sphi 0, %s152
      %s170 = sphi 0, %s170
      %s172 = sphi 0, %s170
      %s173 = sphi 0, %s172
      %s187 = sphi 0, %s173
      %s191 = sphi 0, %s191
      %s193 = sphi 0, %s191
      %s194 = sphi 0, %s193
      %s208 = sphi 0, %s194
      %s212 = sphi 0, %s212
      %s214 = sphi 0, %s212
      %s215 = sphi 0, %s214
      %s229 = sphi 0, %s215
      %s233 = sphi 0, %s233
      %s235 = sphi 0, %s233
      %s236 = sphi 0, %s235
      %s250 = sphi 0, %s236
      %s254 = sphi 0, %s254
      %s256 = sphi 0, %s254
      %s257 = sphi 0, %s256
      %s271 = sphi 0, %s257
      %s279 = sphi 0, %s281
      %s282 = sphi 0, %s279
      %s283 = sphi 0, %s282
      %s299 = sphi 0, %s283
      %s307 = sphi 0, %s309
      %s310 = sphi 0, %s307
      %s311 = sphi 0, %s310
      %s327 = sphi 0, %s311
    $region4: #{multi_head_attention.1} parent=1 // loop_header_branch
      %24 = sbr.rel (%p22) target = $region8
    $region5: #{multi_head_attention.1} parent=1 // loop_body
      %s26 = ssub.s32 %s21, 1
      %s27 = ssub.s32 %s21, 2
      %s34 = sadd.s32 1, %s29
      %p35 = scmp.ge.s32.totalorder %s34, 2
      %s36 = scalar_select %p35, 0, %s34
      %s37 = sadd.s32 1, %s28
      %s38 = scalar_select %p35, %s37, %s28
      %p39 = scmp.ge.s32.totalorder %s38, 2
      %s40 = scalar_select %p39, 0, %s38
      %s41 = ssub.s32 %s28, %s40
      %s42 = ssub.s32 %s29, %s36
      %s43 = sor.u32 %s41, %s42
      %p44 = scmp.eq.s32.totalorder %s43, 0
      %s46 = sadd.s32 %s45, 1
      %s47 = scalar_select %p44, %s45, %s46
      %p50 = pneg %p44
      %p51 = scmp.eq.s32.totalorder %s21, 3
      %p52 = por %p50, %p51
      %p53 = scmp.ne.s32.totalorder %s45, %s48
      %p54 = scmp.eq.s32.totalorder %s21, 0
      %p55 = por %p53, %p54
      %p56 = scmp.ne.s32.totalorder %s45, %s48
      %p57 = scmp.eq.s32.totalorder %s26, 3
      %p58 = por %p56, %p57
      %p59 = scmp.ne.s32.totalorder %s48, %s49
      %p60 = scmp.eq.s32.totalorder %s26, 0
      %p61 = por %p59, %p60
      %p62 = scmp.ne.s32.totalorder %s48, %s49
      %p63 = scmp.eq.s32.totalorder %s27, 3
      %p64 = por %p62, %p63
      %p66 = scmp.ne.s32.totalorder %s49, %s65
      %p67 = scmp.eq.s32.totalorder %s27, 0
      %p68 = por %p66, %p67
      %s69 = ssub.s32 %s28, %s40
      %p70 = scmp.eq.s32.totalorder %s69, 0
      %s72 = sadd.s32 %s71, 1
      %s73 = scalar_select %p70, %s71, %s72
      %p76 = pneg %p70
      %p77 = scmp.eq.s32.totalorder %s21, 3
      %p78 = por %p76, %p77
      %p79 = scmp.ne.s32.totalorder %s71, %s74
      %p80 = scmp.eq.s32.totalorder %s21, 0
      %p81 = por %p79, %p80
      %p82 = scmp.ne.s32.totalorder %s71, %s74
      %p83 = scmp.eq.s32.totalorder %s26, 3
      %p84 = por %p82, %p83
      %p85 = scmp.ne.s32.totalorder %s74, %s75
      %p86 = scmp.eq.s32.totalorder %s26, 0
      %p87 = por %p85, %p86
      %p88 = scmp.ne.s32.totalorder %s74, %s75
      %p89 = scmp.eq.s32.totalorder %s27, 3
      %p90 = por %p88, %p89
      %p92 = scmp.ne.s32.totalorder %s75, %s91
      %p93 = scmp.eq.s32.totalorder %s27, 0
      %p94 = por %p92, %p93
      %s95 = ssub.s32 %s28, %s40
      %p96 = scmp.eq.s32.totalorder %s95, 0
      %s98 = sadd.s32 %s97, 1
      %s99 = scalar_select %p96, %s97, %s98
      %p102 = pneg %p96
      %p103 = scmp.eq.s32.totalorder %s21, 3
      %p104 = por %p102, %p103
      %p105 = scmp.ne.s32.totalorder %s97, %s100
      %p106 = scmp.eq.s32.totalorder %s21, 0
      %p107 = por %p105, %p106
      %p108 = scmp.ne.s32.totalorder %s97, %s100
      %p109 = scmp.eq.s32.totalorder %s26, 3
      %p110 = por %p108, %p109
      %p111 = scmp.ne.s32.totalorder %s100, %s101
      %p112 = scmp.eq.s32.totalorder %s26, 0
      %p113 = por %p111, %p112
      %p114 = scmp.ne.s32.totalorder %s100, %s101
      %p115 = scmp.eq.s32.totalorder %s27, 3
      %p116 = por %p114, %p115
      %p118 = scmp.ne.s32.totalorder %s101, %s117
      %p119 = scmp.eq.s32.totalorder %s27, 0
      %p120 = por %p118, %p119
      %s121 = ssub.s32 %s28, %s40
      %s122 = ssub.s32 %s29, %s36
      %s123 = sor.u32 %s121, %s122
      %p124 = scmp.eq.s32.totalorder %s123, 0
      %s126 = sadd.s32 %s125, 1
      %s127 = scalar_select %p124, %s125, %s126
      %p130 = pneg %p124
      %p131 = scmp.eq.s32.totalorder %s21, 3
      %p132 = por %p130, %p131
      %p133 = scmp.ne.s32.totalorder %s125, %s128
      %p134 = scmp.eq.s32.totalorder %s21, 0
      %p135 = por %p133, %p134
      %p136 = scmp.ne.s32.totalorder %s125, %s128
      %p137 = scmp.eq.s32.totalorder %s26, 3
      %p138 = por %p136, %p137
      %p139 = scmp.ne.s32.totalorder %s128, %s129
      %p140 = scmp.eq.s32.totalorder %s26, 0
      %p141 = por %p139, %p140
      %p142 = scmp.ne.s32.totalorder %s128, %s129
      %p143 = scmp.eq.s32.totalorder %s27, 3
      %p144 = por %p142, %p143
      %p146 = scmp.ne.s32.totalorder %s129, %s145
      %p147 = scmp.eq.s32.totalorder %s27, 0
      %p148 = por %p146, %p147
      %s150 = sadd.s32 %s149, 1
      %p153 = scmp.eq.s32.totalorder %s21, 3
      %p154 = scmp.ne.s32.totalorder %s149, %s151
      %p155 = scmp.eq.s32.totalorder %s21, 0
      %p156 = por %p154, %p155
      %p157 = scmp.ne.s32.totalorder %s149, %s151
      %p158 = scmp.eq.s32.totalorder %s26, 3
      %p159 = por %p157, %p158
      %p160 = scmp.ne.s32.totalorder %s151, %s152
      %p161 = scmp.eq.s32.totalorder %s26, 0
      %p162 = por %p160, %p161
      %p163 = scmp.ne.s32.totalorder %s151, %s152
      %p164 = scmp.eq.s32.totalorder %s27, 3
      %p165 = por %p163, %p164
      %p167 = scmp.ne.s32.totalorder %s152, %s166
      %p168 = scmp.eq.s32.totalorder %s27, 0
      %p169 = por %p167, %p168
      %s171 = sadd.s32 %s170, 1
      %p174 = scmp.eq.s32.totalorder %s21, 3
      %p175 = scmp.ne.s32.totalorder %s170, %s172
      %p176 = scmp.eq.s32.totalorder %s21, 0
      %p177 = por %p175, %p176
      %p178 = scmp.ne.s32.totalorder %s170, %s172
      %p179 = scmp.eq.s32.totalorder %s26, 3
      %p180 = por %p178, %p179
      %p181 = scmp.ne.s32.totalorder %s172, %s173
      %p182 = scmp.eq.s32.totalorder %s26, 0
      %p183 = por %p181, %p182
      %p184 = scmp.ne.s32.totalorder %s172, %s173
      %p185 = scmp.eq.s32.totalorder %s27, 3
      %p186 = por %p184, %p185
      %p188 = scmp.ne.s32.totalorder %s173, %s187
      %p189 = scmp.eq.s32.totalorder %s27, 0
      %p190 = por %p188, %p189
      %s192 = sadd.s32 %s191, 1
      %p195 = scmp.eq.s32.totalorder %s21, 3
      %p196 = scmp.ne.s32.totalorder %s191, %s193
      %p197 = scmp.eq.s32.totalorder %s21, 0
      %p198 = por %p196, %p197
      %p199 = scmp.ne.s32.totalorder %s191, %s193
      %p200 = scmp.eq.s32.totalorder %s26, 3
      %p201 = por %p199, %p200
      %p202 = scmp.ne.s32.totalorder %s193, %s194
      %p203 = scmp.eq.s32.totalorder %s26, 0
      %p204 = por %p202, %p203
      %p205 = scmp.ne.s32.totalorder %s193, %s194
      %p206 = scmp.eq.s32.totalorder %s27, 3
      %p207 = por %p205, %p206
      %p209 = scmp.ne.s32.totalorder %s194, %s208
      %p210 = scmp.eq.s32.totalorder %s27, 0
      %p211 = por %p209, %p210
      %s213 = sadd.s32 %s212, 1
      %p216 = scmp.eq.s32.totalorder %s21, 3
      %p217 = scmp.ne.s32.totalorder %s212, %s214
      %p218 = scmp.eq.s32.totalorder %s21, 0
      %p219 = por %p217, %p218
      %p220 = scmp.ne.s32.totalorder %s212, %s214
      %p221 = scmp.eq.s32.totalorder %s26, 3
      %p222 = por %p220, %p221
      %p223 = scmp.ne.s32.totalorder %s214, %s215
      %p224 = scmp.eq.s32.totalorder %s26, 0
      %p225 = por %p223, %p224
      %p226 = scmp.ne.s32.totalorder %s214, %s215
      %p227 = scmp.eq.s32.totalorder %s27, 3
      %p228 = por %p226, %p227
      %p230 = scmp.ne.s32.totalorder %s215, %s229
      %p231 = scmp.eq.s32.totalorder %s27, 0
      %p232 = por %p230, %p231
      %s234 = sadd.s32 %s233, 1
      %p237 = scmp.eq.s32.totalorder %s21, 3
      %p238 = scmp.ne.s32.totalorder %s233, %s235
      %p239 = scmp.eq.s32.totalorder %s21, 0
      %p240 = por %p238, %p239
      %p241 = scmp.ne.s32.totalorder %s233, %s235
      %p242 = scmp.eq.s32.totalorder %s26, 3
      %p243 = por %p241, %p242
      %p244 = scmp.ne.s32.totalorder %s235, %s236
      %p245 = scmp.eq.s32.totalorder %s26, 0
      %p246 = por %p244, %p245
      %p247 = scmp.ne.s32.totalorder %s235, %s236
      %p248 = scmp.eq.s32.totalorder %s27, 3
      %p249 = por %p247, %p248
      %p251 = scmp.ne.s32.totalorder %s236, %s250
      %p252 = scmp.eq.s32.totalorder %s27, 0
      %p253 = por %p251, %p252
      %s255 = sadd.s32 %s254, 1
      %p258 = scmp.eq.s32.totalorder %s21, 3
      %p259 = scmp.ne.s32.totalorder %s254, %s256
      %p260 = scmp.eq.s32.totalorder %s21, 0
      %p261 = por %p259, %p260
      %p262 = scmp.ne.s32.totalorder %s254, %s256
      %p263 = scmp.eq.s32.totalorder %s26, 3
      %p264 = por %p262, %p263
      %p265 = scmp.ne.s32.totalorder %s256, %s257
      %p266 = scmp.eq.s32.totalorder %s26, 0
      %p267 = por %p265, %p266
      %p268 = scmp.ne.s32.totalorder %s256, %s257
      %p269 = scmp.eq.s32.totalorder %s27, 3
      %p270 = por %p268, %p269
      %p272 = scmp.ne.s32.totalorder %s257, %s271
      %p273 = scmp.eq.s32.totalorder %s27, 0
      %p274 = por %p272, %p273
      %s275 = ssub.s32 %s28, %s40
      %s276 = ssub.s32 %s29, %s36
      %s277 = sor.u32 %s275, %s276
      %p278 = scmp.eq.s32.totalorder %s277, 0
      %s280 = sadd.s32 %s279, 1
      %s281 = scalar_select %p278, %s279, %s280
      %p284 = pneg %p278
      %p285 = scmp.eq.s32.totalorder %s21, 3
      %p286 = por %p284, %p285
      %p287 = scmp.ne.s32.totalorder %s279, %s282
      %p288 = scmp.eq.s32.totalorder %s21, 0
      %p289 = por %p287, %p288
      %p290 = scmp.ne.s32.totalorder %s279, %s282
      %p291 = scmp.eq.s32.totalorder %s26, 3
      %p292 = por %p290, %p291
      %p293 = scmp.ne.s32.totalorder %s282, %s283
      %p294 = scmp.eq.s32.totalorder %s26, 0
      %p295 = por %p293, %p294
      %p296 = scmp.ne.s32.totalorder %s282, %s283
      %p297 = scmp.eq.s32.totalorder %s27, 3
      %p298 = por %p296, %p297
      %p300 = scmp.ne.s32.totalorder %s283, %s299
      %p301 = scmp.eq.s32.totalorder %s27, 0
      %p302 = por %p300, %p301
      %s303 = ssub.s32 %s28, %s40
      %s304 = ssub.s32 %s29, %s36
      %s305 = sor.u32 %s303, %s304
      %p306 = scmp.eq.s32.totalorder %s305, 0
      %s308 = sadd.s32 %s307, 1
      %s309 = scalar_select %p306, %s307, %s308
      %p312 = pneg %p306
      %p313 = scmp.eq.s32.totalorder %s21, 3
      %p314 = por %p312, %p313
      %p315 = scmp.ne.s32.totalorder %s307, %s310
      %p316 = scmp.eq.s32.totalorder %s21, 0
      %p317 = por %p315, %p316
      %p318 = scmp.ne.s32.totalorder %s307, %s310
      %p319 = scmp.eq.s32.totalorder %s26, 3
      %p320 = por %p318, %p319
      %p321 = scmp.ne.s32.totalorder %s310, %s311
      %p322 = scmp.eq.s32.totalorder %s26, 0
      %p323 = por %p321, %p322
      %p324 = scmp.ne.s32.totalorder %s310, %s311
      %p325 = scmp.eq.s32.totalorder %s27, 3
      %p326 = por %p324, %p325
      %p328 = scmp.ne.s32.totalorder %s311, %s327
      %p329 = scmp.eq.s32.totalorder %s27, 0
      %p330 = por %p328, %p329
      %p331 = scmp.le.s32.totalorder 1, %s21
      %p332 = scmp.lt.s32.totalorder %s21, 5
      %p333 = pnand %p331, %p332
      %p334 = pneg %p333
      // Predicated region
      $region9: #{multi_head_attention.1} parent=5 // pred_check
        _
      $region10: #{multi_head_attention.1} parent=5 // pred_check_branch
        %336 = sbr.rel (%p333) target = $region12
      $region11: #{multi_head_attention.1} parent=5 // pred_region
        %s337 = ssub.s32 %s21, 1
        // Predicated region
        $region13: #{multi_head_attention.1} parent=11 // pred_check
          %p338 = pneg %p162
        $region14: #{multi_head_attention.1} parent=11 // pred_check_branch
          %340 = sbr.rel (%p338) target = $region16
        $region15: #{multi_head_attention.1} parent=11 // pred_region
          _
        $region16: #{multi_head_attention.1} parent=11 // pred_fallthru
          _
        // Predicated region
        $region17: #{multi_head_attention.1} parent=11 // pred_check
          %p341 = pneg %p183
        $region18: #{multi_head_attention.1} parent=11 // pred_check_branch
          %343 = sbr.rel (%p341) target = $region20
        $region19: #{multi_head_attention.1} parent=11 // pred_region
          _
        $region20: #{multi_head_attention.1} parent=11 // pred_fallthru
          _
        // Predicated region
        $region21: #{multi_head_attention.1} parent=11 // pred_check
          %p344 = pneg %p204
        $region22: #{multi_head_attention.1} parent=11 // pred_check_branch
          %346 = sbr.rel (%p344) target = $region24
        $region23: #{multi_head_attention.1} parent=11 // pred_region
          _
        $region24: #{multi_head_attention.1} parent=11 // pred_fallthru
          _
        // Predicated region
        $region25: #{multi_head_attention.1} parent=11 // pred_check
          %p347 = pneg %p225
        $region26: #{multi_head_attention.1} parent=11 // pred_check_branch
          %349 = sbr.rel (%p347) target = $region28
        $region27: #{multi_head_attention.1} parent=11 // pred_region
          _
        $region28: #{multi_head_attention.1} parent=11 // pred_fallthru
          _
        // Predicated region
        $region29: #{multi_head_attention.1} parent=11 // pred_check
          %p350 = pneg %p246
        $region30: #{multi_head_attention.1} parent=11 // pred_check_branch
          %352 = sbr.rel (%p350) target = $region32
        $region31: #{multi_head_attention.1} parent=11 // pred_region
          _
        $region32: #{multi_head_attention.1} parent=11 // pred_fallthru
          _
        // Predicated region
        $region33: #{multi_head_attention.1} parent=11 // pred_check
          %p353 = pneg %p267
        $region34: #{multi_head_attention.1} parent=11 // pred_check_branch
          %355 = sbr.rel (%p353) target = $region36
        $region35: #{multi_head_attention.1} parent=11 // pred_region
          _
        $region36: #{multi_head_attention.1} parent=11 // pred_fallthru
          _
      $region12: #{multi_head_attention.1} parent=5 // pred_fallthru
        _
      %p356 = scmp.lt.s32.totalorder %s21, 4
      // Predicated region
      $region37: #{multi_head_attention.1} parent=5 // pred_check
        %p357 = pneg %p356
      $region38: #{multi_head_attention.1} parent=5 // pred_check_branch
        %359 = sbr.rel (%p357) target = $region40
      $region39: #{multi_head_attention.1} parent=5 // pred_region
        // Predicated region
        $region41: #{multi_head_attention.1} parent=39 // pred_check
          %p360 = pneg %p55
        $region42: #{multi_head_attention.1} parent=39 // pred_check_branch
          %362 = sbr.rel (%p360) target = $region44
        $region43: #{multi_head_attention.1} parent=39 // pred_region
          %s363 = sand.u32 %s45, 1
          %s364 = sand.u32 %s45, 1
          %s365 = smul.addr %s364, 64
          %s366 = scalar_lea.vmem [#allocation2], %s365
          %s367 = smul.u32 2, %s28
          %s368 = smul.u32 4, %s29
          %s369 = smul.addr %s367, 8
          %s370 = sadd.s32 %s368, %s369
          %s371 = smul.addr %s370, 8
          %s372 = scalar_lea.vmem %s0, %s371
          // Predicated region
          $region45: #{multi_head_attention.1} parent=43 // pred_check
            _
          $region46: #{multi_head_attention.1} parent=43 // pred_check_branch
            %374 = sbr.rel (0) target = $region48
          $region47: #{multi_head_attention.1} parent=43 // pred_region
            // Predicated region
            $region49: #{multi_head_attention.1} parent=47 // pred_check
              _
            $region50: #{multi_head_attention.1} parent=47 // pred_check_branch
              %376 = sbr.rel (0) target = $region52
            $region51: #{multi_head_attention.1} parent=47 // pred_region
              // Predicated region
              $region64: #{multi_head_attention.1} parent=51 // pred_check
                _
              $region65: #{multi_head_attention.1} parent=51 // pred_check_branch
                %406 = sbr.rel (0) target = $region67
              $region66: #{multi_head_attention.1} parent=51 // pred_region
                loop: start=0, step=1, limit=1
                $region68: #{multi_head_attention.1} parent=66 // loop_pre_header
                  _
                $region69: #{multi_head_attention.1} parent=66 // loop_header
                  %s408 = sphi 0, %s412
                  %p409 = scmp.ge.s32.totalorder %s408, 1
                  %s413 = sphi %s372, %s372
                  %s414 = sphi %s366, %s366
                $region70: #{multi_head_attention.1} parent=66 // loop_header_branch
                  %411 = sbr.rel (%p409) target = $region74
                $region71: #{multi_head_attention.1} parent=66 // loop_body
                  %v415 = vld [vmem:[%s413] sm:$0xff]
                  %416 = vst [vmem:[%s414] sm:$0xff] %v415
                  %v417 = vld [vmem:[%s413 + $0x8] sm:$0xff]
                  %418 = vst [vmem:[%s414 + $0x8] sm:$0xff] %v417
                  %v419 = vld [vmem:[%s413 + $0x10] sm:$0xff]
                  %420 = vst [vmem:[%s414 + $0x10] sm:$0xff] %v419
                  %v421 = vld [vmem:[%s413 + $0x18] sm:$0xff]
                  %422 = vst [vmem:[%s414 + $0x18] sm:$0xff] %v421
                  %v423 = vld [vmem:[%s413 + $0x40] sm:$0xff]
                  %424 = vst [vmem:[%s414 + $0x20] sm:$0xff] %v423
                  %v425 = vld [vmem:[%s413 + $0x48] sm:$0xff]
                  %426 = vst [vmem:[%s414 + $0x28] sm:$0xff] %v425
                  %v427 = vld [vmem:[%s413 + $0x50] sm:$0xff]
                  %428 = vst [vmem:[%s414 + $0x30] sm:$0xff] %v427
                  %v429 = vld [vmem:[%s413 + $0x58] sm:$0xff]
                  %430 = vst [vmem:[%s414 + $0x38] sm:$0xff] %v429
                $region72: #{multi_head_attention.1} parent=66 // loop_footer
                  %s412 = sadd.s32 1, %s408
                $region73: #{multi_head_attention.1} parent=66 // loop_footer_branch
                  %407 = sbr.rel target = $region69
                $region74: #{multi_head_attention.1} parent=66 // loop_exit
                  _
              $region67: #{multi_head_attention.1} parent=51 // pred_fallthru
                _
              // Predicated region
              $region75: #{multi_head_attention.1} parent=51 // pred_check
                _
              $region76: #{multi_head_attention.1} parent=51 // pred_check_branch
                %432 = sbr.rel target = $region78
              $region77: #{multi_head_attention.1} parent=51 // pred_region
                _
              $region78: #{multi_head_attention.1} parent=51 // pred_fallthru
                _
            $region52: #{multi_head_attention.1} parent=47 // pred_fallthru
              _
            // Predicated region
            $region53: #{multi_head_attention.1} parent=47 // pred_check
              _
            $region54: #{multi_head_attention.1} parent=47 // pred_check_branch
              %378 = sbr.rel target = $region56
            $region55: #{multi_head_attention.1} parent=47 // pred_region
              %s380 = ssub.s32 256, 1
              loop: start=0, step=1, limit=1
              $region57: #{multi_head_attention.1} parent=55 // loop_pre_header
                _
              $region58: #{multi_head_attention.1} parent=55 // loop_header
                %s382 = sphi 0, %s386
                %p383 = scmp.ge.s32.totalorder %s382, 1
                %s387 = sphi %s372, %s372
                %s388 = sphi %s366, %s366
              $region59: #{multi_head_attention.1} parent=55 // loop_header_branch
                %385 = sbr.rel (%p383) target = $region63
              $region60: #{multi_head_attention.1} parent=55 // loop_body
                %v389 = vld [vmem:[%s387] sm:%s380]
                %390 = vst [vmem:[%s388] sm:%s380] %v389
                %v391 = vld [vmem:[%s387 + $0x8] sm:%s380]
                %392 = vst [vmem:[%s388 + $0x8] sm:%s380] %v391
                %v393 = vld [vmem:[%s387 + $0x10] sm:%s380]
                %394 = vst [vmem:[%s388 + $0x10] sm:%s380] %v393
                %v395 = vld [vmem:[%s387 + $0x18] sm:%s380]
                %396 = vst [vmem:[%s388 + $0x18] sm:%s380] %v395
                %v397 = vld [vmem:[%s387 + $0x40] sm:%s380]
                %398 = vst [vmem:[%s388 + $0x20] sm:%s380] %v397
                %v399 = vld [vmem:[%s387 + $0x48] sm:%s380]
                %400 = vst [vmem:[%s388 + $0x28] sm:%s380] %v399
                %v401 = vld [vmem:[%s387 + $0x50] sm:%s380]
                %402 = vst [vmem:[%s388 + $0x30] sm:%s380] %v401
                %v403 = vld [vmem:[%s387 + $0x58] sm:%s380]
                %404 = vst [vmem:[%s388 + $0x38] sm:%s380] %v403
              $region61: #{multi_head_attention.1} parent=55 // loop_footer
                %s386 = sadd.s32 1, %s382
              $region62: #{multi_head_attention.1} parent=55 // loop_footer_branch
                %381 = sbr.rel target = $region58
              $region63: #{multi_head_attention.1} parent=55 // loop_exit
                _
            $region56: #{multi_head_attention.1} parent=47 // pred_fallthru
              _
          $region48: #{multi_head_attention.1} parent=43 // pred_fallthru
            _
          %433 = vnop
        $region44: #{multi_head_attention.1} parent=39 // pred_fallthru
          _
        // Predicated region
        $region79: #{multi_head_attention.1} parent=39 // pred_check
          %p434 = pneg %p81
        $region80: #{multi_head_attention.1} parent=39 // pred_check_branch
          %436 = sbr.rel (%p434) target = $region82
        $region81: #{multi_head_attention.1} parent=39 // pred_region
          %s437 = smul.u32 2, %s28
          %p438 = scmp.lt.s32.totalorder %s437, 3
          %s439 = scalar_select %p438, %s437, 3
          %s440 = smul.addr %s439, 8
          %s441 = smul.addr %s440, 8
          %s442 = scalar_lea.vmem %s1, %s441
          %s443 = smul.u32 2, %s28
        $region82: #{multi_head_attention.1} parent=39 // pred_fallthru
          _
        // Predicated region
        $region83: #{multi_head_attention.1} parent=39 // pred_check
          %p444 = pneg %p107
        $region84: #{multi_head_attention.1} parent=39 // pred_check_branch
          %446 = sbr.rel (%p444) target = $region86
        $region85: #{multi_head_attention.1} parent=39 // pred_region
          %s447 = smul.u32 2, %s28
          %p448 = scmp.lt.s32.totalorder %s447, 3
          %s449 = scalar_select %p448, %s447, 3
          %s450 = smul.addr %s449, 8
          %s451 = smul.addr %s450, 8
          %s452 = scalar_lea.vmem %s2, %s451
          %s453 = smul.u32 2, %s28
        $region86: #{multi_head_attention.1} parent=39 // pred_fallthru
          _
        // Predicated region
        $region87: #{multi_head_attention.1} parent=39 // pred_check
          %p454 = pneg %p135
        $region88: #{multi_head_attention.1} parent=39 // pred_check_branch
          %456 = sbr.rel (%p454) target = $region90
        $region89: #{multi_head_attention.1} parent=39 // pred_region
          %s457 = sand.u32 %s125, 1
          %s458 = sand.u32 %s125, 1
          %s459 = smul.addr %s458, 16
          %s460 = scalar_lea.vmem [#allocation3], %s459
          %s461 = smul.u32 2, %s28
          %s462 = smul.addr %s461, 2
          %s463 = sadd.s32 %s29, %s462
          %s464 = smul.addr %s463, 8
          %s465 = scalar_lea.vmem %s3, %s464
          // Predicated region
          $region91: #{multi_head_attention.1} parent=89 // pred_check
            _
          $region92: #{multi_head_attention.1} parent=89 // pred_check_branch
            %467 = sbr.rel (0) target = $region94
          $region93: #{multi_head_attention.1} parent=89 // pred_region
            // Predicated region
            $region95: #{multi_head_attention.1} parent=93 // pred_check
              _
            $region96: #{multi_head_attention.1} parent=93 // pred_check_branch
              %469 = sbr.rel (0) target = $region98
            $region97: #{multi_head_attention.1} parent=93 // pred_region
              // Predicated region
              $region110: #{multi_head_attention.1} parent=97 // pred_check
                _
              $region111: #{multi_head_attention.1} parent=97 // pred_check_branch
                %487 = sbr.rel (0) target = $region113
              $region112: #{multi_head_attention.1} parent=97 // pred_region
                loop: start=0, step=1, limit=1
                $region114: #{multi_head_attention.1} parent=112 // loop_pre_header
                  _
                $region115: #{multi_head_attention.1} parent=112 // loop_header
                  %s489 = sphi 0, %s493
                  %p490 = scmp.ge.s32.totalorder %s489, 1
                  %s494 = sphi %s465, %s465
                  %s495 = sphi %s460, %s460
                $region116: #{multi_head_attention.1} parent=112 // loop_header_branch
                  %492 = sbr.rel (%p490) target = $region120
                $region117: #{multi_head_attention.1} parent=112 // loop_body
                  %v496 = vld [vmem:[%s494] sm:$0xff]
                  %497 = vst [vmem:[%s495] sm:$0xff] %v496
                  %v498 = vld [vmem:[%s494 + $0x10] sm:$0xff]
                  %499 = vst [vmem:[%s495 + $0x8] sm:$0xff] %v498
                $region118: #{multi_head_attention.1} parent=112 // loop_footer
                  %s493 = sadd.s32 1, %s489
                $region119: #{multi_head_attention.1} parent=112 // loop_footer_branch
                  %488 = sbr.rel target = $region115
                $region120: #{multi_head_attention.1} parent=112 // loop_exit
                  _
              $region113: #{multi_head_attention.1} parent=97 // pred_fallthru
                _
              // Predicated region
              $region121: #{multi_head_attention.1} parent=97 // pred_check
                _
              $region122: #{multi_head_attention.1} parent=97 // pred_check_branch
                %501 = sbr.rel target = $region124
              $region123: #{multi_head_attention.1} parent=97 // pred_region
                _
              $region124: #{multi_head_attention.1} parent=97 // pred_fallthru
                _
            $region98: #{multi_head_attention.1} parent=93 // pred_fallthru
              _
            // Predicated region
            $region99: #{multi_head_attention.1} parent=93 // pred_check
              _
            $region100: #{multi_head_attention.1} parent=93 // pred_check_branch
              %471 = sbr.rel target = $region102
            $region101: #{multi_head_attention.1} parent=93 // pred_region
              %s473 = ssub.s32 256, 1
              loop: start=0, step=1, limit=1
              $region103: #{multi_head_attention.1} parent=101 // loop_pre_header
                _
              $region104: #{multi_head_attention.1} parent=101 // loop_header
                %s475 = sphi 0, %s479
                %p476 = scmp.ge.s32.totalorder %s475, 1
                %s480 = sphi %s465, %s465
                %s481 = sphi %s460, %s460
              $region105: #{multi_head_attention.1} parent=101 // loop_header_branch
                %478 = sbr.rel (%p476) target = $region109
              $region106: #{multi_head_attention.1} parent=101 // loop_body
                %v482 = vld [vmem:[%s480] sm:%s473]
                %483 = vst [vmem:[%s481] sm:%s473] %v482
                %v484 = vld [vmem:[%s480 + $0x10] sm:%s473]
                %485 = vst [vmem:[%s481 + $0x8] sm:%s473] %v484
              $region107: #{multi_head_attention.1} parent=101 // loop_footer
                %s479 = sadd.s32 1, %s475
              $region108: #{multi_head_attention.1} parent=101 // loop_footer_branch
                %474 = sbr.rel target = $region104
              $region109: #{multi_head_attention.1} parent=101 // loop_exit
                _
            $region102: #{multi_head_attention.1} parent=93 // pred_fallthru
              _
          $region94: #{multi_head_attention.1} parent=89 // pred_fallthru
            _
          %502 = vnop
        $region90: #{multi_head_attention.1} parent=39 // pred_fallthru
          _
      $region40: #{multi_head_attention.1} parent=5 // pred_fallthru
        _
      %p503 = scmp.le.s32.totalorder 1, %s21
      %p504 = scmp.lt.s32.totalorder %s21, 5
      %p505 = pnand %p503, %p504
      %p506 = pneg %p505
      // Predicated region
      $region125: #{multi_head_attention.1} parent=5 // pred_check
        _
      $region126: #{multi_head_attention.1} parent=5 // pred_check_branch
        %508 = sbr.rel (%p505) target = $region128
      $region127: #{multi_head_attention.1} parent=5 // pred_region
        %s509 = ssub.s32 %s21, 1
        %s510 = sand.u32 %s48, 1
        %s511 = sand.u32 %s48, 1
        %s512 = smul.addr %s511, 64
        %s513 = scalar_lea.vmem [#allocation2], %s512
        // Predicated region
        $region129: #{multi_head_attention.1} parent=127 // pred_check
          %p514 = pneg %p61
        $region130: #{multi_head_attention.1} parent=127 // pred_check_branch
          %516 = sbr.rel (%p514) target = $region132
        $region131: #{multi_head_attention.1} parent=127 // pred_region
          _
        $region132: #{multi_head_attention.1} parent=127 // pred_fallthru
          _
        %s517 = sand.u32 %s128, 1
        %s518 = sand.u32 %s128, 1
        %s519 = smul.addr %s518, 16
        %s520 = scalar_lea.vmem [#allocation3], %s519
        // Predicated region
        $region133: #{multi_head_attention.1} parent=127 // pred_check
          %p521 = pneg %p141
        $region134: #{multi_head_attention.1} parent=127 // pred_check_branch
          %523 = sbr.rel (%p521) target = $region136
        $region135: #{multi_head_attention.1} parent=127 // pred_region
          _
        $region136: #{multi_head_attention.1} parent=127 // pred_fallthru
          _
        %s524 = sand.u32 %s48, 1
        %s525 = sand.u32 %s48, 1
        %s526 = smul.addr %s525, 64
        %s527 = scalar_lea.vmem [#allocation2], %s526
        %p528 = pneg %p61
        %p529 = pneg %p58
        %s530 = smul.u32 2, %s30
        %p531 = scmp.lt.s32.totalorder %s530, 3
        %s532 = scalar_select %p531, %s530, 3
        %s533 = smul.addr %s532, 8
        %s534 = smul.addr %s533, 8
        %s535 = scalar_lea.vmem %s1, %s534
        %p536 = pneg %p87
        %p537 = pneg %p84
        %s538 = smul.u32 2, %s30
        %p539 = scmp.lt.s32.totalorder %s538, 3
        %s540 = scalar_select %p539, %s538, 3
        %s541 = smul.addr %s540, 8
        %s542 = smul.addr %s541, 8
        %s543 = scalar_lea.vmem %s2, %s542
        %p544 = pneg %p113
        %p545 = pneg %p110
        %s546 = sand.u32 %s128, 1
        %s547 = sand.u32 %s128, 1
        %s548 = smul.addr %s547, 16
        %s549 = scalar_lea.vmem [#allocation3], %s548
        %p550 = pneg %p141
        %p551 = pneg %p138
        %p552 = pneg %p162
        %p553 = pneg %p159
        %p554 = pneg %p183
        %p555 = pneg %p180
        %p556 = pneg %p204
        %p557 = pneg %p201
        %p558 = pneg %p225
        %p559 = pneg %p222
        %p560 = pneg %p246
        %p561 = pneg %p243
        %p562 = pneg %p267
        %p563 = pneg %p264
        %p564 = pneg %p295
        %p565 = pneg %p292
        %s566 = sand.u32 %s282, 1
        %s567 = sand.u32 %s282, 1
        %s568 = smul.addr %s567, 64
        %s569 = scalar_lea.vmem [#allocation4], %s568
        %p570 = pneg %p323
        %p571 = pneg %p320
        %s572 = sand.u32 %s310, 1
        %s573 = scalar_lea.sflag [#allocation6], %s572
        %s574 = sand.u32 %s310, 1
        %s575 = smul.addr %s574, 256
        %s576 = scalar_lea.vmem [#allocation5], %s575
        %s577 = smul.u32 2, %s30
        %s578 = smul.u32 4, %s31
        %s579 = smul.u32 2, %s30
        %p580 = scmp.lt.s32.totalorder %s579, 3
        %s581 = scalar_select %p580, %s579, 3
        %s582 = smul.addr %s581, 8
        %s583 = smul.addr %s582, 8
        %s584 = scalar_lea.vmem %s1, %s583
        %s585 = smul.u32 2, %s30
        %s586 = smul.u32 2, %s30
        %p587 = scmp.lt.s32.totalorder %s586, 3
        %s588 = scalar_select %p587, %s586, 3
        %s589 = smul.addr %s588, 8
        %s590 = smul.addr %s589, 8
        %s591 = scalar_lea.vmem %s2, %s590
        %s592 = smul.u32 2, %s30
        %s593 = smul.u32 2, %s30
        %s594 = smul.u32 2, %s30
        %s595 = smul.u32 4, %s31
        %s596 = smul.u32 2, %s30
        %s597 = smul.u32 4, %s31
        %v600 = vld [vmem:[%s513] sm:$0xff]
        %v601 = vld [vmem:[%s513 + $0x8] sm:$0xff]
        %v602 = vld [vmem:[%s513 + $0x10] sm:$0xff]
        %v603 = vld [vmem:[%s513 + $0x18] sm:$0xff]
        %v604 = vld [vmem:[%s513 + $0x20] sm:$0xff]
        %v605 = vld [vmem:[%s513 + $0x28] sm:$0xff]
        %v606 = vld [vmem:[%s513 + $0x30] sm:$0xff]
        %v607 = vld [vmem:[%s513 + $0x38] sm:$0xff]
        %v608 = vld [vmem:[%s4] sm:$0xff]
        %v609 = vld [vmem:[%s4 + $0x8] sm:$0xff]
        %v610 = vld [vmem:[%s4 + $0x10] sm:$0xff]
        %v611 = vld [vmem:[%s4 + $0x18] sm:$0xff]
        %vm612 = vcmask 261120
        %v614 = vsel %vm612, %v600, 0
        %v617 = vsel %vm612, %v601, 0
        %v620 = vsel %vm612, %v602, 0
        %v623 = vsel %vm612, %v603, 0
        %v626 = vsel %vm612, %v604, 0
        %v629 = vsel %vm612, %v605, 0
        %v632 = vsel %vm612, %v606, 0
        %v635 = vsel %vm612, %v607, 0
        %637 = vmatprep.subr.mxu0 0.0
        %638 = vmatpush1.msra.mxu0 0.0
        %639 = vmatprep.subr.mxu0 0.0
        %640 = vmatpush1.msra.mxu0 0.0
        %641 = vmatprep.subr.mxu0 0.0
        %642 = vmatpush1.msra.mxu0 0.0
        %643 = vmatprep.subr.mxu0 0.0
        %644 = vmatpush1.msra.mxu0 0.0
        %645 = vmatprep.subr.mxu0 0.0
        %646 = vmatpush1.msra.mxu0 0.0
        %647 = vmatprep.subr.mxu0 0.0
        %648 = vmatpush1.msra.mxu0 0.0
        %649 = vmatprep.subr.mxu0 0.0
        %650 = vmatpush1.msra.mxu0 0.0
        %651 = vmatprep.subr.mxu0 0.0
        %652 = vmatpush1.msra.mxu0 0.0
        %653 = vmatprep.subr.mxu0 0.0
        %654 = vmatpush1.msra.mxu0 0.0
        %655 = vmatprep.subr.mxu0 0.0
        %656 = vmatpush1.msra.mxu0 0.0
        %657 = vmatprep.subr.mxu0 0.0
        %658 = vmatpush1.msra.mxu0 0.0
        %659 = vmatprep.subr.mxu0 0.0
        %660 = vmatpush1.msra.mxu0 0.0
        %661 = vmatprep.subr.mxu0 0.0
        %662 = vmatpush1.msra.mxu0 %v611
        %663 = vmatprep.subr.mxu0 0.0
        %664 = vmatpush1.msra.mxu0 %v610
        %665 = vmatprep.subr.mxu0 0.0
        %666 = vmatpush1.msra.mxu0 %v609
        %667 = vmatprep.subr.mxu0 0.0
        %668 = vmatpush1.msra.mxu0 %v608
        %669 = vmatprep.subr.mxu0 0.0
        %670 = vmatpush2.msra.mxu0 0.0
        %671 = vmatprep.subr.mxu0 0.0
        %672 = vmatpush2.msra.mxu0 0.0
        %673 = vmatprep.subr.mxu0 0.0
        %674 = vmatpush2.msra.mxu0 0.0
        %675 = vmatprep.subr.mxu0 0.0
        %676 = vmatpush2.msra.mxu0 0.0
        %677 = vmatprep.subr.mxu0 0.0
        %678 = vmatpush2.msra.mxu0 0.0
        %679 = vmatprep.subr.mxu0 0.0
        %680 = vmatpush2.msra.mxu0 0.0
        %681 = vmatprep.subr.mxu0 0.0
        %682 = vmatpush2.msra.mxu0 0.0
        %683 = vmatprep.subr.mxu0 0.0
        %684 = vmatpush2.msra.mxu0 0.0
        %685 = vmatprep.subr.mxu0 0.0
        %686 = vmatpush2.msra.mxu0 0.0
        %687 = vmatprep.subr.mxu0 0.0
        %688 = vmatpush2.msra.mxu0 0.0
        %689 = vmatprep.subr.mxu0 0.0
        %690 = vmatpush2.msra.mxu0 0.0
        %691 = vmatprep.subr.mxu0 0.0
        %692 = vmatpush2.msra.mxu0 0.0
        %693 = vmatprep.subr.mxu0 0.0
        %694 = vmatpush2.msra.mxu0 0.0
        %695 = vmatprep.subr.mxu0 0.0
        %696 = vmatpush2.msra.mxu0 0.0
        %697 = vmatprep.subr.mxu0 0.0
        %698 = vmatpush2.msra.mxu0 0.0
        %699 = vmatprep.subr.mxu0 0.0
        %700 = vmatpush2.msra.mxu0 0.0
        %701 = vmatprep.mubr.f32.mxu0 0.0
        %702 = vmatmul.mubr.f32.gmra.mxu0 %v614
        %v703 = vpop.f32.mrf.mxu0
        %v704 = vadd.f32 0.0, %v703
        %v705 = vpop.f32.mrf.mxu0
        %706 = vmatprep.mubr.f32.mxu0 0.0
        %707 = vmatmul.mubr.f32.gmra.mxu0 %v617
        %v708 = vpop.f32.mrf.mxu0
        %v709 = vadd.f32 0.0, %v708
        %v710 = vpop.f32.mrf.mxu0
        %711 = vmatprep.mubr.f32.mxu0 0.0
        %712 = vmatmul.mubr.f32.gmra.mxu0 %v620
        %v713 = vpop.f32.mrf.mxu0
        %v714 = vadd.f32 0.0, %v713
        %v715 = vpop.f32.mrf.mxu0
        %716 = vmatprep.mubr.f32.mxu0 0.0
        %717 = vmatmul.mubr.f32.gmra.mxu0 %v623
        %v718 = vpop.f32.mrf.mxu0
        %v719 = vadd.f32 0.0, %v718
        %v720 = vpop.f32.mrf.mxu0
        %721 = vmatprep.mubr.f32.mxu0 0.0
        %722 = vmatmul.mubr.f32.gmra.mxu0 %v626
        %v723 = vpop.f32.mrf.mxu0
        %v724 = vadd.f32 0.0, %v723
        %v725 = vpop.f32.mrf.mxu0
        %726 = vmatprep.mubr.f32.mxu0 0.0
        %727 = vmatmul.mubr.f32.gmra.mxu0 %v629
        %v728 = vpop.f32.mrf.mxu0
        %v729 = vadd.f32 0.0, %v728
        %v730 = vpop.f32.mrf.mxu0
        %731 = vmatprep.mubr.f32.mxu0 0.0
        %732 = vmatmul.mubr.f32.gmra.mxu0 %v632
        %v733 = vpop.f32.mrf.mxu0
        %v734 = vadd.f32 0.0, %v733
        %v735 = vpop.f32.mrf.mxu0
        %736 = vmatprep.mubr.f32.mxu0 0.0
        %737 = vmatmul.mubr.f32.gmra.mxu0 %v635
        %v738 = vpop.f32.mrf.mxu0
        %v739 = vadd.f32 0.0, %v738
        %v740 = vpop.f32.mrf.mxu0
        %741 = vdwg.mxu0
        %v742 = vld [vmem:[%s584] sm:$0xff]
        %v743 = vld [vmem:[%s584 + $0x8] sm:$0xff]
        %v744 = vld [vmem:[%s584 + $0x10] sm:$0xff]
        %v745 = vld [vmem:[%s584 + $0x18] sm:$0xff]
        %v746 = vld [vmem:[%s584 + $0x20] sm:$0xff]
        %v747 = vld [vmem:[%s584 + $0x28] sm:$0xff]
        %v748 = vld [vmem:[%s584 + $0x30] sm:$0xff]
        %v749 = vld [vmem:[%s584 + $0x38] sm:$0xff]
        %v750 = vld [vmem:[%s584 + $0x40] sm:$0xff]
        %v751 = vld [vmem:[%s584 + $0x48] sm:$0xff]
        %v752 = vld [vmem:[%s584 + $0x50] sm:$0xff]
        %v753 = vld [vmem:[%s584 + $0x58] sm:$0xff]
        %v754 = vld [vmem:[%s584 + $0x60] sm:$0xff]
        %v755 = vld [vmem:[%s584 + $0x68] sm:$0xff]
        %v756 = vld [vmem:[%s584 + $0x70] sm:$0xff]
        %v757 = vld [vmem:[%s584 + $0x78] sm:$0xff]
        %v758 = vld [vmem:[%s5] sm:$0xff]
        %v759 = vld [vmem:[%s5 + $0x8] sm:$0xff]
        %v760 = vld [vmem:[%s5 + $0x10] sm:$0xff]
        %v761 = vld [vmem:[%s5 + $0x18] sm:$0xff]
        %v763 = vsel %vm612, %v742, 0
        %v766 = vsel %vm612, %v743, 0
        %v769 = vsel %vm612, %v744, 0
        %v772 = vsel %vm612, %v745, 0
        %v775 = vsel %vm612, %v746, 0
        %v778 = vsel %vm612, %v747, 0
        %v781 = vsel %vm612, %v748, 0
        %v784 = vsel %vm612, %v749, 0
        %v787 = vsel %vm612, %v750, 0
        %v790 = vsel %vm612, %v751, 0
        %v793 = vsel %vm612, %v752, 0
        %v796 = vsel %vm612, %v753, 0
        %v799 = vsel %vm612, %v754, 0
        %v802 = vsel %vm612, %v755, 0
        %v805 = vsel %vm612, %v756, 0
        %v808 = vsel %vm612, %v757, 0
        %810 = vmatprep.subr.mxu0 0.0
        %811 = vmatpush1.msra.mxu0 0.0
        %812 = vmatprep.subr.mxu0 0.0
        %813 = vmatpush1.msra.mxu0 0.0
        %814 = vmatprep.subr.mxu0 0.0
        %815 = vmatpush1.msra.mxu0 0.0
        %816 = vmatprep.subr.mxu0 0.0
        %817 = vmatpush1.msra.mxu0 0.0
        %818 = vmatprep.subr.mxu0 0.0
        %819 = vmatpush1.msra.mxu0 0.0
        %820 = vmatprep.subr.mxu0 0.0
        %821 = vmatpush1.msra.mxu0 0.0
        %822 = vmatprep.subr.mxu0 0.0
        %823 = vmatpush1.msra.mxu0 0.0
        %824 = vmatprep.subr.mxu0 0.0
        %825 = vmatpush1.msra.mxu0 0.0
        %826 = vmatprep.subr.mxu0 0.0
        %827 = vmatpush1.msra.mxu0 0.0
        %828 = vmatprep.subr.mxu0 0.0
        %829 = vmatpush1.msra.mxu0 0.0
        %830 = vmatprep.subr.mxu0 0.0
        %831 = vmatpush1.msra.mxu0 0.0
        %832 = vmatprep.subr.mxu0 0.0
        %833 = vmatpush1.msra.mxu0 0.0
        %834 = vmatprep.subr.mxu0 0.0
        %835 = vmatpush1.msra.mxu0 %v761
        %836 = vmatprep.subr.mxu0 0.0
        %837 = vmatpush1.msra.mxu0 %v760
        %838 = vmatprep.subr.mxu0 0.0
        %839 = vmatpush1.msra.mxu0 %v759
        %840 = vmatprep.subr.mxu0 0.0
        %841 = vmatpush1.msra.mxu0 %v758
        %842 = vmatprep.subr.mxu0 0.0
        %843 = vmatpush2.msra.mxu0 0.0
        %844 = vmatprep.subr.mxu0 0.0
        %845 = vmatpush2.msra.mxu0 0.0
        %846 = vmatprep.subr.mxu0 0.0
        %847 = vmatpush2.msra.mxu0 0.0
        %848 = vmatprep.subr.mxu0 0.0
        %849 = vmatpush2.msra.mxu0 0.0
        %850 = vmatprep.subr.mxu0 0.0
        %851 = vmatpush2.msra.mxu0 0.0
        %852 = vmatprep.subr.mxu0 0.0
        %853 = vmatpush2.msra.mxu0 0.0
        %854 = vmatprep.subr.mxu0 0.0
        %855 = vmatpush2.msra.mxu0 0.0
        %856 = vmatprep.subr.mxu0 0.0
        %857 = vmatpush2.msra.mxu0 0.0
        %858 = vmatprep.subr.mxu0 0.0
        %859 = vmatpush2.msra.mxu0 0.0
        %860 = vmatprep.subr.mxu0 0.0
        %861 = vmatpush2.msra.mxu0 0.0
        %862 = vmatprep.subr.mxu0 0.0
        %863 = vmatpush2.msra.mxu0 0.0
        %864 = vmatprep.subr.mxu0 0.0
        %865 = vmatpush2.msra.mxu0 0.0
        %866 = vmatprep.subr.mxu0 0.0
        %867 = vmatpush2.msra.mxu0 0.0
        %868 = vmatprep.subr.mxu0 0.0
        %869 = vmatpush2.msra.mxu0 0.0
        %870 = vmatprep.subr.mxu0 0.0
        %871 = vmatpush2.msra.mxu0 0.0
        %872 = vmatprep.subr.mxu0 0.0
        %873 = vmatpush2.msra.mxu0 0.0
        %874 = vmatprep.mubr.f32.mxu0 0.0
        %875 = vmatmul.mubr.f32.gmra.mxu0 %v763
        %v876 = vpop.f32.mrf.mxu0
        %v877 = vadd.f32 0.0, %v876
        %v878 = vpop.f32.mrf.mxu0
        %879 = vmatprep.mubr.f32.mxu0 0.0
        %880 = vmatmul.mubr.f32.gmra.mxu0 %v766
        %v881 = vpop.f32.mrf.mxu0
        %v882 = vadd.f32 0.0, %v881
        %v883 = vpop.f32.mrf.mxu0
        %884 = vmatprep.mubr.f32.mxu0 0.0
        %885 = vmatmul.mubr.f32.gmra.mxu0 %v769
        %v886 = vpop.f32.mrf.mxu0
        %v887 = vadd.f32 0.0, %v886
        %v888 = vpop.f32.mrf.mxu0
        %889 = vmatprep.mubr.f32.mxu0 0.0
        %890 = vmatmul.mubr.f32.gmra.mxu0 %v772
        %v891 = vpop.f32.mrf.mxu0
        %v892 = vadd.f32 0.0, %v891
        %v893 = vpop.f32.mrf.mxu0
        %894 = vmatprep.mubr.f32.mxu0 0.0
        %895 = vmatmul.mubr.f32.gmra.mxu0 %v775
        %v896 = vpop.f32.mrf.mxu0
        %v897 = vadd.f32 0.0, %v896
        %v898 = vpop.f32.mrf.mxu0
        %899 = vmatprep.mubr.f32.mxu0 0.0
        %900 = vmatmul.mubr.f32.gmra.mxu0 %v778
        %v901 = vpop.f32.mrf.mxu0
        %v902 = vadd.f32 0.0, %v901
        %v903 = vpop.f32.mrf.mxu0
        %904 = vmatprep.mubr.f32.mxu0 0.0
        %905 = vmatmul.mubr.f32.gmra.mxu0 %v781
        %v906 = vpop.f32.mrf.mxu0
        %v907 = vadd.f32 0.0, %v906
        %v908 = vpop.f32.mrf.mxu0
        %909 = vmatprep.mubr.f32.mxu0 0.0
        %910 = vmatmul.mubr.f32.gmra.mxu0 %v784
        %v911 = vpop.f32.mrf.mxu0
        %v912 = vadd.f32 0.0, %v911
        %v913 = vpop.f32.mrf.mxu0
        %914 = vmatprep.mubr.f32.mxu0 0.0
        %915 = vmatmul.mubr.f32.gmra.mxu0 %v787
        %v916 = vpop.f32.mrf.mxu0
        %v917 = vadd.f32 0.0, %v916
        %v918 = vpop.f32.mrf.mxu0
        %919 = vmatprep.mubr.f32.mxu0 0.0
        %920 = vmatmul.mubr.f32.gmra.mxu0 %v790
        %v921 = vpop.f32.mrf.mxu0
        %v922 = vadd.f32 0.0, %v921
        %v923 = vpop.f32.mrf.mxu0
        %924 = vmatprep.mubr.f32.mxu0 0.0
        %925 = vmatmul.mubr.f32.gmra.mxu0 %v793
        %v926 = vpop.f32.mrf.mxu0
        %v927 = vadd.f32 0.0, %v926
        %v928 = vpop.f32.mrf.mxu0
        %929 = vmatprep.mubr.f32.mxu0 0.0
        %930 = vmatmul.mubr.f32.gmra.mxu0 %v796
        %v931 = vpop.f32.mrf.mxu0
        %v932 = vadd.f32 0.0, %v931
        %v933 = vpop.f32.mrf.mxu0
        %934 = vmatprep.mubr.f32.mxu0 0.0
        %935 = vmatmul.mubr.f32.gmra.mxu0 %v799
        %v936 = vpop.f32.mrf.mxu0
        %v937 = vadd.f32 0.0, %v936
        %v938 = vpop.f32.mrf.mxu0
        %939 = vmatprep.mubr.f32.mxu0 0.0
        %940 = vmatmul.mubr.f32.gmra.mxu0 %v802
        %v941 = vpop.f32.mrf.mxu0
        %v942 = vadd.f32 0.0, %v941
        %v943 = vpop.f32.mrf.mxu0
        %944 = vmatprep.mubr.f32.mxu0 0.0
        %945 = vmatmul.mubr.f32.gmra.mxu0 %v805
        %v946 = vpop.f32.mrf.mxu0
        %v947 = vadd.f32 0.0, %v946
        %v948 = vpop.f32.mrf.mxu0
        %949 = vmatprep.mubr.f32.mxu0 0.0
        %950 = vmatmul.mubr.f32.gmra.mxu0 %v808
        %v951 = vpop.f32.mrf.mxu0
        %v952 = vadd.f32 0.0, %v951
        %v953 = vpop.f32.mrf.mxu0
        %954 = vdwg.mxu0
        %v955 = vld [vmem:[%s591] sm:$0xff]
        %v956 = vld [vmem:[%s591 + $0x8] sm:$0xff]
        %v957 = vld [vmem:[%s591 + $0x10] sm:$0xff]
        %v958 = vld [vmem:[%s591 + $0x18] sm:$0xff]
        %v959 = vld [vmem:[%s591 + $0x20] sm:$0xff]
        %v960 = vld [vmem:[%s591 + $0x28] sm:$0xff]
        %v961 = vld [vmem:[%s591 + $0x30] sm:$0xff]
        %v962 = vld [vmem:[%s591 + $0x38] sm:$0xff]
        %v963 = vld [vmem:[%s591 + $0x40] sm:$0xff]
        %v964 = vld [vmem:[%s591 + $0x48] sm:$0xff]
        %v965 = vld [vmem:[%s591 + $0x50] sm:$0xff]
        %v966 = vld [vmem:[%s591 + $0x58] sm:$0xff]
        %v967 = vld [vmem:[%s591 + $0x60] sm:$0xff]
        %v968 = vld [vmem:[%s591 + $0x68] sm:$0xff]
        %v969 = vld [vmem:[%s591 + $0x70] sm:$0xff]
        %v970 = vld [vmem:[%s591 + $0x78] sm:$0xff]
        %v971 = vld [vmem:[%s6] sm:$0xff]
        %v972 = vld [vmem:[%s6 + $0x8] sm:$0xff]
        %v973 = vld [vmem:[%s6 + $0x10] sm:$0xff]
        %v974 = vld [vmem:[%s6 + $0x18] sm:$0xff]
        %v976 = vsel %vm612, %v955, 0
        %v979 = vsel %vm612, %v956, 0
        %v982 = vsel %vm612, %v957, 0
        %v985 = vsel %vm612, %v958, 0
        %v988 = vsel %vm612, %v959, 0
        %v991 = vsel %vm612, %v960, 0
        %v994 = vsel %vm612, %v961, 0
        %v997 = vsel %vm612, %v962, 0
        %v1000 = vsel %vm612, %v963, 0
        %v1003 = vsel %vm612, %v964, 0
        %v1006 = vsel %vm612, %v965, 0
        %v1009 = vsel %vm612, %v966, 0
        %v1012 = vsel %vm612, %v967, 0
        %v1015 = vsel %vm612, %v968, 0
        %v1018 = vsel %vm612, %v969, 0
        %v1021 = vsel %vm612, %v970, 0
        %1023 = vmatprep.subr.mxu0 0.0
        %1024 = vmatpush1.msra.mxu0 0.0
        %1025 = vmatprep.subr.mxu0 0.0
        %1026 = vmatpush1.msra.mxu0 0.0
        %1027 = vmatprep.subr.mxu0 0.0
        %1028 = vmatpush1.msra.mxu0 0.0
        %1029 = vmatprep.subr.mxu0 0.0
        %1030 = vmatpush1.msra.mxu0 0.0
        %1031 = vmatprep.subr.mxu0 0.0
        %1032 = vmatpush1.msra.mxu0 0.0
        %1033 = vmatprep.subr.mxu0 0.0
        %1034 = vmatpush1.msra.mxu0 0.0
        %1035 = vmatprep.subr.mxu0 0.0
        %1036 = vmatpush1.msra.mxu0 0.0
        %1037 = vmatprep.subr.mxu0 0.0
        %1038 = vmatpush1.msra.mxu0 0.0
        %1039 = vmatprep.subr.mxu0 0.0
        %1040 = vmatpush1.msra.mxu0 0.0
        %1041 = vmatprep.subr.mxu0 0.0
        %1042 = vmatpush1.msra.mxu0 0.0
        %1043 = vmatprep.subr.mxu0 0.0
        %1044 = vmatpush1.msra.mxu0 0.0
        %1045 = vmatprep.subr.mxu0 0.0
        %1046 = vmatpush1.msra.mxu0 0.0
        %1047 = vmatprep.subr.mxu0 0.0
        %1048 = vmatpush1.msra.mxu0 %v974
        %1049 = vmatprep.subr.mxu0 0.0
        %1050 = vmatpush1.msra.mxu0 %v973
        %1051 = vmatprep.subr.mxu0 0.0
        %1052 = vmatpush1.msra.mxu0 %v972
        %1053 = vmatprep.subr.mxu0 0.0
        %1054 = vmatpush1.msra.mxu0 %v971
        %1055 = vmatprep.subr.mxu0 0.0
        %1056 = vmatpush2.msra.mxu0 0.0
        %1057 = vmatprep.subr.mxu0 0.0
        %1058 = vmatpush2.msra.mxu0 0.0
        %1059 = vmatprep.subr.mxu0 0.0
        %1060 = vmatpush2.msra.mxu0 0.0
        %1061 = vmatprep.subr.mxu0 0.0
        %1062 = vmatpush2.msra.mxu0 0.0
        %1063 = vmatprep.subr.mxu0 0.0
        %1064 = vmatpush2.msra.mxu0 0.0
        %1065 = vmatprep.subr.mxu0 0.0
        %1066 = vmatpush2.msra.mxu0 0.0
        %1067 = vmatprep.subr.mxu0 0.0
        %1068 = vmatpush2.msra.mxu0 0.0
        %1069 = vmatprep.subr.mxu0 0.0
        %1070 = vmatpush2.msra.mxu0 0.0
        %1071 = vmatprep.subr.mxu0 0.0
        %1072 = vmatpush2.msra.mxu0 0.0
        %1073 = vmatprep.subr.mxu0 0.0
        %1074 = vmatpush2.msra.mxu0 0.0
        %1075 = vmatprep.subr.mxu0 0.0
        %1076 = vmatpush2.msra.mxu0 0.0
        %1077 = vmatprep.subr.mxu0 0.0
        %1078 = vmatpush2.msra.mxu0 0.0
        %1079 = vmatprep.subr.mxu0 0.0
        %1080 = vmatpush2.msra.mxu0 0.0
        %1081 = vmatprep.subr.mxu0 0.0
        %1082 = vmatpush2.msra.mxu0 0.0
        %1083 = vmatprep.subr.mxu0 0.0
        %1084 = vmatpush2.msra.mxu0 0.0
        %1085 = vmatprep.subr.mxu0 0.0
        %1086 = vmatpush2.msra.mxu0 0.0
        %1087 = vmatprep.mubr.f32.mxu0 0.0
        %1088 = vmatmul.mubr.f32.gmra.mxu0 %v976
        %v1089 = vpop.f32.mrf.mxu0
        %v1090 = vadd.f32 0.0, %v1089
        %v1091 = vpop.f32.mrf.mxu0
        %1092 = vmatprep.mubr.f32.mxu0 0.0
        %1093 = vmatmul.mubr.f32.gmra.mxu0 %v979
        %v1094 = vpop.f32.mrf.mxu0
        %v1095 = vadd.f32 0.0, %v1094
        %v1096 = vpop.f32.mrf.mxu0
        %1097 = vmatprep.mubr.f32.mxu0 0.0
        %1098 = vmatmul.mubr.f32.gmra.mxu0 %v982
        %v1099 = vpop.f32.mrf.mxu0
        %v1100 = vadd.f32 0.0, %v1099
        %v1101 = vpop.f32.mrf.mxu0
        %1102 = vmatprep.mubr.f32.mxu0 0.0
        %1103 = vmatmul.mubr.f32.gmra.mxu0 %v985
        %v1104 = vpop.f32.mrf.mxu0
        %v1105 = vadd.f32 0.0, %v1104
        %v1106 = vpop.f32.mrf.mxu0
        %1107 = vmatprep.mubr.f32.mxu0 0.0
        %1108 = vmatmul.mubr.f32.gmra.mxu0 %v988
        %v1109 = vpop.f32.mrf.mxu0
        %v1110 = vadd.f32 0.0, %v1109
        %v1111 = vpop.f32.mrf.mxu0
        %1112 = vmatprep.mubr.f32.mxu0 0.0
        %1113 = vmatmul.mubr.f32.gmra.mxu0 %v991
        %v1114 = vpop.f32.mrf.mxu0
        %v1115 = vadd.f32 0.0, %v1114
        %v1116 = vpop.f32.mrf.mxu0
        %1117 = vmatprep.mubr.f32.mxu0 0.0
        %1118 = vmatmul.mubr.f32.gmra.mxu0 %v994
        %v1119 = vpop.f32.mrf.mxu0
        %v1120 = vadd.f32 0.0, %v1119
        %v1121 = vpop.f32.mrf.mxu0
        %1122 = vmatprep.mubr.f32.mxu0 0.0
        %1123 = vmatmul.mubr.f32.gmra.mxu0 %v997
        %v1124 = vpop.f32.mrf.mxu0
        %v1125 = vadd.f32 0.0, %v1124
        %v1126 = vpop.f32.mrf.mxu0
        %1127 = vmatprep.mubr.f32.mxu0 0.0
        %1128 = vmatmul.mubr.f32.gmra.mxu0 %v1000
        %v1129 = vpop.f32.mrf.mxu0
        %v1130 = vadd.f32 0.0, %v1129
        %v1131 = vpop.f32.mrf.mxu0
        %1132 = vmatprep.mubr.f32.mxu0 0.0
        %1133 = vmatmul.mubr.f32.gmra.mxu0 %v1003
        %v1134 = vpop.f32.mrf.mxu0
        %v1135 = vadd.f32 0.0, %v1134
        %v1136 = vpop.f32.mrf.mxu0
        %1137 = vmatprep.mubr.f32.mxu0 0.0
        %1138 = vmatmul.mubr.f32.gmra.mxu0 %v1006
        %v1139 = vpop.f32.mrf.mxu0
        %v1140 = vadd.f32 0.0, %v1139
        %v1141 = vpop.f32.mrf.mxu0
        %1142 = vmatprep.mubr.f32.mxu0 0.0
        %1143 = vmatmul.mubr.f32.gmra.mxu0 %v1009
        %v1144 = vpop.f32.mrf.mxu0
        %v1145 = vadd.f32 0.0, %v1144
        %v1146 = vpop.f32.mrf.mxu0
        %1147 = vmatprep.mubr.f32.mxu0 0.0
        %1148 = vmatmul.mubr.f32.gmra.mxu0 %v1012
        %v1149 = vpop.f32.mrf.mxu0
        %v1150 = vadd.f32 0.0, %v1149
        %v1151 = vpop.f32.mrf.mxu0
        %1152 = vmatprep.mubr.f32.mxu0 0.0
        %1153 = vmatmul.mubr.f32.gmra.mxu0 %v1015
        %v1154 = vpop.f32.mrf.mxu0
        %v1155 = vadd.f32 0.0, %v1154
        %v1156 = vpop.f32.mrf.mxu0
        %1157 = vmatprep.mubr.f32.mxu0 0.0
        %1158 = vmatmul.mubr.f32.gmra.mxu0 %v1018
        %v1159 = vpop.f32.mrf.mxu0
        %v1160 = vadd.f32 0.0, %v1159
        %v1161 = vpop.f32.mrf.mxu0
        %1162 = vmatprep.mubr.f32.mxu0 0.0
        %1163 = vmatmul.mubr.f32.gmra.mxu0 %v1021
        %v1164 = vpop.f32.mrf.mxu0
        %v1165 = vadd.f32 0.0, %v1164
        %v1166 = vpop.f32.mrf.mxu0
        %1167 = vdwg.mxu0
        %1176 = vrot.lane.b32.xlu0 %v704, 120
        %v1177 = vpop.permute.xlu0 %1176
        %1178 = vrot.lane.b32.xlu0 %v709, 120
        %v1179 = vpop.permute.xlu0 %1178
        %1180 = vrot.lane.b32.xlu0 %v714, 120
        %v1181 = vpop.permute.xlu0 %1180
        %1182 = vrot.lane.b32.xlu0 %v719, 120
        %v1183 = vpop.permute.xlu0 %1182
        %1184 = vrot.lane.b32.xlu0 %v724, 120
        %v1185 = vpop.permute.xlu0 %1184
        %1186 = vrot.lane.b32.xlu0 %v729, 120
        %v1187 = vpop.permute.xlu0 %1186
        %1188 = vrot.lane.b32.xlu0 %v734, 120
        %v1189 = vpop.permute.xlu0 %1188
        %1190 = vrot.lane.b32.xlu0 %v739, 120
        %v1191 = vpop.permute.xlu0 %1190
        %1192 = vrot.lane.b32.xlu0 %v704, 112
        %v1193 = vpop.permute.xlu0 %1192
        %1194 = vrot.lane.b32.xlu0 %v709, 112
        %v1195 = vpop.permute.xlu0 %1194
        %1196 = vrot.lane.b32.xlu0 %v714, 112
        %v1197 = vpop.permute.xlu0 %1196
        %1198 = vrot.lane.b32.xlu0 %v719, 112
        %v1199 = vpop.permute.xlu0 %1198
        %1200 = vrot.lane.b32.xlu0 %v724, 112
        %v1201 = vpop.permute.xlu0 %1200
        %1202 = vrot.lane.b32.xlu0 %v729, 112
        %v1203 = vpop.permute.xlu0 %1202
        %1204 = vrot.lane.b32.xlu0 %v734, 112
        %v1205 = vpop.permute.xlu0 %1204
        %1206 = vrot.lane.b32.xlu0 %v739, 112
        %v1207 = vpop.permute.xlu0 %1206
        %1208 = vrot.lane.b32.xlu0 %v704, 104
        %v1209 = vpop.permute.xlu0 %1208
        %1210 = vrot.lane.b32.xlu0 %v709, 104
        %v1211 = vpop.permute.xlu0 %1210
        %1212 = vrot.lane.b32.xlu0 %v714, 104
        %v1213 = vpop.permute.xlu0 %1212
        %1214 = vrot.lane.b32.xlu0 %v719, 104
        %v1215 = vpop.permute.xlu0 %1214
        %1216 = vrot.lane.b32.xlu0 %v724, 104
        %v1217 = vpop.permute.xlu0 %1216
        %1218 = vrot.lane.b32.xlu0 %v729, 104
        %v1219 = vpop.permute.xlu0 %1218
        %1220 = vrot.lane.b32.xlu0 %v734, 104
        %v1221 = vpop.permute.xlu0 %1220
        %1222 = vrot.lane.b32.xlu0 %v739, 104
        %v1223 = vpop.permute.xlu0 %1222
        %1240 = vrot.lane.b32.xlu0 %v877, 120
        %v1241 = vpop.permute.xlu0 %1240
        %1242 = vrot.lane.b32.xlu0 %v882, 120
        %v1243 = vpop.permute.xlu0 %1242
        %1244 = vrot.lane.b32.xlu0 %v887, 120
        %v1245 = vpop.permute.xlu0 %1244
        %1246 = vrot.lane.b32.xlu0 %v892, 120
        %v1247 = vpop.permute.xlu0 %1246
        %1248 = vrot.lane.b32.xlu0 %v897, 120
        %v1249 = vpop.permute.xlu0 %1248
        %1250 = vrot.lane.b32.xlu0 %v902, 120
        %v1251 = vpop.permute.xlu0 %1250
        %1252 = vrot.lane.b32.xlu0 %v907, 120
        %v1253 = vpop.permute.xlu0 %1252
        %1254 = vrot.lane.b32.xlu0 %v912, 120
        %v1255 = vpop.permute.xlu0 %1254
        %1256 = vrot.lane.b32.xlu0 %v917, 120
        %v1257 = vpop.permute.xlu0 %1256
        %1258 = vrot.lane.b32.xlu0 %v922, 120
        %v1259 = vpop.permute.xlu0 %1258
        %1260 = vrot.lane.b32.xlu0 %v927, 120
        %v1261 = vpop.permute.xlu0 %1260
        %1262 = vrot.lane.b32.xlu0 %v932, 120
        %v1263 = vpop.permute.xlu0 %1262
        %1264 = vrot.lane.b32.xlu0 %v937, 120
        %v1265 = vpop.permute.xlu0 %1264
        %1266 = vrot.lane.b32.xlu0 %v942, 120
        %v1267 = vpop.permute.xlu0 %1266
        %1268 = vrot.lane.b32.xlu0 %v947, 120
        %v1269 = vpop.permute.xlu0 %1268
        %1270 = vrot.lane.b32.xlu0 %v952, 120
        %v1271 = vpop.permute.xlu0 %1270
        %1272 = vrot.lane.b32.xlu0 %v877, 112
        %v1273 = vpop.permute.xlu0 %1272
        %1274 = vrot.lane.b32.xlu0 %v882, 112
        %v1275 = vpop.permute.xlu0 %1274
        %1276 = vrot.lane.b32.xlu0 %v887, 112
        %v1277 = vpop.permute.xlu0 %1276
        %1278 = vrot.lane.b32.xlu0 %v892, 112
        %v1279 = vpop.permute.xlu0 %1278
        %1280 = vrot.lane.b32.xlu0 %v897, 112
        %v1281 = vpop.permute.xlu0 %1280
        %1282 = vrot.lane.b32.xlu0 %v902, 112
        %v1283 = vpop.permute.xlu0 %1282
        %1284 = vrot.lane.b32.xlu0 %v907, 112
        %v1285 = vpop.permute.xlu0 %1284
        %1286 = vrot.lane.b32.xlu0 %v912, 112
        %v1287 = vpop.permute.xlu0 %1286
        %1288 = vrot.lane.b32.xlu0 %v917, 112
        %v1289 = vpop.permute.xlu0 %1288
        %1290 = vrot.lane.b32.xlu0 %v922, 112
        %v1291 = vpop.permute.xlu0 %1290
        %1292 = vrot.lane.b32.xlu0 %v927, 112
        %v1293 = vpop.permute.xlu0 %1292
        %1294 = vrot.lane.b32.xlu0 %v932, 112
        %v1295 = vpop.permute.xlu0 %1294
        %1296 = vrot.lane.b32.xlu0 %v937, 112
        %v1297 = vpop.permute.xlu0 %1296
        %1298 = vrot.lane.b32.xlu0 %v942, 112
        %v1299 = vpop.permute.xlu0 %1298
        %1300 = vrot.lane.b32.xlu0 %v947, 112
        %v1301 = vpop.permute.xlu0 %1300
        %1302 = vrot.lane.b32.xlu0 %v952, 112
        %v1303 = vpop.permute.xlu0 %1302
        %1304 = vrot.lane.b32.xlu0 %v877, 104
        %v1305 = vpop.permute.xlu0 %1304
        %1306 = vrot.lane.b32.xlu0 %v882, 104
        %v1307 = vpop.permute.xlu0 %1306
        %1308 = vrot.lane.b32.xlu0 %v887, 104
        %v1309 = vpop.permute.xlu0 %1308
        %1310 = vrot.lane.b32.xlu0 %v892, 104
        %v1311 = vpop.permute.xlu0 %1310
        %1312 = vrot.lane.b32.xlu0 %v897, 104
        %v1313 = vpop.permute.xlu0 %1312
        %1314 = vrot.lane.b32.xlu0 %v902, 104
        %v1315 = vpop.permute.xlu0 %1314
        %1316 = vrot.lane.b32.xlu0 %v907, 104
        %v1317 = vpop.permute.xlu0 %1316
        %1318 = vrot.lane.b32.xlu0 %v912, 104
        %v1319 = vpop.permute.xlu0 %1318
        %1320 = vrot.lane.b32.xlu0 %v917, 104
        %v1321 = vpop.permute.xlu0 %1320
        %1322 = vrot.lane.b32.xlu0 %v922, 104
        %v1323 = vpop.permute.xlu0 %1322
        %1324 = vrot.lane.b32.xlu0 %v927, 104
        %v1325 = vpop.permute.xlu0 %1324
        %1326 = vrot.lane.b32.xlu0 %v932, 104
        %v1327 = vpop.permute.xlu0 %1326
        %1328 = vrot.lane.b32.xlu0 %v937, 104
        %v1329 = vpop.permute.xlu0 %1328
        %1330 = vrot.lane.b32.xlu0 %v942, 104
        %v1331 = vpop.permute.xlu0 %1330
        %1332 = vrot.lane.b32.xlu0 %v947, 104
        %v1333 = vpop.permute.xlu0 %1332
        %1334 = vrot.lane.b32.xlu0 %v952, 104
        %v1335 = vpop.permute.xlu0 %1334
        %1352 = vrot.lane.b32.xlu0 %v1090, 120
        %v1353 = vpop.permute.xlu0 %1352
        %1354 = vrot.lane.b32.xlu0 %v1095, 120
        %v1355 = vpop.permute.xlu0 %1354
        %1356 = vrot.lane.b32.xlu0 %v1100, 120
        %v1357 = vpop.permute.xlu0 %1356
        %1358 = vrot.lane.b32.xlu0 %v1105, 120
        %v1359 = vpop.permute.xlu0 %1358
        %1360 = vrot.lane.b32.xlu0 %v1110, 120
        %v1361 = vpop.permute.xlu0 %1360
        %1362 = vrot.lane.b32.xlu0 %v1115, 120
        %v1363 = vpop.permute.xlu0 %1362
        %1364 = vrot.lane.b32.xlu0 %v1120, 120
        %v1365 = vpop.permute.xlu0 %1364
        %1366 = vrot.lane.b32.xlu0 %v1125, 120
        %v1367 = vpop.permute.xlu0 %1366
        %1368 = vrot.lane.b32.xlu0 %v1130, 120
        %v1369 = vpop.permute.xlu0 %1368
        %1370 = vrot.lane.b32.xlu0 %v1135, 120
        %v1371 = vpop.permute.xlu0 %1370
        %1372 = vrot.lane.b32.xlu0 %v1140, 120
        %v1373 = vpop.permute.xlu0 %1372
        %1374 = vrot.lane.b32.xlu0 %v1145, 120
        %v1375 = vpop.permute.xlu0 %1374
        %1376 = vrot.lane.b32.xlu0 %v1150, 120
        %v1377 = vpop.permute.xlu0 %1376
        %1378 = vrot.lane.b32.xlu0 %v1155, 120
        %v1379 = vpop.permute.xlu0 %1378
        %1380 = vrot.lane.b32.xlu0 %v1160, 120
        %v1381 = vpop.permute.xlu0 %1380
        %1382 = vrot.lane.b32.xlu0 %v1165, 120
        %v1383 = vpop.permute.xlu0 %1382
        %1400 = vrot.lane.b32.xlu0 %v1090, 112
        %v1401 = vpop.permute.xlu0 %1400
        %1402 = vrot.lane.b32.xlu0 %v1095, 112
        %v1403 = vpop.permute.xlu0 %1402
        %1404 = vrot.lane.b32.xlu0 %v1100, 112
        %v1405 = vpop.permute.xlu0 %1404
        %1406 = vrot.lane.b32.xlu0 %v1105, 112
        %v1407 = vpop.permute.xlu0 %1406
        %1408 = vrot.lane.b32.xlu0 %v1110, 112
        %v1409 = vpop.permute.xlu0 %1408
        %1410 = vrot.lane.b32.xlu0 %v1115, 112
        %v1411 = vpop.permute.xlu0 %1410
        %1412 = vrot.lane.b32.xlu0 %v1120, 112
        %v1413 = vpop.permute.xlu0 %1412
        %1414 = vrot.lane.b32.xlu0 %v1125, 112
        %v1415 = vpop.permute.xlu0 %1414
        %1416 = vrot.lane.b32.xlu0 %v1130, 112
        %v1417 = vpop.permute.xlu0 %1416
        %1418 = vrot.lane.b32.xlu0 %v1135, 112
        %v1419 = vpop.permute.xlu0 %1418
        %1420 = vrot.lane.b32.xlu0 %v1140, 112
        %v1421 = vpop.permute.xlu0 %1420
        %1422 = vrot.lane.b32.xlu0 %v1145, 112
        %v1423 = vpop.permute.xlu0 %1422
        %1424 = vrot.lane.b32.xlu0 %v1150, 112
        %v1425 = vpop.permute.xlu0 %1424
        %1426 = vrot.lane.b32.xlu0 %v1155, 112
        %v1427 = vpop.permute.xlu0 %1426
        %1428 = vrot.lane.b32.xlu0 %v1160, 112
        %v1429 = vpop.permute.xlu0 %1428
        %1430 = vrot.lane.b32.xlu0 %v1165, 112
        %v1431 = vpop.permute.xlu0 %1430
        %1448 = vrot.lane.b32.xlu0 %v1090, 104
        %v1449 = vpop.permute.xlu0 %1448
        %1450 = vrot.lane.b32.xlu0 %v1095, 104
        %v1451 = vpop.permute.xlu0 %1450
        %1452 = vrot.lane.b32.xlu0 %v1100, 104
        %v1453 = vpop.permute.xlu0 %1452
        %1454 = vrot.lane.b32.xlu0 %v1105, 104
        %v1455 = vpop.permute.xlu0 %1454
        %1456 = vrot.lane.b32.xlu0 %v1110, 104
        %v1457 = vpop.permute.xlu0 %1456
        %1458 = vrot.lane.b32.xlu0 %v1115, 104
        %v1459 = vpop.permute.xlu0 %1458
        %1460 = vrot.lane.b32.xlu0 %v1120, 104
        %v1461 = vpop.permute.xlu0 %1460
        %1462 = vrot.lane.b32.xlu0 %v1125, 104
        %v1463 = vpop.permute.xlu0 %1462
        %1464 = vrot.lane.b32.xlu0 %v1130, 104
        %v1465 = vpop.permute.xlu0 %1464
        %1466 = vrot.lane.b32.xlu0 %v1135, 104
        %v1467 = vpop.permute.xlu0 %1466
        %1468 = vrot.lane.b32.xlu0 %v1140, 104
        %v1469 = vpop.permute.xlu0 %1468
        %1470 = vrot.lane.b32.xlu0 %v1145, 104
        %v1471 = vpop.permute.xlu0 %1470
        %1472 = vrot.lane.b32.xlu0 %v1150, 104
        %v1473 = vpop.permute.xlu0 %1472
        %1474 = vrot.lane.b32.xlu0 %v1155, 104
        %v1475 = vpop.permute.xlu0 %1474
        %1476 = vrot.lane.b32.xlu0 %v1160, 104
        %v1477 = vpop.permute.xlu0 %1476
        %1478 = vrot.lane.b32.xlu0 %v1165, 104
        %v1479 = vpop.permute.xlu0 %1478
        %vm1496 = vcmask 64512
        %v1497 = vsel %vm1496, %v704, 0
        %v1499 = vsel %vm1496, %v709, 0
        %v1501 = vsel %vm1496, %v714, 0
        %v1503 = vsel %vm1496, %v719, 0
        %v1505 = vsel %vm1496, %v877, 0
        %v1507 = vsel %vm1496, %v882, 0
        %v1509 = vsel %vm1496, %v887, 0
        %v1511 = vsel %vm1496, %v892, 0
        %v1513 = vsel %vm1496, %v897, 0
        %v1515 = vsel %vm1496, %v902, 0
        %v1517 = vsel %vm1496, %v907, 0
        %v1519 = vsel %vm1496, %v912, 0
        %1521 = vmatprep.subr.mxu0 0.0
        %1522 = vmatpush1.xpose.msra.mxu0 0.0
        %1523 = vmatprep.subr.mxu0 0.0
        %1524 = vmatpush1.xpose.msra.mxu0 0.0
        %1525 = vmatprep.subr.mxu0 0.0
        %1526 = vmatpush1.xpose.msra.mxu0 0.0
        %1527 = vmatprep.subr.mxu0 0.0
        %1528 = vmatpush1.xpose.msra.mxu0 0.0
        %1529 = vmatprep.subr.mxu0 0.0
        %1530 = vmatpush1.xpose.msra.mxu0 0.0
        %1531 = vmatprep.subr.mxu0 0.0
        %1532 = vmatpush1.xpose.msra.mxu0 0.0
        %1533 = vmatprep.subr.mxu0 0.0
        %1534 = vmatpush1.xpose.msra.mxu0 0.0
        %1535 = vmatprep.subr.mxu0 0.0
        %1536 = vmatpush1.xpose.msra.mxu0 0.0
        %1537 = vmatprep.subr.mxu0 0.0
        %1538 = vmatpush1.xpose.msra.mxu0 %v1519
        %1539 = vmatprep.subr.mxu0 0.0
        %1540 = vmatpush1.xpose.msra.mxu0 %v1517
        %1541 = vmatprep.subr.mxu0 0.0
        %1542 = vmatpush1.xpose.msra.mxu0 %v1515
        %1543 = vmatprep.subr.mxu0 0.0
        %1544 = vmatpush1.xpose.msra.mxu0 %v1513
        %1545 = vmatprep.subr.mxu0 0.0
        %1546 = vmatpush1.xpose.msra.mxu0 %v1511
        %1547 = vmatprep.subr.mxu0 0.0
        %1548 = vmatpush1.xpose.msra.mxu0 %v1509
        %1549 = vmatprep.subr.mxu0 0.0
        %1550 = vmatpush1.xpose.msra.mxu0 %v1507
        %1551 = vmatprep.subr.mxu0 0.0
        %1552 = vmatpush1.xpose.msra.mxu0 %v1505
        %1553 = vmatprep.subr.mxu0 0.0
        %1554 = vmatpush2.xpose.msra.mxu0 0.0
        %1555 = vmatprep.subr.mxu0 0.0
        %1556 = vmatpush2.xpose.msra.mxu0 0.0
        %1557 = vmatprep.subr.mxu0 0.0
        %1558 = vmatpush2.xpose.msra.mxu0 0.0
        %1559 = vmatprep.subr.mxu0 0.0
        %1560 = vmatpush2.xpose.msra.mxu0 0.0
        %1561 = vmatprep.subr.mxu0 0.0
        %1562 = vmatpush2.xpose.msra.mxu0 0.0
        %1563 = vmatprep.subr.mxu0 0.0
        %1564 = vmatpush2.xpose.msra.mxu0 0.0
        %1565 = vmatprep.subr.mxu0 0.0
        %1566 = vmatpush2.xpose.msra.mxu0 0.0
        %1567 = vmatprep.subr.mxu0 0.0
        %1568 = vmatpush2.xpose.msra.mxu0 0.0
        %1569 = vmatprep.subr.mxu0 0.0
        %1570 = vmatpush2.xpose.msra.mxu0 0.0
        %1571 = vmatprep.subr.mxu0 0.0
        %1572 = vmatpush2.xpose.msra.mxu0 0.0
        %1573 = vmatprep.subr.mxu0 0.0
        %1574 = vmatpush2.xpose.msra.mxu0 0.0
        %1575 = vmatprep.subr.mxu0 0.0
        %1576 = vmatpush2.xpose.msra.mxu0 0.0
        %1577 = vmatprep.subr.mxu0 0.0
        %1578 = vmatpush2.xpose.msra.mxu0 0.0
        %1579 = vmatprep.subr.mxu0 0.0
        %1580 = vmatpush2.xpose.msra.mxu0 0.0
        %1581 = vmatprep.subr.mxu0 0.0
        %1582 = vmatpush2.xpose.msra.mxu0 0.0
        %1583 = vmatprep.subr.mxu0 0.0
        %1584 = vmatpush2.xpose.msra.mxu0 0.0
        %1585 = vmatprep.mubr.f32.mxu0 0.0
        %1586 = vmatmul.mubr.f32.gmra.mxu0 %v1497
        %v1587 = vpop.f32.mrf.mxu0
        %v1588 = vadd.f32 0.0, %v1587
        %v1589 = vpop.f32.mrf.mxu0
        %1590 = vmatprep.mubr.f32.mxu0 0.0
        %1591 = vmatmul.mubr.f32.gmra.mxu0 %v1499
        %v1592 = vpop.f32.mrf.mxu0
        %v1593 = vadd.f32 0.0, %v1592
        %v1594 = vpop.f32.mrf.mxu0
        %1595 = vmatprep.mubr.f32.mxu0 0.0
        %1596 = vmatmul.mubr.f32.gmra.mxu0 %v1501
        %v1597 = vpop.f32.mrf.mxu0
        %v1598 = vadd.f32 0.0, %v1597
        %v1599 = vpop.f32.mrf.mxu0
        %1600 = vmatprep.mubr.f32.mxu0 0.0
        %1601 = vmatmul.mubr.f32.gmra.mxu0 %v1503
        %v1602 = vpop.f32.mrf.mxu0
        %v1603 = vadd.f32 0.0, %v1602
        %v1604 = vpop.f32.mrf.mxu0
        %1605 = vdwg.mxu0
        %v1606 = vsel %vm1496, %v1177, 0
        %v1608 = vsel %vm1496, %v1179, 0
        %v1610 = vsel %vm1496, %v1181, 0
        %v1612 = vsel %vm1496, %v1183, 0
        %v1614 = vsel %vm1496, %v1241, 0
        %v1616 = vsel %vm1496, %v1243, 0
        %v1618 = vsel %vm1496, %v1245, 0
        %v1620 = vsel %vm1496, %v1247, 0
        %v1622 = vsel %vm1496, %v1249, 0
        %v1624 = vsel %vm1496, %v1251, 0
        %v1626 = vsel %vm1496, %v1253, 0
        %v1628 = vsel %vm1496, %v1255, 0
        %1630 = vmatprep.subr.mxu0 0.0
        %1631 = vmatpush1.xpose.msra.mxu0 0.0
        %1632 = vmatprep.subr.mxu0 0.0
        %1633 = vmatpush1.xpose.msra.mxu0 0.0
        %1634 = vmatprep.subr.mxu0 0.0
        %1635 = vmatpush1.xpose.msra.mxu0 0.0
        %1636 = vmatprep.subr.mxu0 0.0
        %1637 = vmatpush1.xpose.msra.mxu0 0.0
        %1638 = vmatprep.subr.mxu0 0.0
        %1639 = vmatpush1.xpose.msra.mxu0 0.0
        %1640 = vmatprep.subr.mxu0 0.0
        %1641 = vmatpush1.xpose.msra.mxu0 0.0
        %1642 = vmatprep.subr.mxu0 0.0
        %1643 = vmatpush1.xpose.msra.mxu0 0.0
        %1644 = vmatprep.subr.mxu0 0.0
        %1645 = vmatpush1.xpose.msra.mxu0 0.0
        %1646 = vmatprep.subr.mxu0 0.0
        %1647 = vmatpush1.xpose.msra.mxu0 %v1628
        %1648 = vmatprep.subr.mxu0 0.0
        %1649 = vmatpush1.xpose.msra.mxu0 %v1626
        %1650 = vmatprep.subr.mxu0 0.0
        %1651 = vmatpush1.xpose.msra.mxu0 %v1624
        %1652 = vmatprep.subr.mxu0 0.0
        %1653 = vmatpush1.xpose.msra.mxu0 %v1622
        %1654 = vmatprep.subr.mxu0 0.0
        %1655 = vmatpush1.xpose.msra.mxu0 %v1620
        %1656 = vmatprep.subr.mxu0 0.0
        %1657 = vmatpush1.xpose.msra.mxu0 %v1618
        %1658 = vmatprep.subr.mxu0 0.0
        %1659 = vmatpush1.xpose.msra.mxu0 %v1616
        %1660 = vmatprep.subr.mxu0 0.0
        %1661 = vmatpush1.xpose.msra.mxu0 %v1614
        %1662 = vmatprep.subr.mxu0 0.0
        %1663 = vmatpush2.xpose.msra.mxu0 0.0
        %1664 = vmatprep.subr.mxu0 0.0
        %1665 = vmatpush2.xpose.msra.mxu0 0.0
        %1666 = vmatprep.subr.mxu0 0.0
        %1667 = vmatpush2.xpose.msra.mxu0 0.0
        %1668 = vmatprep.subr.mxu0 0.0
        %1669 = vmatpush2.xpose.msra.mxu0 0.0
        %1670 = vmatprep.subr.mxu0 0.0
        %1671 = vmatpush2.xpose.msra.mxu0 0.0
        %1672 = vmatprep.subr.mxu0 0.0
        %1673 = vmatpush2.xpose.msra.mxu0 0.0
        %1674 = vmatprep.subr.mxu0 0.0
        %1675 = vmatpush2.xpose.msra.mxu0 0.0
        %1676 = vmatprep.subr.mxu0 0.0
        %1677 = vmatpush2.xpose.msra.mxu0 0.0
        %1678 = vmatprep.subr.mxu0 0.0
        %1679 = vmatpush2.xpose.msra.mxu0 0.0
        %1680 = vmatprep.subr.mxu0 0.0
        %1681 = vmatpush2.xpose.msra.mxu0 0.0
        %1682 = vmatprep.subr.mxu0 0.0
        %1683 = vmatpush2.xpose.msra.mxu0 0.0
        %1684 = vmatprep.subr.mxu0 0.0
        %1685 = vmatpush2.xpose.msra.mxu0 0.0
        %1686 = vmatprep.subr.mxu0 0.0
        %1687 = vmatpush2.xpose.msra.mxu0 0.0
        %1688 = vmatprep.subr.mxu0 0.0
        %1689 = vmatpush2.xpose.msra.mxu0 0.0
        %1690 = vmatprep.subr.mxu0 0.0
        %1691 = vmatpush2.xpose.msra.mxu0 0.0
        %1692 = vmatprep.subr.mxu0 0.0
        %1693 = vmatpush2.xpose.msra.mxu0 0.0
        %1694 = vmatprep.mubr.f32.mxu0 0.0
        %1695 = vmatmul.mubr.f32.gmra.mxu0 %v1606
        %v1696 = vpop.f32.mrf.mxu0
        %v1697 = vadd.f32 0.0, %v1696
        %v1698 = vpop.f32.mrf.mxu0
        %1699 = vmatprep.mubr.f32.mxu0 0.0
        %1700 = vmatmul.mubr.f32.gmra.mxu0 %v1608
        %v1701 = vpop.f32.mrf.mxu0
        %v1702 = vadd.f32 0.0, %v1701
        %v1703 = vpop.f32.mrf.mxu0
        %1704 = vmatprep.mubr.f32.mxu0 0.0
        %1705 = vmatmul.mubr.f32.gmra.mxu0 %v1610
        %v1706 = vpop.f32.mrf.mxu0
        %v1707 = vadd.f32 0.0, %v1706
        %v1708 = vpop.f32.mrf.mxu0
        %1709 = vmatprep.mubr.f32.mxu0 0.0
        %1710 = vmatmul.mubr.f32.gmra.mxu0 %v1612
        %v1711 = vpop.f32.mrf.mxu0
        %v1712 = vadd.f32 0.0, %v1711
        %v1713 = vpop.f32.mrf.mxu0
        %1714 = vdwg.mxu0
        %v1715 = vsel %vm1496, %v1193, 0
        %v1717 = vsel %vm1496, %v1195, 0
        %v1719 = vsel %vm1496, %v1197, 0
        %v1721 = vsel %vm1496, %v1199, 0
        %v1723 = vsel %vm1496, %v1273, 0
        %v1725 = vsel %vm1496, %v1275, 0
        %v1727 = vsel %vm1496, %v1277, 0
        %v1729 = vsel %vm1496, %v1279, 0
        %v1731 = vsel %vm1496, %v1281, 0
        %v1733 = vsel %vm1496, %v1283, 0
        %v1735 = vsel %vm1496, %v1285, 0
        %v1737 = vsel %vm1496, %v1287, 0
        %1739 = vmatprep.subr.mxu0 0.0
        %1740 = vmatpush1.xpose.msra.mxu0 0.0
        %1741 = vmatprep.subr.mxu0 0.0
        %1742 = vmatpush1.xpose.msra.mxu0 0.0
        %1743 = vmatprep.subr.mxu0 0.0
        %1744 = vmatpush1.xpose.msra.mxu0 0.0
        %1745 = vmatprep.subr.mxu0 0.0
        %1746 = vmatpush1.xpose.msra.mxu0 0.0
        %1747 = vmatprep.subr.mxu0 0.0
        %1748 = vmatpush1.xpose.msra.mxu0 0.0
        %1749 = vmatprep.subr.mxu0 0.0
        %1750 = vmatpush1.xpose.msra.mxu0 0.0
        %1751 = vmatprep.subr.mxu0 0.0
        %1752 = vmatpush1.xpose.msra.mxu0 0.0
        %1753 = vmatprep.subr.mxu0 0.0
        %1754 = vmatpush1.xpose.msra.mxu0 0.0
        %1755 = vmatprep.subr.mxu0 0.0
        %1756 = vmatpush1.xpose.msra.mxu0 %v1737
        %1757 = vmatprep.subr.mxu0 0.0
        %1758 = vmatpush1.xpose.msra.mxu0 %v1735
        %1759 = vmatprep.subr.mxu0 0.0
        %1760 = vmatpush1.xpose.msra.mxu0 %v1733
        %1761 = vmatprep.subr.mxu0 0.0
        %1762 = vmatpush1.xpose.msra.mxu0 %v1731
        %1763 = vmatprep.subr.mxu0 0.0
        %1764 = vmatpush1.xpose.msra.mxu0 %v1729
        %1765 = vmatprep.subr.mxu0 0.0
        %1766 = vmatpush1.xpose.msra.mxu0 %v1727
        %1767 = vmatprep.subr.mxu0 0.0
        %1768 = vmatpush1.xpose.msra.mxu0 %v1725
        %1769 = vmatprep.subr.mxu0 0.0
        %1770 = vmatpush1.xpose.msra.mxu0 %v1723
        %1771 = vmatprep.subr.mxu0 0.0
        %1772 = vmatpush2.xpose.msra.mxu0 0.0
        %1773 = vmatprep.subr.mxu0 0.0
        %1774 = vmatpush2.xpose.msra.mxu0 0.0
        %1775 = vmatprep.subr.mxu0 0.0
        %1776 = vmatpush2.xpose.msra.mxu0 0.0
        %1777 = vmatprep.subr.mxu0 0.0
        %1778 = vmatpush2.xpose.msra.mxu0 0.0
        %1779 = vmatprep.subr.mxu0 0.0
        %1780 = vmatpush2.xpose.msra.mxu0 0.0
        %1781 = vmatprep.subr.mxu0 0.0
        %1782 = vmatpush2.xpose.msra.mxu0 0.0
        %1783 = vmatprep.subr.mxu0 0.0
        %1784 = vmatpush2.xpose.msra.mxu0 0.0
        %1785 = vmatprep.subr.mxu0 0.0
        %1786 = vmatpush2.xpose.msra.mxu0 0.0
        %1787 = vmatprep.subr.mxu0 0.0
        %1788 = vmatpush2.xpose.msra.mxu0 0.0
        %1789 = vmatprep.subr.mxu0 0.0
        %1790 = vmatpush2.xpose.msra.mxu0 0.0
        %1791 = vmatprep.subr.mxu0 0.0
        %1792 = vmatpush2.xpose.msra.mxu0 0.0
        %1793 = vmatprep.subr.mxu0 0.0
        %1794 = vmatpush2.xpose.msra.mxu0 0.0
        %1795 = vmatprep.subr.mxu0 0.0
        %1796 = vmatpush2.xpose.msra.mxu0 0.0
        %1797 = vmatprep.subr.mxu0 0.0
        %1798 = vmatpush2.xpose.msra.mxu0 0.0
        %1799 = vmatprep.subr.mxu0 0.0
        %1800 = vmatpush2.xpose.msra.mxu0 0.0
        %1801 = vmatprep.subr.mxu0 0.0
        %1802 = vmatpush2.xpose.msra.mxu0 0.0
        %1803 = vmatprep.mubr.f32.mxu0 0.0
        %1804 = vmatmul.mubr.f32.gmra.mxu0 %v1715
        %v1805 = vpop.f32.mrf.mxu0
        %v1806 = vadd.f32 0.0, %v1805
        %v1807 = vpop.f32.mrf.mxu0
        %1808 = vmatprep.mubr.f32.mxu0 0.0
        %1809 = vmatmul.mubr.f32.gmra.mxu0 %v1717
        %v1810 = vpop.f32.mrf.mxu0
        %v1811 = vadd.f32 0.0, %v1810
        %v1812 = vpop.f32.mrf.mxu0
        %1813 = vmatprep.mubr.f32.mxu0 0.0
        %1814 = vmatmul.mubr.f32.gmra.mxu0 %v1719
        %v1815 = vpop.f32.mrf.mxu0
        %v1816 = vadd.f32 0.0, %v1815
        %v1817 = vpop.f32.mrf.mxu0
        %1818 = vmatprep.mubr.f32.mxu0 0.0
        %1819 = vmatmul.mubr.f32.gmra.mxu0 %v1721
        %v1820 = vpop.f32.mrf.mxu0
        %v1821 = vadd.f32 0.0, %v1820
        %v1822 = vpop.f32.mrf.mxu0
        %1823 = vdwg.mxu0
        %v1824 = vsel %vm1496, %v1209, 0
        %v1826 = vsel %vm1496, %v1211, 0
        %v1828 = vsel %vm1496, %v1213, 0
        %v1830 = vsel %vm1496, %v1215, 0
        %v1832 = vsel %vm1496, %v1305, 0
        %v1834 = vsel %vm1496, %v1307, 0
        %v1836 = vsel %vm1496, %v1309, 0
        %v1838 = vsel %vm1496, %v1311, 0
        %v1840 = vsel %vm1496, %v1313, 0
        %v1842 = vsel %vm1496, %v1315, 0
        %v1844 = vsel %vm1496, %v1317, 0
        %v1846 = vsel %vm1496, %v1319, 0
        %1848 = vmatprep.subr.mxu0 0.0
        %1849 = vmatpush1.xpose.msra.mxu0 0.0
        %1850 = vmatprep.subr.mxu0 0.0
        %1851 = vmatpush1.xpose.msra.mxu0 0.0
        %1852 = vmatprep.subr.mxu0 0.0
        %1853 = vmatpush1.xpose.msra.mxu0 0.0
        %1854 = vmatprep.subr.mxu0 0.0
        %1855 = vmatpush1.xpose.msra.mxu0 0.0
        %1856 = vmatprep.subr.mxu0 0.0
        %1857 = vmatpush1.xpose.msra.mxu0 0.0
        %1858 = vmatprep.subr.mxu0 0.0
        %1859 = vmatpush1.xpose.msra.mxu0 0.0
        %1860 = vmatprep.subr.mxu0 0.0
        %1861 = vmatpush1.xpose.msra.mxu0 0.0
        %1862 = vmatprep.subr.mxu0 0.0
        %1863 = vmatpush1.xpose.msra.mxu0 0.0
        %1864 = vmatprep.subr.mxu0 0.0
        %1865 = vmatpush1.xpose.msra.mxu0 %v1846
        %1866 = vmatprep.subr.mxu0 0.0
        %1867 = vmatpush1.xpose.msra.mxu0 %v1844
        %1868 = vmatprep.subr.mxu0 0.0
        %1869 = vmatpush1.xpose.msra.mxu0 %v1842
        %1870 = vmatprep.subr.mxu0 0.0
        %1871 = vmatpush1.xpose.msra.mxu0 %v1840
        %1872 = vmatprep.subr.mxu0 0.0
        %1873 = vmatpush1.xpose.msra.mxu0 %v1838
        %1874 = vmatprep.subr.mxu0 0.0
        %1875 = vmatpush1.xpose.msra.mxu0 %v1836
        %1876 = vmatprep.subr.mxu0 0.0
        %1877 = vmatpush1.xpose.msra.mxu0 %v1834
        %1878 = vmatprep.subr.mxu0 0.0
        %1879 = vmatpush1.xpose.msra.mxu0 %v1832
        %1880 = vmatprep.subr.mxu0 0.0
        %1881 = vmatpush2.xpose.msra.mxu0 0.0
        %1882 = vmatprep.subr.mxu0 0.0
        %1883 = vmatpush2.xpose.msra.mxu0 0.0
        %1884 = vmatprep.subr.mxu0 0.0
        %1885 = vmatpush2.xpose.msra.mxu0 0.0
        %1886 = vmatprep.subr.mxu0 0.0
        %1887 = vmatpush2.xpose.msra.mxu0 0.0
        %1888 = vmatprep.subr.mxu0 0.0
        %1889 = vmatpush2.xpose.msra.mxu0 0.0
        %1890 = vmatprep.subr.mxu0 0.0
        %1891 = vmatpush2.xpose.msra.mxu0 0.0
        %1892 = vmatprep.subr.mxu0 0.0
        %1893 = vmatpush2.xpose.msra.mxu0 0.0
        %1894 = vmatprep.subr.mxu0 0.0
        %1895 = vmatpush2.xpose.msra.mxu0 0.0
        %1896 = vmatprep.subr.mxu0 0.0
        %1897 = vmatpush2.xpose.msra.mxu0 0.0
        %1898 = vmatprep.subr.mxu0 0.0
        %1899 = vmatpush2.xpose.msra.mxu0 0.0
        %1900 = vmatprep.subr.mxu0 0.0
        %1901 = vmatpush2.xpose.msra.mxu0 0.0
        %1902 = vmatprep.subr.mxu0 0.0
        %1903 = vmatpush2.xpose.msra.mxu0 0.0
        %1904 = vmatprep.subr.mxu0 0.0
        %1905 = vmatpush2.xpose.msra.mxu0 0.0
        %1906 = vmatprep.subr.mxu0 0.0
        %1907 = vmatpush2.xpose.msra.mxu0 0.0
        %1908 = vmatprep.subr.mxu0 0.0
        %1909 = vmatpush2.xpose.msra.mxu0 0.0
        %1910 = vmatprep.subr.mxu0 0.0
        %1911 = vmatpush2.xpose.msra.mxu0 0.0
        %1912 = vmatprep.mubr.f32.mxu0 0.0
        %1913 = vmatmul.mubr.f32.gmra.mxu0 %v1824
        %v1914 = vpop.f32.mrf.mxu0
        %v1915 = vadd.f32 0.0, %v1914
        %v1916 = vpop.f32.mrf.mxu0
        %1917 = vmatprep.mubr.f32.mxu0 0.0
        %1918 = vmatmul.mubr.f32.gmra.mxu0 %v1826
        %v1919 = vpop.f32.mrf.mxu0
        %v1920 = vadd.f32 0.0, %v1919
        %v1921 = vpop.f32.mrf.mxu0
        %1922 = vmatprep.mubr.f32.mxu0 0.0
        %1923 = vmatmul.mubr.f32.gmra.mxu0 %v1828
        %v1924 = vpop.f32.mrf.mxu0
        %v1925 = vadd.f32 0.0, %v1924
        %v1926 = vpop.f32.mrf.mxu0
        %1927 = vmatprep.mubr.f32.mxu0 0.0
        %1928 = vmatmul.mubr.f32.gmra.mxu0 %v1830
        %v1929 = vpop.f32.mrf.mxu0
        %v1930 = vadd.f32 0.0, %v1929
        %v1931 = vpop.f32.mrf.mxu0
        %1932 = vdwg.mxu0
        %v1933 = vsel %vm1496, %v724, 0
        %v1935 = vsel %vm1496, %v729, 0
        %v1937 = vsel %vm1496, %v734, 0
        %v1939 = vsel %vm1496, %v739, 0
        %v1941 = vsel %vm1496, %v917, 0
        %v1943 = vsel %vm1496, %v922, 0
        %v1945 = vsel %vm1496, %v927, 0
        %v1947 = vsel %vm1496, %v932, 0
        %v1949 = vsel %vm1496, %v937, 0
        %v1951 = vsel %vm1496, %v942, 0
        %v1953 = vsel %vm1496, %v947, 0
        %v1955 = vsel %vm1496, %v952, 0
        %1957 = vmatprep.subr.mxu0 0.0
        %1958 = vmatpush1.xpose.msra.mxu0 0.0
        %1959 = vmatprep.subr.mxu0 0.0
        %1960 = vmatpush1.xpose.msra.mxu0 0.0
        %1961 = vmatprep.subr.mxu0 0.0
        %1962 = vmatpush1.xpose.msra.mxu0 0.0
        %1963 = vmatprep.subr.mxu0 0.0
        %1964 = vmatpush1.xpose.msra.mxu0 0.0
        %1965 = vmatprep.subr.mxu0 0.0
        %1966 = vmatpush1.xpose.msra.mxu0 0.0
        %1967 = vmatprep.subr.mxu0 0.0
        %1968 = vmatpush1.xpose.msra.mxu0 0.0
        %1969 = vmatprep.subr.mxu0 0.0
        %1970 = vmatpush1.xpose.msra.mxu0 0.0
        %1971 = vmatprep.subr.mxu0 0.0
        %1972 = vmatpush1.xpose.msra.mxu0 0.0
        %1973 = vmatprep.subr.mxu0 0.0
        %1974 = vmatpush1.xpose.msra.mxu0 %v1955
        %1975 = vmatprep.subr.mxu0 0.0
        %1976 = vmatpush1.xpose.msra.mxu0 %v1953
        %1977 = vmatprep.subr.mxu0 0.0
        %1978 = vmatpush1.xpose.msra.mxu0 %v1951
        %1979 = vmatprep.subr.mxu0 0.0
        %1980 = vmatpush1.xpose.msra.mxu0 %v1949
        %1981 = vmatprep.subr.mxu0 0.0
        %1982 = vmatpush1.xpose.msra.mxu0 %v1947
        %1983 = vmatprep.subr.mxu0 0.0
        %1984 = vmatpush1.xpose.msra.mxu0 %v1945
        %1985 = vmatprep.subr.mxu0 0.0
        %1986 = vmatpush1.xpose.msra.mxu0 %v1943
        %1987 = vmatprep.subr.mxu0 0.0
        %1988 = vmatpush1.xpose.msra.mxu0 %v1941
        %1989 = vmatprep.subr.mxu0 0.0
        %1990 = vmatpush2.xpose.msra.mxu0 0.0
        %1991 = vmatprep.subr.mxu0 0.0
        %1992 = vmatpush2.xpose.msra.mxu0 0.0
        %1993 = vmatprep.subr.mxu0 0.0
        %1994 = vmatpush2.xpose.msra.mxu0 0.0
        %1995 = vmatprep.subr.mxu0 0.0
        %1996 = vmatpush2.xpose.msra.mxu0 0.0
        %1997 = vmatprep.subr.mxu0 0.0
        %1998 = vmatpush2.xpose.msra.mxu0 0.0
        %1999 = vmatprep.subr.mxu0 0.0
        %2000 = vmatpush2.xpose.msra.mxu0 0.0
        %2001 = vmatprep.subr.mxu0 0.0
        %2002 = vmatpush2.xpose.msra.mxu0 0.0
        %2003 = vmatprep.subr.mxu0 0.0
        %2004 = vmatpush2.xpose.msra.mxu0 0.0
        %2005 = vmatprep.subr.mxu0 0.0
        %2006 = vmatpush2.xpose.msra.mxu0 0.0
        %2007 = vmatprep.subr.mxu0 0.0
        %2008 = vmatpush2.xpose.msra.mxu0 0.0
        %2009 = vmatprep.subr.mxu0 0.0
        %2010 = vmatpush2.xpose.msra.mxu0 0.0
        %2011 = vmatprep.subr.mxu0 0.0
        %2012 = vmatpush2.xpose.msra.mxu0 0.0
        %2013 = vmatprep.subr.mxu0 0.0
        %2014 = vmatpush2.xpose.msra.mxu0 0.0
        %2015 = vmatprep.subr.mxu0 0.0
        %2016 = vmatpush2.xpose.msra.mxu0 0.0
        %2017 = vmatprep.subr.mxu0 0.0
        %2018 = vmatpush2.xpose.msra.mxu0 0.0
        %2019 = vmatprep.subr.mxu0 0.0
        %2020 = vmatpush2.xpose.msra.mxu0 0.0
        %2021 = vmatprep.mubr.f32.mxu0 0.0
        %2022 = vmatmul.mubr.f32.gmra.mxu0 %v1933
        %v2023 = vpop.f32.mrf.mxu0
        %v2024 = vadd.f32 0.0, %v2023
        %v2025 = vpop.f32.mrf.mxu0
        %2026 = vmatprep.mubr.f32.mxu0 0.0
        %2027 = vmatmul.mubr.f32.gmra.mxu0 %v1935
        %v2028 = vpop.f32.mrf.mxu0
        %v2029 = vadd.f32 0.0, %v2028
        %v2030 = vpop.f32.mrf.mxu0
        %2031 = vmatprep.mubr.f32.mxu0 0.0
        %2032 = vmatmul.mubr.f32.gmra.mxu0 %v1937
        %v2033 = vpop.f32.mrf.mxu0
        %v2034 = vadd.f32 0.0, %v2033
        %v2035 = vpop.f32.mrf.mxu0
        %2036 = vmatprep.mubr.f32.mxu0 0.0
        %2037 = vmatmul.mubr.f32.gmra.mxu0 %v1939
        %v2038 = vpop.f32.mrf.mxu0
        %v2039 = vadd.f32 0.0, %v2038
        %v2040 = vpop.f32.mrf.mxu0
        %2041 = vdwg.mxu0
        %v2042 = vsel %vm1496, %v1185, 0
        %v2044 = vsel %vm1496, %v1187, 0
        %v2046 = vsel %vm1496, %v1189, 0
        %v2048 = vsel %vm1496, %v1191, 0
        %v2050 = vsel %vm1496, %v1257, 0
        %v2052 = vsel %vm1496, %v1259, 0
        %v2054 = vsel %vm1496, %v1261, 0
        %v2056 = vsel %vm1496, %v1263, 0
        %v2058 = vsel %vm1496, %v1265, 0
        %v2060 = vsel %vm1496, %v1267, 0
        %v2062 = vsel %vm1496, %v1269, 0
        %v2064 = vsel %vm1496, %v1271, 0
        %2066 = vmatprep.subr.mxu0 0.0
        %2067 = vmatpush1.xpose.msra.mxu0 0.0
        %2068 = vmatprep.subr.mxu0 0.0
        %2069 = vmatpush1.xpose.msra.mxu0 0.0
        %2070 = vmatprep.subr.mxu0 0.0
        %2071 = vmatpush1.xpose.msra.mxu0 0.0
        %2072 = vmatprep.subr.mxu0 0.0
        %2073 = vmatpush1.xpose.msra.mxu0 0.0
        %2074 = vmatprep.subr.mxu0 0.0
        %2075 = vmatpush1.xpose.msra.mxu0 0.0
        %2076 = vmatprep.subr.mxu0 0.0
        %2077 = vmatpush1.xpose.msra.mxu0 0.0
        %2078 = vmatprep.subr.mxu0 0.0
        %2079 = vmatpush1.xpose.msra.mxu0 0.0
        %2080 = vmatprep.subr.mxu0 0.0
        %2081 = vmatpush1.xpose.msra.mxu0 0.0
        %2082 = vmatprep.subr.mxu0 0.0
        %2083 = vmatpush1.xpose.msra.mxu0 %v2064
        %2084 = vmatprep.subr.mxu0 0.0
        %2085 = vmatpush1.xpose.msra.mxu0 %v2062
        %2086 = vmatprep.subr.mxu0 0.0
        %2087 = vmatpush1.xpose.msra.mxu0 %v2060
        %2088 = vmatprep.subr.mxu0 0.0
        %2089 = vmatpush1.xpose.msra.mxu0 %v2058
        %2090 = vmatprep.subr.mxu0 0.0
        %2091 = vmatpush1.xpose.msra.mxu0 %v2056
        %2092 = vmatprep.subr.mxu0 0.0
        %2093 = vmatpush1.xpose.msra.mxu0 %v2054
        %2094 = vmatprep.subr.mxu0 0.0
        %2095 = vmatpush1.xpose.msra.mxu0 %v2052
        %2096 = vmatprep.subr.mxu0 0.0
        %2097 = vmatpush1.xpose.msra.mxu0 %v2050
        %2098 = vmatprep.subr.mxu0 0.0
        %2099 = vmatpush2.xpose.msra.mxu0 0.0
        %2100 = vmatprep.subr.mxu0 0.0
        %2101 = vmatpush2.xpose.msra.mxu0 0.0
        %2102 = vmatprep.subr.mxu0 0.0
        %2103 = vmatpush2.xpose.msra.mxu0 0.0
        %2104 = vmatprep.subr.mxu0 0.0
        %2105 = vmatpush2.xpose.msra.mxu0 0.0
        %2106 = vmatprep.subr.mxu0 0.0
        %2107 = vmatpush2.xpose.msra.mxu0 0.0
        %2108 = vmatprep.subr.mxu0 0.0
        %2109 = vmatpush2.xpose.msra.mxu0 0.0
        %2110 = vmatprep.subr.mxu0 0.0
        %2111 = vmatpush2.xpose.msra.mxu0 0.0
        %2112 = vmatprep.subr.mxu0 0.0
        %2113 = vmatpush2.xpose.msra.mxu0 0.0
        %2114 = vmatprep.subr.mxu0 0.0
        %2115 = vmatpush2.xpose.msra.mxu0 0.0
        %2116 = vmatprep.subr.mxu0 0.0
        %2117 = vmatpush2.xpose.msra.mxu0 0.0
        %2118 = vmatprep.subr.mxu0 0.0
        %2119 = vmatpush2.xpose.msra.mxu0 0.0
        %2120 = vmatprep.subr.mxu0 0.0
        %2121 = vmatpush2.xpose.msra.mxu0 0.0
        %2122 = vmatprep.subr.mxu0 0.0
        %2123 = vmatpush2.xpose.msra.mxu0 0.0
        %2124 = vmatprep.subr.mxu0 0.0
        %2125 = vmatpush2.xpose.msra.mxu0 0.0
        %2126 = vmatprep.subr.mxu0 0.0
        %2127 = vmatpush2.xpose.msra.mxu0 0.0
        %2128 = vmatprep.subr.mxu0 0.0
        %2129 = vmatpush2.xpose.msra.mxu0 0.0
        %2130 = vmatprep.mubr.f32.mxu0 0.0
        %2131 = vmatmul.mubr.f32.gmra.mxu0 %v2042
        %v2132 = vpop.f32.mrf.mxu0
        %v2133 = vadd.f32 0.0, %v2132
        %v2134 = vpop.f32.mrf.mxu0
        %2135 = vmatprep.mubr.f32.mxu0 0.0
        %2136 = vmatmul.mubr.f32.gmra.mxu0 %v2044
        %v2137 = vpop.f32.mrf.mxu0
        %v2138 = vadd.f32 0.0, %v2137
        %v2139 = vpop.f32.mrf.mxu0
        %2140 = vmatprep.mubr.f32.mxu0 0.0
        %2141 = vmatmul.mubr.f32.gmra.mxu0 %v2046
        %v2142 = vpop.f32.mrf.mxu0
        %v2143 = vadd.f32 0.0, %v2142
        %v2144 = vpop.f32.mrf.mxu0
        %2145 = vmatprep.mubr.f32.mxu0 0.0
        %2146 = vmatmul.mubr.f32.gmra.mxu0 %v2048
        %v2147 = vpop.f32.mrf.mxu0
        %v2148 = vadd.f32 0.0, %v2147
        %v2149 = vpop.f32.mrf.mxu0
        %2150 = vdwg.mxu0
        %v2151 = vsel %vm1496, %v1201, 0
        %v2153 = vsel %vm1496, %v1203, 0
        %v2155 = vsel %vm1496, %v1205, 0
        %v2157 = vsel %vm1496, %v1207, 0
        %v2159 = vsel %vm1496, %v1289, 0
        %v2161 = vsel %vm1496, %v1291, 0
        %v2163 = vsel %vm1496, %v1293, 0
        %v2165 = vsel %vm1496, %v1295, 0
        %v2167 = vsel %vm1496, %v1297, 0
        %v2169 = vsel %vm1496, %v1299, 0
        %v2171 = vsel %vm1496, %v1301, 0
        %v2173 = vsel %vm1496, %v1303, 0
        %2175 = vmatprep.subr.mxu0 0.0
        %2176 = vmatpush1.xpose.msra.mxu0 0.0
        %2177 = vmatprep.subr.mxu0 0.0
        %2178 = vmatpush1.xpose.msra.mxu0 0.0
        %2179 = vmatprep.subr.mxu0 0.0
        %2180 = vmatpush1.xpose.msra.mxu0 0.0
        %2181 = vmatprep.subr.mxu0 0.0
        %2182 = vmatpush1.xpose.msra.mxu0 0.0
        %2183 = vmatprep.subr.mxu0 0.0
        %2184 = vmatpush1.xpose.msra.mxu0 0.0
        %2185 = vmatprep.subr.mxu0 0.0
        %2186 = vmatpush1.xpose.msra.mxu0 0.0
        %2187 = vmatprep.subr.mxu0 0.0
        %2188 = vmatpush1.xpose.msra.mxu0 0.0
        %2189 = vmatprep.subr.mxu0 0.0
        %2190 = vmatpush1.xpose.msra.mxu0 0.0
        %2191 = vmatprep.subr.mxu0 0.0
        %2192 = vmatpush1.xpose.msra.mxu0 %v2173
        %2193 = vmatprep.subr.mxu0 0.0
        %2194 = vmatpush1.xpose.msra.mxu0 %v2171
        %2195 = vmatprep.subr.mxu0 0.0
        %2196 = vmatpush1.xpose.msra.mxu0 %v2169
        %2197 = vmatprep.subr.mxu0 0.0
        %2198 = vmatpush1.xpose.msra.mxu0 %v2167
        %2199 = vmatprep.subr.mxu0 0.0
        %2200 = vmatpush1.xpose.msra.mxu0 %v2165
        %2201 = vmatprep.subr.mxu0 0.0
        %2202 = vmatpush1.xpose.msra.mxu0 %v2163
        %2203 = vmatprep.subr.mxu0 0.0
        %2204 = vmatpush1.xpose.msra.mxu0 %v2161
        %2205 = vmatprep.subr.mxu0 0.0
        %2206 = vmatpush1.xpose.msra.mxu0 %v2159
        %2207 = vmatprep.subr.mxu0 0.0
        %2208 = vmatpush2.xpose.msra.mxu0 0.0
        %2209 = vmatprep.subr.mxu0 0.0
        %2210 = vmatpush2.xpose.msra.mxu0 0.0
        %2211 = vmatprep.subr.mxu0 0.0
        %2212 = vmatpush2.xpose.msra.mxu0 0.0
        %2213 = vmatprep.subr.mxu0 0.0
        %2214 = vmatpush2.xpose.msra.mxu0 0.0
        %2215 = vmatprep.subr.mxu0 0.0
        %2216 = vmatpush2.xpose.msra.mxu0 0.0
        %2217 = vmatprep.subr.mxu0 0.0
        %2218 = vmatpush2.xpose.msra.mxu0 0.0
        %2219 = vmatprep.subr.mxu0 0.0
        %2220 = vmatpush2.xpose.msra.mxu0 0.0
        %2221 = vmatprep.subr.mxu0 0.0
        %2222 = vmatpush2.xpose.msra.mxu0 0.0
        %2223 = vmatprep.subr.mxu0 0.0
        %2224 = vmatpush2.xpose.msra.mxu0 0.0
        %2225 = vmatprep.subr.mxu0 0.0
        %2226 = vmatpush2.xpose.msra.mxu0 0.0
        %2227 = vmatprep.subr.mxu0 0.0
        %2228 = vmatpush2.xpose.msra.mxu0 0.0
        %2229 = vmatprep.subr.mxu0 0.0
        %2230 = vmatpush2.xpose.msra.mxu0 0.0
        %2231 = vmatprep.subr.mxu0 0.0
        %2232 = vmatpush2.xpose.msra.mxu0 0.0
        %2233 = vmatprep.subr.mxu0 0.0
        %2234 = vmatpush2.xpose.msra.mxu0 0.0
        %2235 = vmatprep.subr.mxu0 0.0
        %2236 = vmatpush2.xpose.msra.mxu0 0.0
        %2237 = vmatprep.subr.mxu0 0.0
        %2238 = vmatpush2.xpose.msra.mxu0 0.0
        %2239 = vmatprep.mubr.f32.mxu0 0.0
        %2240 = vmatmul.mubr.f32.gmra.mxu0 %v2151
        %v2241 = vpop.f32.mrf.mxu0
        %v2242 = vadd.f32 0.0, %v2241
        %v2243 = vpop.f32.mrf.mxu0
        %2244 = vmatprep.mubr.f32.mxu0 0.0
        %2245 = vmatmul.mubr.f32.gmra.mxu0 %v2153
        %v2246 = vpop.f32.mrf.mxu0
        %v2247 = vadd.f32 0.0, %v2246
        %v2248 = vpop.f32.mrf.mxu0
        %2249 = vmatprep.mubr.f32.mxu0 0.0
        %2250 = vmatmul.mubr.f32.gmra.mxu0 %v2155
        %v2251 = vpop.f32.mrf.mxu0
        %v2252 = vadd.f32 0.0, %v2251
        %v2253 = vpop.f32.mrf.mxu0
        %2254 = vmatprep.mubr.f32.mxu0 0.0
        %2255 = vmatmul.mubr.f32.gmra.mxu0 %v2157
        %v2256 = vpop.f32.mrf.mxu0
        %v2257 = vadd.f32 0.0, %v2256
        %v2258 = vpop.f32.mrf.mxu0
        %2259 = vdwg.mxu0
        %v2260 = vsel %vm1496, %v1217, 0
        %v2262 = vsel %vm1496, %v1219, 0
        %v2264 = vsel %vm1496, %v1221, 0
        %v2266 = vsel %vm1496, %v1223, 0
        %v2268 = vsel %vm1496, %v1321, 0
        %v2270 = vsel %vm1496, %v1323, 0
        %v2272 = vsel %vm1496, %v1325, 0
        %v2274 = vsel %vm1496, %v1327, 0
        %v2276 = vsel %vm1496, %v1329, 0
        %v2278 = vsel %vm1496, %v1331, 0
        %v2280 = vsel %vm1496, %v1333, 0
        %v2282 = vsel %vm1496, %v1335, 0
        %2284 = vmatprep.subr.mxu0 0.0
        %2285 = vmatpush1.xpose.msra.mxu0 0.0
        %2286 = vmatprep.subr.mxu0 0.0
        %2287 = vmatpush1.xpose.msra.mxu0 0.0
        %2288 = vmatprep.subr.mxu0 0.0
        %2289 = vmatpush1.xpose.msra.mxu0 0.0
        %2290 = vmatprep.subr.mxu0 0.0
        %2291 = vmatpush1.xpose.msra.mxu0 0.0
        %2292 = vmatprep.subr.mxu0 0.0
        %2293 = vmatpush1.xpose.msra.mxu0 0.0
        %2294 = vmatprep.subr.mxu0 0.0
        %2295 = vmatpush1.xpose.msra.mxu0 0.0
        %2296 = vmatprep.subr.mxu0 0.0
        %2297 = vmatpush1.xpose.msra.mxu0 0.0
        %2298 = vmatprep.subr.mxu0 0.0
        %2299 = vmatpush1.xpose.msra.mxu0 0.0
        %2300 = vmatprep.subr.mxu0 0.0
        %2301 = vmatpush1.xpose.msra.mxu0 %v2282
        %2302 = vmatprep.subr.mxu0 0.0
        %2303 = vmatpush1.xpose.msra.mxu0 %v2280
        %2304 = vmatprep.subr.mxu0 0.0
        %2305 = vmatpush1.xpose.msra.mxu0 %v2278
        %2306 = vmatprep.subr.mxu0 0.0
        %2307 = vmatpush1.xpose.msra.mxu0 %v2276
        %2308 = vmatprep.subr.mxu0 0.0
        %2309 = vmatpush1.xpose.msra.mxu0 %v2274
        %2310 = vmatprep.subr.mxu0 0.0
        %2311 = vmatpush1.xpose.msra.mxu0 %v2272
        %2312 = vmatprep.subr.mxu0 0.0
        %2313 = vmatpush1.xpose.msra.mxu0 %v2270
        %2314 = vmatprep.subr.mxu0 0.0
        %2315 = vmatpush1.xpose.msra.mxu0 %v2268
        %2316 = vmatprep.subr.mxu0 0.0
        %2317 = vmatpush2.xpose.msra.mxu0 0.0
        %2318 = vmatprep.subr.mxu0 0.0
        %2319 = vmatpush2.xpose.msra.mxu0 0.0
        %2320 = vmatprep.subr.mxu0 0.0
        %2321 = vmatpush2.xpose.msra.mxu0 0.0
        %2322 = vmatprep.subr.mxu0 0.0
        %2323 = vmatpush2.xpose.msra.mxu0 0.0
        %2324 = vmatprep.subr.mxu0 0.0
        %2325 = vmatpush2.xpose.msra.mxu0 0.0
        %2326 = vmatprep.subr.mxu0 0.0
        %2327 = vmatpush2.xpose.msra.mxu0 0.0
        %2328 = vmatprep.subr.mxu0 0.0
        %2329 = vmatpush2.xpose.msra.mxu0 0.0
        %2330 = vmatprep.subr.mxu0 0.0
        %2331 = vmatpush2.xpose.msra.mxu0 0.0
        %2332 = vmatprep.subr.mxu0 0.0
        %2333 = vmatpush2.xpose.msra.mxu0 0.0
        %2334 = vmatprep.subr.mxu0 0.0
        %2335 = vmatpush2.xpose.msra.mxu0 0.0
        %2336 = vmatprep.subr.mxu0 0.0
        %2337 = vmatpush2.xpose.msra.mxu0 0.0
        %2338 = vmatprep.subr.mxu0 0.0
        %2339 = vmatpush2.xpose.msra.mxu0 0.0
        %2340 = vmatprep.subr.mxu0 0.0
        %2341 = vmatpush2.xpose.msra.mxu0 0.0
        %2342 = vmatprep.subr.mxu0 0.0
        %2343 = vmatpush2.xpose.msra.mxu0 0.0
        %2344 = vmatprep.subr.mxu0 0.0
        %2345 = vmatpush2.xpose.msra.mxu0 0.0
        %2346 = vmatprep.subr.mxu0 0.0
        %2347 = vmatpush2.xpose.msra.mxu0 0.0
        %2348 = vmatprep.mubr.f32.mxu0 0.0
        %2349 = vmatmul.mubr.f32.gmra.mxu0 %v2260
        %v2350 = vpop.f32.mrf.mxu0
        %v2351 = vadd.f32 0.0, %v2350
        %v2352 = vpop.f32.mrf.mxu0
        %2353 = vmatprep.mubr.f32.mxu0 0.0
        %2354 = vmatmul.mubr.f32.gmra.mxu0 %v2262
        %v2355 = vpop.f32.mrf.mxu0
        %v2356 = vadd.f32 0.0, %v2355
        %v2357 = vpop.f32.mrf.mxu0
        %2358 = vmatprep.mubr.f32.mxu0 0.0
        %2359 = vmatmul.mubr.f32.gmra.mxu0 %v2264
        %v2360 = vpop.f32.mrf.mxu0
        %v2361 = vadd.f32 0.0, %v2360
        %v2362 = vpop.f32.mrf.mxu0
        %2363 = vmatprep.mubr.f32.mxu0 0.0
        %2364 = vmatmul.mubr.f32.gmra.mxu0 %v2266
        %v2365 = vpop.f32.mrf.mxu0
        %v2366 = vadd.f32 0.0, %v2365
        %v2367 = vpop.f32.mrf.mxu0
        %2368 = vdwg.mxu0
        %v2369 = vld [vmem:[%s520] sm:$0xff]
        %v2370 = vld [vmem:[%s520 + $0x8] sm:$0xff]
        %vm2371 = vnez %v2369
        %vm2372 = vnez %v2370
        %v2373 = vsel %vm2371, 16843009, 0
        %v2374 = vsel %vm2372, 16843009, 0
        %v2375 = vunpack.c.0.s8 %v2373
        %v2376 = vunpack.c.1.s8 %v2373
        %v2377 = vunpack.c.2.s8 %v2373
        %v2378 = vunpack.c.3.s8 %v2373
        %v2379 = vunpack.c.0.s8 %v2374
        %v2380 = vunpack.c.1.s8 %v2374
        %v2381 = vunpack.c.2.s8 %v2374
        %v2382 = vunpack.c.3.s8 %v2374
        %v2383 = vpack.c.b16 %v2375, %v2375
        %v2384 = vpack.c.b8 %v2383, %v2383
        %v2385 = vpack.c.b16 %v2376, %v2376
        %v2386 = vpack.c.b8 %v2385, %v2385
        %v2387 = vpack.c.b16 %v2377, %v2377
        %v2388 = vpack.c.b8 %v2387, %v2387
        %v2389 = vpack.c.b16 %v2378, %v2378
        %v2390 = vpack.c.b8 %v2389, %v2389
        %v2391 = vpack.c.b16 %v2379, %v2379
        %v2392 = vpack.c.b8 %v2391, %v2391
        %v2393 = vpack.c.b16 %v2380, %v2380
        %v2394 = vpack.c.b8 %v2393, %v2393
        %v2395 = vpack.c.b16 %v2381, %v2381
        %v2396 = vpack.c.b8 %v2395, %v2395
        %v2397 = vpack.c.b16 %v2382, %v2382
        %v2398 = vpack.c.b8 %v2397, %v2397
        %vm2399 = vnez %v2384
        %vm2400 = vnez %v2386
        %vm2401 = vnez %v2388
        %vm2402 = vnez %v2390
        %vm2403 = vnez %v2392
        %vm2404 = vnez %v2394
        %vm2405 = vnez %v2396
        %vm2406 = vnez %v2398
        %v2407 = vsel %vm2399, 16843009, 0
        %v2408 = vsel %vm2400, 16843009, 0
        %v2409 = vsel %vm2401, 16843009, 0
        %v2410 = vsel %vm2402, 16843009, 0
        %v2411 = vsel %vm2403, 16843009, 0
        %v2412 = vsel %vm2404, 16843009, 0
        %v2413 = vsel %vm2405, 16843009, 0
        %v2414 = vsel %vm2406, 16843009, 0
        %v2415 = vunpack.c.0.s8 %v2407
        %v2416 = vunpack.c.0.s8 %v2408
        %v2417 = vunpack.c.0.s8 %v2409
        %v2418 = vunpack.c.0.s8 %v2410
        %v2419 = vunpack.c.0.s8 %v2411
        %v2420 = vunpack.c.0.s8 %v2412
        %v2421 = vunpack.c.0.s8 %v2413
        %v2422 = vunpack.c.0.s8 %v2414
        %vm2423 = vcmp.ne.s32.totalorder %v2415, 0
        %vm2424 = vcmp.ne.s32.totalorder %v2416, 0
        %vm2425 = vcmp.ne.s32.totalorder %v2417, 0
        %vm2426 = vcmp.ne.s32.totalorder %v2418, 0
        %vm2427 = vcmp.ne.s32.totalorder %v2419, 0
        %vm2428 = vcmp.ne.s32.totalorder %v2420, 0
        %vm2429 = vcmp.ne.s32.totalorder %v2421, 0
        %vm2430 = vcmp.ne.s32.totalorder %v2422, 0
        %v2431 = vsel %vm2423, 1, 0
        %v2432 = vsel %vm2424, 1, 0
        %v2433 = vsel %vm2425, 1, 0
        %v2434 = vsel %vm2426, 1, 0
        %v2435 = vsel %vm2427, 1, 0
        %v2436 = vsel %vm2428, 1, 0
        %v2437 = vsel %vm2429, 1, 0
        %v2438 = vsel %vm2430, 1, 0
        %vm2439 = vcmp.eq.s32.totalorder %v2431, 1
        %vm2440 = vcmp.eq.s32.totalorder %v2432, 1
        %vm2441 = vcmp.eq.s32.totalorder %v2433, 1
        %vm2442 = vcmp.eq.s32.totalorder %v2434, 1
        %vm2443 = vcmp.eq.s32.totalorder %v2435, 1
        %vm2444 = vcmp.eq.s32.totalorder %v2436, 1
        %vm2445 = vcmp.eq.s32.totalorder %v2437, 1
        %vm2446 = vcmp.eq.s32.totalorder %v2438, 1
        %v2447 = vsel %vm2439, -1e+09, %v1588
        %v2448 = vsel %vm2440, -1e+09, %v1593
        %v2449 = vsel %vm2441, -1e+09, %v1598
        %v2450 = vsel %vm2442, -1e+09, %v1603
        %v2451 = vsel %vm2439, -1e+09, %v1697
        %v2452 = vsel %vm2440, -1e+09, %v1702
        %v2453 = vsel %vm2441, -1e+09, %v1707
        %v2454 = vsel %vm2442, -1e+09, %v1712
        %v2455 = vsel %vm2439, -1e+09, %v1806
        %v2456 = vsel %vm2440, -1e+09, %v1811
        %v2457 = vsel %vm2441, -1e+09, %v1816
        %v2458 = vsel %vm2442, -1e+09, %v1821
        %v2459 = vsel %vm2439, -1e+09, %v1915
        %v2460 = vsel %vm2440, -1e+09, %v1920
        %v2461 = vsel %vm2441, -1e+09, %v1925
        %v2462 = vsel %vm2442, -1e+09, %v1930
        %v2463 = vsel %vm2443, -1e+09, %v2024
        %v2464 = vsel %vm2444, -1e+09, %v2029
        %v2465 = vsel %vm2445, -1e+09, %v2034
        %v2466 = vsel %vm2446, -1e+09, %v2039
        %v2467 = vsel %vm2443, -1e+09, %v2133
        %v2468 = vsel %vm2444, -1e+09, %v2138
        %v2469 = vsel %vm2445, -1e+09, %v2143
        %v2470 = vsel %vm2446, -1e+09, %v2148
        %v2471 = vsel %vm2443, -1e+09, %v2242
        %v2472 = vsel %vm2444, -1e+09, %v2247
        %v2473 = vsel %vm2445, -1e+09, %v2252
        %v2474 = vsel %vm2446, -1e+09, %v2257
        %v2475 = vsel %vm2443, -1e+09, %v2351
        %v2476 = vsel %vm2444, -1e+09, %v2356
        %v2477 = vsel %vm2445, -1e+09, %v2361
        %v2478 = vsel %vm2446, -1e+09, %v2366
        %vm2479 = vcmask 523264
        %v2480 = vsel %vm2479, %v2447, -inf
        %2481 = vmax.xlane.f32.xlu0 %v2480
        %v2482 = vpop.xlane.xlu0 %2481
        %v2483 = vsel %vm2479, %v2448, -inf
        %2484 = vmax.xlane.f32.xlu0 %v2483
        %v2485 = vpop.xlane.xlu0 %2484
        %v2486 = vsel %vm2479, %v2449, -inf
        %2487 = vmax.xlane.f32.xlu0 %v2486
        %v2488 = vpop.xlane.xlu0 %2487
        %v2489 = vsel %vm2479, %v2450, -inf
        %2490 = vmax.xlane.f32.xlu0 %v2489
        %v2491 = vpop.xlane.xlu0 %2490
        %v2492 = vsel %vm2479, %v2451, -inf
        %2493 = vmax.xlane.f32.xlu0 %v2492
        %v2494 = vpop.xlane.xlu0 %2493
        %v2495 = vsel %vm2479, %v2452, -inf
        %2496 = vmax.xlane.f32.xlu0 %v2495
        %v2497 = vpop.xlane.xlu0 %2496
        %v2498 = vsel %vm2479, %v2453, -inf
        %2499 = vmax.xlane.f32.xlu0 %v2498
        %v2500 = vpop.xlane.xlu0 %2499
        %v2501 = vsel %vm2479, %v2454, -inf
        %2502 = vmax.xlane.f32.xlu0 %v2501
        %v2503 = vpop.xlane.xlu0 %2502
        %v2504 = vsel %vm2479, %v2455, -inf
        %2505 = vmax.xlane.f32.xlu0 %v2504
        %v2506 = vpop.xlane.xlu0 %2505
        %v2507 = vsel %vm2479, %v2456, -inf
        %2508 = vmax.xlane.f32.xlu0 %v2507
        %v2509 = vpop.xlane.xlu0 %2508
        %v2510 = vsel %vm2479, %v2457, -inf
        %2511 = vmax.xlane.f32.xlu0 %v2510
        %v2512 = vpop.xlane.xlu0 %2511
        %v2513 = vsel %vm2479, %v2458, -inf
        %2514 = vmax.xlane.f32.xlu0 %v2513
        %v2515 = vpop.xlane.xlu0 %2514
        %v2516 = vsel %vm2479, %v2459, -inf
        %2517 = vmax.xlane.f32.xlu0 %v2516
        %v2518 = vpop.xlane.xlu0 %2517
        %v2519 = vsel %vm2479, %v2460, -inf
        %2520 = vmax.xlane.f32.xlu0 %v2519
        %v2521 = vpop.xlane.xlu0 %2520
        %v2522 = vsel %vm2479, %v2461, -inf
        %2523 = vmax.xlane.f32.xlu0 %v2522
        %v2524 = vpop.xlane.xlu0 %2523
        %v2525 = vsel %vm2479, %v2462, -inf
        %2526 = vmax.xlane.f32.xlu0 %v2525
        %v2527 = vpop.xlane.xlu0 %2526
        %v2528 = vsel %vm2479, %v2463, -inf
        %2529 = vmax.xlane.f32.xlu0 %v2528
        %v2530 = vpop.xlane.xlu0 %2529
        %v2531 = vsel %vm2479, %v2464, -inf
        %2532 = vmax.xlane.f32.xlu0 %v2531
        %v2533 = vpop.xlane.xlu0 %2532
        %v2534 = vsel %vm2479, %v2465, -inf
        %2535 = vmax.xlane.f32.xlu0 %v2534
        %v2536 = vpop.xlane.xlu0 %2535
        %v2537 = vsel %vm2479, %v2466, -inf
        %2538 = vmax.xlane.f32.xlu0 %v2537
        %v2539 = vpop.xlane.xlu0 %2538
        %v2540 = vsel %vm2479, %v2467, -inf
        %2541 = vmax.xlane.f32.xlu0 %v2540
        %v2542 = vpop.xlane.xlu0 %2541
        %v2543 = vsel %vm2479, %v2468, -inf
        %2544 = vmax.xlane.f32.xlu0 %v2543
        %v2545 = vpop.xlane.xlu0 %2544
        %v2546 = vsel %vm2479, %v2469, -inf
        %2547 = vmax.xlane.f32.xlu0 %v2546
        %v2548 = vpop.xlane.xlu0 %2547
        %v2549 = vsel %vm2479, %v2470, -inf
        %2550 = vmax.xlane.f32.xlu0 %v2549
        %v2551 = vpop.xlane.xlu0 %2550
        %v2552 = vsel %vm2479, %v2471, -inf
        %2553 = vmax.xlane.f32.xlu0 %v2552
        %v2554 = vpop.xlane.xlu0 %2553
        %v2555 = vsel %vm2479, %v2472, -inf
        %2556 = vmax.xlane.f32.xlu0 %v2555
        %v2557 = vpop.xlane.xlu0 %2556
        %v2558 = vsel %vm2479, %v2473, -inf
        %2559 = vmax.xlane.f32.xlu0 %v2558
        %v2560 = vpop.xlane.xlu0 %2559
        %v2561 = vsel %vm2479, %v2474, -inf
        %2562 = vmax.xlane.f32.xlu0 %v2561
        %v2563 = vpop.xlane.xlu0 %2562
        %v2564 = vsel %vm2479, %v2475, -inf
        %2565 = vmax.xlane.f32.xlu0 %v2564
        %v2566 = vpop.xlane.xlu0 %2565
        %v2567 = vsel %vm2479, %v2476, -inf
        %2568 = vmax.xlane.f32.xlu0 %v2567
        %v2569 = vpop.xlane.xlu0 %2568
        %v2570 = vsel %vm2479, %v2477, -inf
        %2571 = vmax.xlane.f32.xlu0 %v2570
        %v2572 = vpop.xlane.xlu0 %2571
        %v2573 = vsel %vm2479, %v2478, -inf
        %2574 = vmax.xlane.f32.xlu0 %v2573
        %v2575 = vpop.xlane.xlu0 %2574
        %v2576 = vsub.f32 %v2447, %v2482
        %v2577 = vsub.f32 %v2448, %v2485
        %v2578 = vsub.f32 %v2449, %v2488
        %v2579 = vsub.f32 %v2450, %v2491
        %v2580 = vsub.f32 %v2451, %v2494
        %v2581 = vsub.f32 %v2452, %v2497
        %v2582 = vsub.f32 %v2453, %v2500
        %v2583 = vsub.f32 %v2454, %v2503
        %v2584 = vsub.f32 %v2455, %v2506
        %v2585 = vsub.f32 %v2456, %v2509
        %v2586 = vsub.f32 %v2457, %v2512
        %v2587 = vsub.f32 %v2458, %v2515
        %v2588 = vsub.f32 %v2459, %v2518
        %v2589 = vsub.f32 %v2460, %v2521
        %v2590 = vsub.f32 %v2461, %v2524
        %v2591 = vsub.f32 %v2462, %v2527
        %v2592 = vsub.f32 %v2463, %v2530
        %v2593 = vsub.f32 %v2464, %v2533
        %v2594 = vsub.f32 %v2465, %v2536
        %v2595 = vsub.f32 %v2466, %v2539
        %v2596 = vsub.f32 %v2467, %v2542
        %v2597 = vsub.f32 %v2468, %v2545
        %v2598 = vsub.f32 %v2469, %v2548
        %v2599 = vsub.f32 %v2470, %v2551
        %v2600 = vsub.f32 %v2471, %v2554
        %v2601 = vsub.f32 %v2472, %v2557
        %v2602 = vsub.f32 %v2473, %v2560
        %v2603 = vsub.f32 %v2474, %v2563
        %v2604 = vsub.f32 %v2475, %v2566
        %v2605 = vsub.f32 %v2476, %v2569
        %v2606 = vsub.f32 %v2477, %v2572
        %v2607 = vsub.f32 %v2478, %v2575
        %v2608 = vmul.f32 %v2576, 1.442695
        %v2609 = vpow.pop %v2608
        %v2610 = vmul.f32 %v2577, 1.442695
        %v2611 = vpow.pop %v2610
        %v2612 = vmul.f32 %v2578, 1.442695
        %v2613 = vpow.pop %v2612
        %v2614 = vmul.f32 %v2579, 1.442695
        %v2615 = vpow.pop %v2614
        %v2616 = vmul.f32 %v2580, 1.442695
        %v2617 = vpow.pop %v2616
        %v2618 = vmul.f32 %v2581, 1.442695
        %v2619 = vpow.pop %v2618
        %v2620 = vmul.f32 %v2582, 1.442695
        %v2621 = vpow.pop %v2620
        %v2622 = vmul.f32 %v2583, 1.442695
        %v2623 = vpow.pop %v2622
        %v2624 = vmul.f32 %v2584, 1.442695
        %v2625 = vpow.pop %v2624
        %v2626 = vmul.f32 %v2585, 1.442695
        %v2627 = vpow.pop %v2626
        %v2628 = vmul.f32 %v2586, 1.442695
        %v2629 = vpow.pop %v2628
        %v2630 = vmul.f32 %v2587, 1.442695
        %v2631 = vpow.pop %v2630
        %v2632 = vmul.f32 %v2588, 1.442695
        %v2633 = vpow.pop %v2632
        %v2634 = vmul.f32 %v2589, 1.442695
        %v2635 = vpow.pop %v2634
        %v2636 = vmul.f32 %v2590, 1.442695
        %v2637 = vpow.pop %v2636
        %v2638 = vmul.f32 %v2591, 1.442695
        %v2639 = vpow.pop %v2638
        %v2640 = vmul.f32 %v2592, 1.442695
        %v2641 = vpow.pop %v2640
        %v2642 = vmul.f32 %v2593, 1.442695
        %v2643 = vpow.pop %v2642
        %v2644 = vmul.f32 %v2594, 1.442695
        %v2645 = vpow.pop %v2644
        %v2646 = vmul.f32 %v2595, 1.442695
        %v2647 = vpow.pop %v2646
        %v2648 = vmul.f32 %v2596, 1.442695
        %v2649 = vpow.pop %v2648
        %v2650 = vmul.f32 %v2597, 1.442695
        %v2651 = vpow.pop %v2650
        %v2652 = vmul.f32 %v2598, 1.442695
        %v2653 = vpow.pop %v2652
        %v2654 = vmul.f32 %v2599, 1.442695
        %v2655 = vpow.pop %v2654
        %v2656 = vmul.f32 %v2600, 1.442695
        %v2657 = vpow.pop %v2656
        %v2658 = vmul.f32 %v2601, 1.442695
        %v2659 = vpow.pop %v2658
        %v2660 = vmul.f32 %v2602, 1.442695
        %v2661 = vpow.pop %v2660
        %v2662 = vmul.f32 %v2603, 1.442695
        %v2663 = vpow.pop %v2662
        %v2664 = vmul.f32 %v2604, 1.442695
        %v2665 = vpow.pop %v2664
        %v2666 = vmul.f32 %v2605, 1.442695
        %v2667 = vpow.pop %v2666
        %v2668 = vmul.f32 %v2606, 1.442695
        %v2669 = vpow.pop %v2668
        %v2670 = vmul.f32 %v2607, 1.442695
        %v2671 = vpow.pop %v2670
        %v2672 = vsel %vm2479, %v2609, 0.0
        %2673 = vadd.xlane.f32.xlu0 %v2672
        %v2674 = vpop.xlane.xlu0 %2673
        %v2675 = vsel %vm2479, %v2611, 0.0
        %2676 = vadd.xlane.f32.xlu0 %v2675
        %v2677 = vpop.xlane.xlu0 %2676
        %v2678 = vsel %vm2479, %v2613, 0.0
        %2679 = vadd.xlane.f32.xlu0 %v2678
        %v2680 = vpop.xlane.xlu0 %2679
        %v2681 = vsel %vm2479, %v2615, 0.0
        %2682 = vadd.xlane.f32.xlu0 %v2681
        %v2683 = vpop.xlane.xlu0 %2682
        %v2684 = vsel %vm2479, %v2617, 0.0
        %2685 = vadd.xlane.f32.xlu0 %v2684
        %v2686 = vpop.xlane.xlu0 %2685
        %v2687 = vsel %vm2479, %v2619, 0.0
        %2688 = vadd.xlane.f32.xlu0 %v2687
        %v2689 = vpop.xlane.xlu0 %2688
        %v2690 = vsel %vm2479, %v2621, 0.0
        %2691 = vadd.xlane.f32.xlu0 %v2690
        %v2692 = vpop.xlane.xlu0 %2691
        %v2693 = vsel %vm2479, %v2623, 0.0
        %2694 = vadd.xlane.f32.xlu0 %v2693
        %v2695 = vpop.xlane.xlu0 %2694
        %v2696 = vsel %vm2479, %v2625, 0.0
        %2697 = vadd.xlane.f32.xlu0 %v2696
        %v2698 = vpop.xlane.xlu0 %2697
        %v2699 = vsel %vm2479, %v2627, 0.0
        %2700 = vadd.xlane.f32.xlu0 %v2699
        %v2701 = vpop.xlane.xlu0 %2700
        %v2702 = vsel %vm2479, %v2629, 0.0
        %2703 = vadd.xlane.f32.xlu0 %v2702
        %v2704 = vpop.xlane.xlu0 %2703
        %v2705 = vsel %vm2479, %v2631, 0.0
        %2706 = vadd.xlane.f32.xlu0 %v2705
        %v2707 = vpop.xlane.xlu0 %2706
        %v2708 = vsel %vm2479, %v2633, 0.0
        %2709 = vadd.xlane.f32.xlu0 %v2708
        %v2710 = vpop.xlane.xlu0 %2709
        %v2711 = vsel %vm2479, %v2635, 0.0
        %2712 = vadd.xlane.f32.xlu0 %v2711
        %v2713 = vpop.xlane.xlu0 %2712
        %v2714 = vsel %vm2479, %v2637, 0.0
        %2715 = vadd.xlane.f32.xlu0 %v2714
        %v2716 = vpop.xlane.xlu0 %2715
        %v2717 = vsel %vm2479, %v2639, 0.0
        %2718 = vadd.xlane.f32.xlu0 %v2717
        %v2719 = vpop.xlane.xlu0 %2718
        %v2720 = vsel %vm2479, %v2641, 0.0
        %2721 = vadd.xlane.f32.xlu0 %v2720
        %v2722 = vpop.xlane.xlu0 %2721
        %v2723 = vsel %vm2479, %v2643, 0.0
        %2724 = vadd.xlane.f32.xlu0 %v2723
        %v2725 = vpop.xlane.xlu0 %2724
        %v2726 = vsel %vm2479, %v2645, 0.0
        %2727 = vadd.xlane.f32.xlu0 %v2726
        %v2728 = vpop.xlane.xlu0 %2727
        %v2729 = vsel %vm2479, %v2647, 0.0
        %2730 = vadd.xlane.f32.xlu0 %v2729
        %v2731 = vpop.xlane.xlu0 %2730
        %v2732 = vsel %vm2479, %v2649, 0.0
        %2733 = vadd.xlane.f32.xlu0 %v2732
        %v2734 = vpop.xlane.xlu0 %2733
        %v2735 = vsel %vm2479, %v2651, 0.0
        %2736 = vadd.xlane.f32.xlu0 %v2735
        %v2737 = vpop.xlane.xlu0 %2736
        %v2738 = vsel %vm2479, %v2653, 0.0
        %2739 = vadd.xlane.f32.xlu0 %v2738
        %v2740 = vpop.xlane.xlu0 %2739
        %v2741 = vsel %vm2479, %v2655, 0.0
        %2742 = vadd.xlane.f32.xlu0 %v2741
        %v2743 = vpop.xlane.xlu0 %2742
        %v2744 = vsel %vm2479, %v2657, 0.0
        %2745 = vadd.xlane.f32.xlu0 %v2744
        %v2746 = vpop.xlane.xlu0 %2745
        %v2747 = vsel %vm2479, %v2659, 0.0
        %2748 = vadd.xlane.f32.xlu0 %v2747
        %v2749 = vpop.xlane.xlu0 %2748
        %v2750 = vsel %vm2479, %v2661, 0.0
        %2751 = vadd.xlane.f32.xlu0 %v2750
        %v2752 = vpop.xlane.xlu0 %2751
        %v2753 = vsel %vm2479, %v2663, 0.0
        %2754 = vadd.xlane.f32.xlu0 %v2753
        %v2755 = vpop.xlane.xlu0 %2754
        %v2756 = vsel %vm2479, %v2665, 0.0
        %2757 = vadd.xlane.f32.xlu0 %v2756
        %v2758 = vpop.xlane.xlu0 %2757
        %v2759 = vsel %vm2479, %v2667, 0.0
        %2760 = vadd.xlane.f32.xlu0 %v2759
        %v2761 = vpop.xlane.xlu0 %2760
        %v2762 = vsel %vm2479, %v2669, 0.0
        %2763 = vadd.xlane.f32.xlu0 %v2762
        %v2764 = vpop.xlane.xlu0 %2763
        %v2765 = vsel %vm2479, %v2671, 0.0
        %2766 = vadd.xlane.f32.xlu0 %v2765
        %v2767 = vpop.xlane.xlu0 %2766
        %v2768 = vrcp.pop %v2674
        %v2769 = vrcp.pop %v2677
        %v2770 = vrcp.pop %v2680
        %v2771 = vrcp.pop %v2683
        %v2772 = vrcp.pop %v2686
        %v2773 = vrcp.pop %v2689
        %v2774 = vrcp.pop %v2692
        %v2775 = vrcp.pop %v2695
        %v2776 = vrcp.pop %v2698
        %v2777 = vrcp.pop %v2701
        %v2778 = vrcp.pop %v2704
        %v2779 = vrcp.pop %v2707
        %v2780 = vrcp.pop %v2710
        %v2781 = vrcp.pop %v2713
        %v2782 = vrcp.pop %v2716
        %v2783 = vrcp.pop %v2719
        %v2784 = vrcp.pop %v2722
        %v2785 = vrcp.pop %v2725
        %v2786 = vrcp.pop %v2728
        %v2787 = vrcp.pop %v2731
        %v2788 = vrcp.pop %v2734
        %v2789 = vrcp.pop %v2737
        %v2790 = vrcp.pop %v2740
        %v2791 = vrcp.pop %v2743
        %v2792 = vrcp.pop %v2746
        %v2793 = vrcp.pop %v2749
        %v2794 = vrcp.pop %v2752
        %v2795 = vrcp.pop %v2755
        %v2796 = vrcp.pop %v2758
        %v2797 = vrcp.pop %v2761
        %v2798 = vrcp.pop %v2764
        %v2799 = vrcp.pop %v2767
        %v2800 = vmul.f32 %v2674, %v2768
        %v2801 = vmul.f32 %v2677, %v2769
        %v2802 = vmul.f32 %v2680, %v2770
        %v2803 = vmul.f32 %v2683, %v2771
        %v2804 = vmul.f32 %v2686, %v2772
        %v2805 = vmul.f32 %v2689, %v2773
        %v2806 = vmul.f32 %v2692, %v2774
        %v2807 = vmul.f32 %v2695, %v2775
        %v2808 = vmul.f32 %v2698, %v2776
        %v2809 = vmul.f32 %v2701, %v2777
        %v2810 = vmul.f32 %v2704, %v2778
        %v2811 = vmul.f32 %v2707, %v2779
        %v2812 = vmul.f32 %v2710, %v2780
        %v2813 = vmul.f32 %v2713, %v2781
        %v2814 = vmul.f32 %v2716, %v2782
        %v2815 = vmul.f32 %v2719, %v2783
        %v2816 = vmul.f32 %v2722, %v2784
        %v2817 = vmul.f32 %v2725, %v2785
        %v2818 = vmul.f32 %v2728, %v2786
        %v2819 = vmul.f32 %v2731, %v2787
        %v2820 = vmul.f32 %v2734, %v2788
        %v2821 = vmul.f32 %v2737, %v2789
        %v2822 = vmul.f32 %v2740, %v2790
        %v2823 = vmul.f32 %v2743, %v2791
        %v2824 = vmul.f32 %v2746, %v2792
        %v2825 = vmul.f32 %v2749, %v2793
        %v2826 = vmul.f32 %v2752, %v2794
        %v2827 = vmul.f32 %v2755, %v2795
        %v2828 = vmul.f32 %v2758, %v2796
        %v2829 = vmul.f32 %v2761, %v2797
        %v2830 = vmul.f32 %v2764, %v2798
        %v2831 = vmul.f32 %v2767, %v2799
        %v2832 = vsub.f32 2.0, %v2800
        %v2833 = vsub.f32 2.0, %v2801
        %v2834 = vsub.f32 2.0, %v2802
        %v2835 = vsub.f32 2.0, %v2803
        %v2836 = vsub.f32 2.0, %v2804
        %v2837 = vsub.f32 2.0, %v2805
        %v2838 = vsub.f32 2.0, %v2806
        %v2839 = vsub.f32 2.0, %v2807
        %v2840 = vsub.f32 2.0, %v2808
        %v2841 = vsub.f32 2.0, %v2809
        %v2842 = vsub.f32 2.0, %v2810
        %v2843 = vsub.f32 2.0, %v2811
        %v2844 = vsub.f32 2.0, %v2812
        %v2845 = vsub.f32 2.0, %v2813
        %v2846 = vsub.f32 2.0, %v2814
        %v2847 = vsub.f32 2.0, %v2815
        %v2848 = vsub.f32 2.0, %v2816
        %v2849 = vsub.f32 2.0, %v2817
        %v2850 = vsub.f32 2.0, %v2818
        %v2851 = vsub.f32 2.0, %v2819
        %v2852 = vsub.f32 2.0, %v2820
        %v2853 = vsub.f32 2.0, %v2821
        %v2854 = vsub.f32 2.0, %v2822
        %v2855 = vsub.f32 2.0, %v2823
        %v2856 = vsub.f32 2.0, %v2824
        %v2857 = vsub.f32 2.0, %v2825
        %v2858 = vsub.f32 2.0, %v2826
        %v2859 = vsub.f32 2.0, %v2827
        %v2860 = vsub.f32 2.0, %v2828
        %v2861 = vsub.f32 2.0, %v2829
        %v2862 = vsub.f32 2.0, %v2830
        %v2863 = vsub.f32 2.0, %v2831
        %v2864 = vmul.f32 %v2768, %v2832
        %v2865 = vmul.f32 %v2769, %v2833
        %v2866 = vmul.f32 %v2770, %v2834
        %v2867 = vmul.f32 %v2771, %v2835
        %v2868 = vmul.f32 %v2772, %v2836
        %v2869 = vmul.f32 %v2773, %v2837
        %v2870 = vmul.f32 %v2774, %v2838
        %v2871 = vmul.f32 %v2775, %v2839
        %v2872 = vmul.f32 %v2776, %v2840
        %v2873 = vmul.f32 %v2777, %v2841
        %v2874 = vmul.f32 %v2778, %v2842
        %v2875 = vmul.f32 %v2779, %v2843
        %v2876 = vmul.f32 %v2780, %v2844
        %v2877 = vmul.f32 %v2781, %v2845
        %v2878 = vmul.f32 %v2782, %v2846
        %v2879 = vmul.f32 %v2783, %v2847
        %v2880 = vmul.f32 %v2784, %v2848
        %v2881 = vmul.f32 %v2785, %v2849
        %v2882 = vmul.f32 %v2786, %v2850
        %v2883 = vmul.f32 %v2787, %v2851
        %v2884 = vmul.f32 %v2788, %v2852
        %v2885 = vmul.f32 %v2789, %v2853
        %v2886 = vmul.f32 %v2790, %v2854
        %v2887 = vmul.f32 %v2791, %v2855
        %v2888 = vmul.f32 %v2792, %v2856
        %v2889 = vmul.f32 %v2793, %v2857
        %v2890 = vmul.f32 %v2794, %v2858
        %v2891 = vmul.f32 %v2795, %v2859
        %v2892 = vmul.f32 %v2796, %v2860
        %v2893 = vmul.f32 %v2797, %v2861
        %v2894 = vmul.f32 %v2798, %v2862
        %v2895 = vmul.f32 %v2799, %v2863
        %v2896 = vmul.f32 %v2609, %v2864
        %v2897 = vmul.f32 %v2611, %v2865
        %v2898 = vmul.f32 %v2613, %v2866
        %v2899 = vmul.f32 %v2615, %v2867
        %v2900 = vmul.f32 %v2617, %v2868
        %v2901 = vmul.f32 %v2619, %v2869
        %v2902 = vmul.f32 %v2621, %v2870
        %v2903 = vmul.f32 %v2623, %v2871
        %v2904 = vmul.f32 %v2625, %v2872
        %v2905 = vmul.f32 %v2627, %v2873
        %v2906 = vmul.f32 %v2629, %v2874
        %v2907 = vmul.f32 %v2631, %v2875
        %v2908 = vmul.f32 %v2633, %v2876
        %v2909 = vmul.f32 %v2635, %v2877
        %v2910 = vmul.f32 %v2637, %v2878
        %v2911 = vmul.f32 %v2639, %v2879
        %v2912 = vmul.f32 %v2641, %v2880
        %v2913 = vmul.f32 %v2643, %v2881
        %v2914 = vmul.f32 %v2645, %v2882
        %v2915 = vmul.f32 %v2647, %v2883
        %v2916 = vmul.f32 %v2649, %v2884
        %v2917 = vmul.f32 %v2651, %v2885
        %v2918 = vmul.f32 %v2653, %v2886
        %v2919 = vmul.f32 %v2655, %v2887
        %v2920 = vmul.f32 %v2657, %v2888
        %v2921 = vmul.f32 %v2659, %v2889
        %v2922 = vmul.f32 %v2661, %v2890
        %v2923 = vmul.f32 %v2663, %v2891
        %v2924 = vmul.f32 %v2665, %v2892
        %v2925 = vmul.f32 %v2667, %v2893
        %v2926 = vmul.f32 %v2669, %v2894
        %v2927 = vmul.f32 %v2671, %v2895
        %2928 = vst.msk [vmem:[%s576] sm:$0xff] %vm2479, %v2896
        %2929 = vst.msk [vmem:[%s576 + $0x8] sm:$0xff] %vm2479, %v2897
        %2930 = vst.msk [vmem:[%s576 + $0x10] sm:$0xff] %vm2479, %v2898
        %2931 = vst.msk [vmem:[%s576 + $0x18] sm:$0xff] %vm2479, %v2899
        %2932 = vst.msk [vmem:[%s576 + $0x20] sm:$0xff] %vm2479, %v2900
        %2933 = vst.msk [vmem:[%s576 + $0x28] sm:$0xff] %vm2479, %v2901
        %2934 = vst.msk [vmem:[%s576 + $0x30] sm:$0xff] %vm2479, %v2902
        %2935 = vst.msk [vmem:[%s576 + $0x38] sm:$0xff] %vm2479, %v2903
        %2936 = vst.msk [vmem:[%s576 + $0x40] sm:$0xff] %vm2479, %v2904
        %2937 = vst.msk [vmem:[%s576 + $0x48] sm:$0xff] %vm2479, %v2905
        %2938 = vst.msk [vmem:[%s576 + $0x50] sm:$0xff] %vm2479, %v2906
        %2939 = vst.msk [vmem:[%s576 + $0x58] sm:$0xff] %vm2479, %v2907
        %2940 = vst.msk [vmem:[%s576 + $0x60] sm:$0xff] %vm2479, %v2908
        %2941 = vst.msk [vmem:[%s576 + $0x68] sm:$0xff] %vm2479, %v2909
        %2942 = vst.msk [vmem:[%s576 + $0x70] sm:$0xff] %vm2479, %v2910
        %2943 = vst.msk [vmem:[%s576 + $0x78] sm:$0xff] %vm2479, %v2911
        %2944 = vst.msk [vmem:[%s576 + $0x80] sm:$0xff] %vm2479, %v2912
        %2945 = vst.msk [vmem:[%s576 + $0x88] sm:$0xff] %vm2479, %v2913
        %2946 = vst.msk [vmem:[%s576 + $0x90] sm:$0xff] %vm2479, %v2914
        %2947 = vst.msk [vmem:[%s576 + $0x98] sm:$0xff] %vm2479, %v2915
        %2948 = vst.msk [vmem:[%s576 + $0xa0] sm:$0xff] %vm2479, %v2916
        %2949 = vst.msk [vmem:[%s576 + $0xa8] sm:$0xff] %vm2479, %v2917
        %2950 = vst.msk [vmem:[%s576 + $0xb0] sm:$0xff] %vm2479, %v2918
        %2951 = vst.msk [vmem:[%s576 + $0xb8] sm:$0xff] %vm2479, %v2919
        %2952 = vst.msk [vmem:[%s576 + $0xc0] sm:$0xff] %vm2479, %v2920
        %2953 = vst.msk [vmem:[%s576 + $0xc8] sm:$0xff] %vm2479, %v2921
        %2954 = vst.msk [vmem:[%s576 + $0xd0] sm:$0xff] %vm2479, %v2922
        %2955 = vst.msk [vmem:[%s576 + $0xd8] sm:$0xff] %vm2479, %v2923
        %2956 = vst.msk [vmem:[%s576 + $0xe0] sm:$0xff] %vm2479, %v2924
        %2957 = vst.msk [vmem:[%s576 + $0xe8] sm:$0xff] %vm2479, %v2925
        %2958 = vst.msk [vmem:[%s576 + $0xf0] sm:$0xff] %vm2479, %v2926
        %2959 = vst.msk [vmem:[%s576 + $0xf8] sm:$0xff] %vm2479, %v2927
        %v2961 = vsel %vm2479, %v2896, 0
        %v2964 = vsel %vm2479, %v2897, 0
        %v2967 = vsel %vm2479, %v2898, 0
        %v2970 = vsel %vm2479, %v2899, 0
        %2972 = vmatprep.subr.mxu0 0.0
        %2973 = vmatpush1.msra.mxu0 0.0
        %2974 = vmatprep.subr.mxu0 0.0
        %2975 = vmatpush1.msra.mxu0 0.0
        %2976 = vmatprep.subr.mxu0 0.0
        %2977 = vmatpush1.msra.mxu0 0.0
        %2978 = vmatprep.subr.mxu0 0.0
        %2979 = vmatpush1.msra.mxu0 0.0
        %2980 = vmatprep.subr.mxu0 0.0
        %2981 = vmatpush1.msra.mxu0 0.0
        %2982 = vmatprep.subr.mxu0 0.0
        %2983 = vmatpush1.msra.mxu0 0.0
        %2984 = vmatprep.subr.mxu0 0.0
        %2985 = vmatpush1.msra.mxu0 0.0
        %2986 = vmatprep.subr.mxu0 0.0
        %2987 = vmatpush1.msra.mxu0 0.0
        %2988 = vmatprep.subr.mxu0 0.0
        %2989 = vmatpush1.msra.mxu0 %v1125
        %2990 = vmatprep.subr.mxu0 0.0
        %2991 = vmatpush1.msra.mxu0 %v1120
        %2992 = vmatprep.subr.mxu0 0.0
        %2993 = vmatpush1.msra.mxu0 %v1115
        %2994 = vmatprep.subr.mxu0 0.0
        %2995 = vmatpush1.msra.mxu0 %v1110
        %2996 = vmatprep.subr.mxu0 0.0
        %2997 = vmatpush1.msra.mxu0 %v1105
        %2998 = vmatprep.subr.mxu0 0.0
        %2999 = vmatpush1.msra.mxu0 %v1100
        %3000 = vmatprep.subr.mxu0 0.0
        %3001 = vmatpush1.msra.mxu0 %v1095
        %3002 = vmatprep.subr.mxu0 0.0
        %3003 = vmatpush1.msra.mxu0 %v1090
        %3004 = vmatprep.subr.mxu0 0.0
        %3005 = vmatpush2.msra.mxu0 0.0
        %3006 = vmatprep.subr.mxu0 0.0
        %3007 = vmatpush2.msra.mxu0 0.0
        %3008 = vmatprep.subr.mxu0 0.0
        %3009 = vmatpush2.msra.mxu0 0.0
        %3010 = vmatprep.subr.mxu0 0.0
        %3011 = vmatpush2.msra.mxu0 0.0
        %3012 = vmatprep.subr.mxu0 0.0
        %3013 = vmatpush2.msra.mxu0 0.0
        %3014 = vmatprep.subr.mxu0 0.0
        %3015 = vmatpush2.msra.mxu0 0.0
        %3016 = vmatprep.subr.mxu0 0.0
        %3017 = vmatpush2.msra.mxu0 0.0
        %3018 = vmatprep.subr.mxu0 0.0
        %3019 = vmatpush2.msra.mxu0 0.0
        %3020 = vmatprep.subr.mxu0 0.0
        %3021 = vmatpush2.msra.mxu0 0.0
        %3022 = vmatprep.subr.mxu0 0.0
        %3023 = vmatpush2.msra.mxu0 0.0
        %3024 = vmatprep.subr.mxu0 0.0
        %3025 = vmatpush2.msra.mxu0 0.0
        %3026 = vmatprep.subr.mxu0 0.0
        %3027 = vmatpush2.msra.mxu0 0.0
        %3028 = vmatprep.subr.mxu0 0.0
        %3029 = vmatpush2.msra.mxu0 0.0
        %3030 = vmatprep.subr.mxu0 0.0
        %3031 = vmatpush2.msra.mxu0 0.0
        %3032 = vmatprep.subr.mxu0 0.0
        %3033 = vmatpush2.msra.mxu0 0.0
        %3034 = vmatprep.subr.mxu0 0.0
        %3035 = vmatpush2.msra.mxu0 0.0
        %3036 = vmatprep.mubr.f32.mxu0 0.0
        %3037 = vmatmul.mubr.f32.gmra.mxu0 %v2961
        %v3038 = vpop.f32.mrf.mxu0
        %v3039 = vadd.f32 0.0, %v3038
        %v3040 = vpop.f32.mrf.mxu0
        %3041 = vmatprep.mubr.f32.mxu0 0.0
        %3042 = vmatmul.mubr.f32.gmra.mxu0 %v2964
        %v3043 = vpop.f32.mrf.mxu0
        %v3044 = vadd.f32 0.0, %v3043
        %v3045 = vpop.f32.mrf.mxu0
        %3046 = vmatprep.mubr.f32.mxu0 0.0
        %3047 = vmatmul.mubr.f32.gmra.mxu0 %v2967
        %v3048 = vpop.f32.mrf.mxu0
        %v3049 = vadd.f32 0.0, %v3048
        %v3050 = vpop.f32.mrf.mxu0
        %3051 = vmatprep.mubr.f32.mxu0 0.0
        %3052 = vmatmul.mubr.f32.gmra.mxu0 %v2970
        %v3053 = vpop.f32.mrf.mxu0
        %v3054 = vadd.f32 0.0, %v3053
        %v3055 = vpop.f32.mrf.mxu0
        %3056 = vdwg.mxu0
        %v3058 = vsel %vm2479, %v2900, 0
        %v3061 = vsel %vm2479, %v2901, 0
        %v3064 = vsel %vm2479, %v2902, 0
        %v3067 = vsel %vm2479, %v2903, 0
        %3069 = vmatprep.subr.mxu0 0.0
        %3070 = vmatpush1.msra.mxu0 0.0
        %3071 = vmatprep.subr.mxu0 0.0
        %3072 = vmatpush1.msra.mxu0 0.0
        %3073 = vmatprep.subr.mxu0 0.0
        %3074 = vmatpush1.msra.mxu0 0.0
        %3075 = vmatprep.subr.mxu0 0.0
        %3076 = vmatpush1.msra.mxu0 0.0
        %3077 = vmatprep.subr.mxu0 0.0
        %3078 = vmatpush1.msra.mxu0 0.0
        %3079 = vmatprep.subr.mxu0 0.0
        %3080 = vmatpush1.msra.mxu0 0.0
        %3081 = vmatprep.subr.mxu0 0.0
        %3082 = vmatpush1.msra.mxu0 0.0
        %3083 = vmatprep.subr.mxu0 0.0
        %3084 = vmatpush1.msra.mxu0 0.0
        %3085 = vmatprep.subr.mxu0 0.0
        %3086 = vmatpush1.msra.mxu0 %v1367
        %3087 = vmatprep.subr.mxu0 0.0
        %3088 = vmatpush1.msra.mxu0 %v1365
        %3089 = vmatprep.subr.mxu0 0.0
        %3090 = vmatpush1.msra.mxu0 %v1363
        %3091 = vmatprep.subr.mxu0 0.0
        %3092 = vmatpush1.msra.mxu0 %v1361
        %3093 = vmatprep.subr.mxu0 0.0
        %3094 = vmatpush1.msra.mxu0 %v1359
        %3095 = vmatprep.subr.mxu0 0.0
        %3096 = vmatpush1.msra.mxu0 %v1357
        %3097 = vmatprep.subr.mxu0 0.0
        %3098 = vmatpush1.msra.mxu0 %v1355
        %3099 = vmatprep.subr.mxu0 0.0
        %3100 = vmatpush1.msra.mxu0 %v1353
        %3101 = vmatprep.subr.mxu0 0.0
        %3102 = vmatpush2.msra.mxu0 0.0
        %3103 = vmatprep.subr.mxu0 0.0
        %3104 = vmatpush2.msra.mxu0 0.0
        %3105 = vmatprep.subr.mxu0 0.0
        %3106 = vmatpush2.msra.mxu0 0.0
        %3107 = vmatprep.subr.mxu0 0.0
        %3108 = vmatpush2.msra.mxu0 0.0
        %3109 = vmatprep.subr.mxu0 0.0
        %3110 = vmatpush2.msra.mxu0 0.0
        %3111 = vmatprep.subr.mxu0 0.0
        %3112 = vmatpush2.msra.mxu0 0.0
        %3113 = vmatprep.subr.mxu0 0.0
        %3114 = vmatpush2.msra.mxu0 0.0
        %3115 = vmatprep.subr.mxu0 0.0
        %3116 = vmatpush2.msra.mxu0 0.0
        %3117 = vmatprep.subr.mxu0 0.0
        %3118 = vmatpush2.msra.mxu0 0.0
        %3119 = vmatprep.subr.mxu0 0.0
        %3120 = vmatpush2.msra.mxu0 0.0
        %3121 = vmatprep.subr.mxu0 0.0
        %3122 = vmatpush2.msra.mxu0 0.0
        %3123 = vmatprep.subr.mxu0 0.0
        %3124 = vmatpush2.msra.mxu0 0.0
        %3125 = vmatprep.subr.mxu0 0.0
        %3126 = vmatpush2.msra.mxu0 0.0
        %3127 = vmatprep.subr.mxu0 0.0
        %3128 = vmatpush2.msra.mxu0 0.0
        %3129 = vmatprep.subr.mxu0 0.0
        %3130 = vmatpush2.msra.mxu0 0.0
        %3131 = vmatprep.subr.mxu0 0.0
        %3132 = vmatpush2.msra.mxu0 0.0
        %3133 = vmatprep.mubr.f32.mxu0 0.0
        %3134 = vmatmul.mubr.f32.gmra.mxu0 %v3058
        %v3135 = vpop.f32.mrf.mxu0
        %v3136 = vadd.f32 0.0, %v3135
        %v3137 = vpop.f32.mrf.mxu0
        %3138 = vmatprep.mubr.f32.mxu0 0.0
        %3139 = vmatmul.mubr.f32.gmra.mxu0 %v3061
        %v3140 = vpop.f32.mrf.mxu0
        %v3141 = vadd.f32 0.0, %v3140
        %v3142 = vpop.f32.mrf.mxu0
        %3143 = vmatprep.mubr.f32.mxu0 0.0
        %3144 = vmatmul.mubr.f32.gmra.mxu0 %v3064
        %v3145 = vpop.f32.mrf.mxu0
        %v3146 = vadd.f32 0.0, %v3145
        %v3147 = vpop.f32.mrf.mxu0
        %3148 = vmatprep.mubr.f32.mxu0 0.0
        %3149 = vmatmul.mubr.f32.gmra.mxu0 %v3067
        %v3150 = vpop.f32.mrf.mxu0
        %v3151 = vadd.f32 0.0, %v3150
        %v3152 = vpop.f32.mrf.mxu0
        %3153 = vdwg.mxu0
        %v3155 = vsel %vm2479, %v2904, 0
        %v3158 = vsel %vm2479, %v2905, 0
        %v3161 = vsel %vm2479, %v2906, 0
        %v3164 = vsel %vm2479, %v2907, 0
        %3166 = vmatprep.subr.mxu0 0.0
        %3167 = vmatpush1.msra.mxu0 0.0
        %3168 = vmatprep.subr.mxu0 0.0
        %3169 = vmatpush1.msra.mxu0 0.0
        %3170 = vmatprep.subr.mxu0 0.0
        %3171 = vmatpush1.msra.mxu0 0.0
        %3172 = vmatprep.subr.mxu0 0.0
        %3173 = vmatpush1.msra.mxu0 0.0
        %3174 = vmatprep.subr.mxu0 0.0
        %3175 = vmatpush1.msra.mxu0 0.0
        %3176 = vmatprep.subr.mxu0 0.0
        %3177 = vmatpush1.msra.mxu0 0.0
        %3178 = vmatprep.subr.mxu0 0.0
        %3179 = vmatpush1.msra.mxu0 0.0
        %3180 = vmatprep.subr.mxu0 0.0
        %3181 = vmatpush1.msra.mxu0 0.0
        %3182 = vmatprep.subr.mxu0 0.0
        %3183 = vmatpush1.msra.mxu0 %v1415
        %3184 = vmatprep.subr.mxu0 0.0
        %3185 = vmatpush1.msra.mxu0 %v1413
        %3186 = vmatprep.subr.mxu0 0.0
        %3187 = vmatpush1.msra.mxu0 %v1411
        %3188 = vmatprep.subr.mxu0 0.0
        %3189 = vmatpush1.msra.mxu0 %v1409
        %3190 = vmatprep.subr.mxu0 0.0
        %3191 = vmatpush1.msra.mxu0 %v1407
        %3192 = vmatprep.subr.mxu0 0.0
        %3193 = vmatpush1.msra.mxu0 %v1405
        %3194 = vmatprep.subr.mxu0 0.0
        %3195 = vmatpush1.msra.mxu0 %v1403
        %3196 = vmatprep.subr.mxu0 0.0
        %3197 = vmatpush1.msra.mxu0 %v1401
        %3198 = vmatprep.subr.mxu0 0.0
        %3199 = vmatpush2.msra.mxu0 0.0
        %3200 = vmatprep.subr.mxu0 0.0
        %3201 = vmatpush2.msra.mxu0 0.0
        %3202 = vmatprep.subr.mxu0 0.0
        %3203 = vmatpush2.msra.mxu0 0.0
        %3204 = vmatprep.subr.mxu0 0.0
        %3205 = vmatpush2.msra.mxu0 0.0
        %3206 = vmatprep.subr.mxu0 0.0
        %3207 = vmatpush2.msra.mxu0 0.0
        %3208 = vmatprep.subr.mxu0 0.0
        %3209 = vmatpush2.msra.mxu0 0.0
        %3210 = vmatprep.subr.mxu0 0.0
        %3211 = vmatpush2.msra.mxu0 0.0
        %3212 = vmatprep.subr.mxu0 0.0
        %3213 = vmatpush2.msra.mxu0 0.0
        %3214 = vmatprep.subr.mxu0 0.0
        %3215 = vmatpush2.msra.mxu0 0.0
        %3216 = vmatprep.subr.mxu0 0.0
        %3217 = vmatpush2.msra.mxu0 0.0
        %3218 = vmatprep.subr.mxu0 0.0
        %3219 = vmatpush2.msra.mxu0 0.0
        %3220 = vmatprep.subr.mxu0 0.0
        %3221 = vmatpush2.msra.mxu0 0.0
        %3222 = vmatprep.subr.mxu0 0.0
        %3223 = vmatpush2.msra.mxu0 0.0
        %3224 = vmatprep.subr.mxu0 0.0
        %3225 = vmatpush2.msra.mxu0 0.0
        %3226 = vmatprep.subr.mxu0 0.0
        %3227 = vmatpush2.msra.mxu0 0.0
        %3228 = vmatprep.subr.mxu0 0.0
        %3229 = vmatpush2.msra.mxu0 0.0
        %3230 = vmatprep.mubr.f32.mxu0 0.0
        %3231 = vmatmul.mubr.f32.gmra.mxu0 %v3155
        %v3232 = vpop.f32.mrf.mxu0
        %v3233 = vadd.f32 0.0, %v3232
        %v3234 = vpop.f32.mrf.mxu0
        %3235 = vmatprep.mubr.f32.mxu0 0.0
        %3236 = vmatmul.mubr.f32.gmra.mxu0 %v3158
        %v3237 = vpop.f32.mrf.mxu0
        %v3238 = vadd.f32 0.0, %v3237
        %v3239 = vpop.f32.mrf.mxu0
        %3240 = vmatprep.mubr.f32.mxu0 0.0
        %3241 = vmatmul.mubr.f32.gmra.mxu0 %v3161
        %v3242 = vpop.f32.mrf.mxu0
        %v3243 = vadd.f32 0.0, %v3242
        %v3244 = vpop.f32.mrf.mxu0
        %3245 = vmatprep.mubr.f32.mxu0 0.0
        %3246 = vmatmul.mubr.f32.gmra.mxu0 %v3164
        %v3247 = vpop.f32.mrf.mxu0
        %v3248 = vadd.f32 0.0, %v3247
        %v3249 = vpop.f32.mrf.mxu0
        %3250 = vdwg.mxu0
        %v3252 = vsel %vm2479, %v2908, 0
        %v3255 = vsel %vm2479, %v2909, 0
        %v3258 = vsel %vm2479, %v2910, 0
        %v3261 = vsel %vm2479, %v2911, 0
        %3263 = vmatprep.subr.mxu0 0.0
        %3264 = vmatpush1.msra.mxu0 0.0
        %3265 = vmatprep.subr.mxu0 0.0
        %3266 = vmatpush1.msra.mxu0 0.0
        %3267 = vmatprep.subr.mxu0 0.0
        %3268 = vmatpush1.msra.mxu0 0.0
        %3269 = vmatprep.subr.mxu0 0.0
        %3270 = vmatpush1.msra.mxu0 0.0
        %3271 = vmatprep.subr.mxu0 0.0
        %3272 = vmatpush1.msra.mxu0 0.0
        %3273 = vmatprep.subr.mxu0 0.0
        %3274 = vmatpush1.msra.mxu0 0.0
        %3275 = vmatprep.subr.mxu0 0.0
        %3276 = vmatpush1.msra.mxu0 0.0
        %3277 = vmatprep.subr.mxu0 0.0
        %3278 = vmatpush1.msra.mxu0 0.0
        %3279 = vmatprep.subr.mxu0 0.0
        %3280 = vmatpush1.msra.mxu0 %v1463
        %3281 = vmatprep.subr.mxu0 0.0
        %3282 = vmatpush1.msra.mxu0 %v1461
        %3283 = vmatprep.subr.mxu0 0.0
        %3284 = vmatpush1.msra.mxu0 %v1459
        %3285 = vmatprep.subr.mxu0 0.0
        %3286 = vmatpush1.msra.mxu0 %v1457
        %3287 = vmatprep.subr.mxu0 0.0
        %3288 = vmatpush1.msra.mxu0 %v1455
        %3289 = vmatprep.subr.mxu0 0.0
        %3290 = vmatpush1.msra.mxu0 %v1453
        %3291 = vmatprep.subr.mxu0 0.0
        %3292 = vmatpush1.msra.mxu0 %v1451
        %3293 = vmatprep.subr.mxu0 0.0
        %3294 = vmatpush1.msra.mxu0 %v1449
        %3295 = vmatprep.subr.mxu0 0.0
        %3296 = vmatpush2.msra.mxu0 0.0
        %3297 = vmatprep.subr.mxu0 0.0
        %3298 = vmatpush2.msra.mxu0 0.0
        %3299 = vmatprep.subr.mxu0 0.0
        %3300 = vmatpush2.msra.mxu0 0.0
        %3301 = vmatprep.subr.mxu0 0.0
        %3302 = vmatpush2.msra.mxu0 0.0
        %3303 = vmatprep.subr.mxu0 0.0
        %3304 = vmatpush2.msra.mxu0 0.0
        %3305 = vmatprep.subr.mxu0 0.0
        %3306 = vmatpush2.msra.mxu0 0.0
        %3307 = vmatprep.subr.mxu0 0.0
        %3308 = vmatpush2.msra.mxu0 0.0
        %3309 = vmatprep.subr.mxu0 0.0
        %3310 = vmatpush2.msra.mxu0 0.0
        %3311 = vmatprep.subr.mxu0 0.0
        %3312 = vmatpush2.msra.mxu0 0.0
        %3313 = vmatprep.subr.mxu0 0.0
        %3314 = vmatpush2.msra.mxu0 0.0
        %3315 = vmatprep.subr.mxu0 0.0
        %3316 = vmatpush2.msra.mxu0 0.0
        %3317 = vmatprep.subr.mxu0 0.0
        %3318 = vmatpush2.msra.mxu0 0.0
        %3319 = vmatprep.subr.mxu0 0.0
        %3320 = vmatpush2.msra.mxu0 0.0
        %3321 = vmatprep.subr.mxu0 0.0
        %3322 = vmatpush2.msra.mxu0 0.0
        %3323 = vmatprep.subr.mxu0 0.0
        %3324 = vmatpush2.msra.mxu0 0.0
        %3325 = vmatprep.subr.mxu0 0.0
        %3326 = vmatpush2.msra.mxu0 0.0
        %3327 = vmatprep.mubr.f32.mxu0 0.0
        %3328 = vmatmul.mubr.f32.gmra.mxu0 %v3252
        %v3329 = vpop.f32.mrf.mxu0
        %v3330 = vadd.f32 0.0, %v3329
        %v3331 = vpop.f32.mrf.mxu0
        %3332 = vmatprep.mubr.f32.mxu0 0.0
        %3333 = vmatmul.mubr.f32.gmra.mxu0 %v3255
        %v3334 = vpop.f32.mrf.mxu0
        %v3335 = vadd.f32 0.0, %v3334
        %v3336 = vpop.f32.mrf.mxu0
        %3337 = vmatprep.mubr.f32.mxu0 0.0
        %3338 = vmatmul.mubr.f32.gmra.mxu0 %v3258
        %v3339 = vpop.f32.mrf.mxu0
        %v3340 = vadd.f32 0.0, %v3339
        %v3341 = vpop.f32.mrf.mxu0
        %3342 = vmatprep.mubr.f32.mxu0 0.0
        %3343 = vmatmul.mubr.f32.gmra.mxu0 %v3261
        %v3344 = vpop.f32.mrf.mxu0
        %v3345 = vadd.f32 0.0, %v3344
        %v3346 = vpop.f32.mrf.mxu0
        %3347 = vdwg.mxu0
        %v3349 = vsel %vm2479, %v2912, 0
        %v3352 = vsel %vm2479, %v2913, 0
        %v3355 = vsel %vm2479, %v2914, 0
        %v3358 = vsel %vm2479, %v2915, 0
        %3360 = vmatprep.subr.mxu0 0.0
        %3361 = vmatpush1.msra.mxu0 0.0
        %3362 = vmatprep.subr.mxu0 0.0
        %3363 = vmatpush1.msra.mxu0 0.0
        %3364 = vmatprep.subr.mxu0 0.0
        %3365 = vmatpush1.msra.mxu0 0.0
        %3366 = vmatprep.subr.mxu0 0.0
        %3367 = vmatpush1.msra.mxu0 0.0
        %3368 = vmatprep.subr.mxu0 0.0
        %3369 = vmatpush1.msra.mxu0 0.0
        %3370 = vmatprep.subr.mxu0 0.0
        %3371 = vmatpush1.msra.mxu0 0.0
        %3372 = vmatprep.subr.mxu0 0.0
        %3373 = vmatpush1.msra.mxu0 0.0
        %3374 = vmatprep.subr.mxu0 0.0
        %3375 = vmatpush1.msra.mxu0 0.0
        %3376 = vmatprep.subr.mxu0 0.0
        %3377 = vmatpush1.msra.mxu0 %v1165
        %3378 = vmatprep.subr.mxu0 0.0
        %3379 = vmatpush1.msra.mxu0 %v1160
        %3380 = vmatprep.subr.mxu0 0.0
        %3381 = vmatpush1.msra.mxu0 %v1155
        %3382 = vmatprep.subr.mxu0 0.0
        %3383 = vmatpush1.msra.mxu0 %v1150
        %3384 = vmatprep.subr.mxu0 0.0
        %3385 = vmatpush1.msra.mxu0 %v1145
        %3386 = vmatprep.subr.mxu0 0.0
        %3387 = vmatpush1.msra.mxu0 %v1140
        %3388 = vmatprep.subr.mxu0 0.0
        %3389 = vmatpush1.msra.mxu0 %v1135
        %3390 = vmatprep.subr.mxu0 0.0
        %3391 = vmatpush1.msra.mxu0 %v1130
        %3392 = vmatprep.subr.mxu0 0.0
        %3393 = vmatpush2.msra.mxu0 0.0
        %3394 = vmatprep.subr.mxu0 0.0
        %3395 = vmatpush2.msra.mxu0 0.0
        %3396 = vmatprep.subr.mxu0 0.0
        %3397 = vmatpush2.msra.mxu0 0.0
        %3398 = vmatprep.subr.mxu0 0.0
        %3399 = vmatpush2.msra.mxu0 0.0
        %3400 = vmatprep.subr.mxu0 0.0
        %3401 = vmatpush2.msra.mxu0 0.0
        %3402 = vmatprep.subr.mxu0 0.0
        %3403 = vmatpush2.msra.mxu0 0.0
        %3404 = vmatprep.subr.mxu0 0.0
        %3405 = vmatpush2.msra.mxu0 0.0
        %3406 = vmatprep.subr.mxu0 0.0
        %3407 = vmatpush2.msra.mxu0 0.0
        %3408 = vmatprep.subr.mxu0 0.0
        %3409 = vmatpush2.msra.mxu0 0.0
        %3410 = vmatprep.subr.mxu0 0.0
        %3411 = vmatpush2.msra.mxu0 0.0
        %3412 = vmatprep.subr.mxu0 0.0
        %3413 = vmatpush2.msra.mxu0 0.0
        %3414 = vmatprep.subr.mxu0 0.0
        %3415 = vmatpush2.msra.mxu0 0.0
        %3416 = vmatprep.subr.mxu0 0.0
        %3417 = vmatpush2.msra.mxu0 0.0
        %3418 = vmatprep.subr.mxu0 0.0
        %3419 = vmatpush2.msra.mxu0 0.0
        %3420 = vmatprep.subr.mxu0 0.0
        %3421 = vmatpush2.msra.mxu0 0.0
        %3422 = vmatprep.subr.mxu0 0.0
        %3423 = vmatpush2.msra.mxu0 0.0
        %3424 = vmatprep.mubr.f32.mxu0 0.0
        %3425 = vmatmul.mubr.f32.gmra.mxu0 %v3349
        %v3426 = vpop.f32.mrf.mxu0
        %v3427 = vadd.f32 0.0, %v3426
        %v3428 = vpop.f32.mrf.mxu0
        %3429 = vmatprep.mubr.f32.mxu0 0.0
        %3430 = vmatmul.mubr.f32.gmra.mxu0 %v3352
        %v3431 = vpop.f32.mrf.mxu0
        %v3432 = vadd.f32 0.0, %v3431
        %v3433 = vpop.f32.mrf.mxu0
        %3434 = vmatprep.mubr.f32.mxu0 0.0
        %3435 = vmatmul.mubr.f32.gmra.mxu0 %v3355
        %v3436 = vpop.f32.mrf.mxu0
        %v3437 = vadd.f32 0.0, %v3436
        %v3438 = vpop.f32.mrf.mxu0
        %3439 = vmatprep.mubr.f32.mxu0 0.0
        %3440 = vmatmul.mubr.f32.gmra.mxu0 %v3358
        %v3441 = vpop.f32.mrf.mxu0
        %v3442 = vadd.f32 0.0, %v3441
        %v3443 = vpop.f32.mrf.mxu0
        %3444 = vdwg.mxu0
        %v3446 = vsel %vm2479, %v2916, 0
        %v3449 = vsel %vm2479, %v2917, 0
        %v3452 = vsel %vm2479, %v2918, 0
        %v3455 = vsel %vm2479, %v2919, 0
        %3457 = vmatprep.subr.mxu0 0.0
        %3458 = vmatpush1.msra.mxu0 0.0
        %3459 = vmatprep.subr.mxu0 0.0
        %3460 = vmatpush1.msra.mxu0 0.0
        %3461 = vmatprep.subr.mxu0 0.0
        %3462 = vmatpush1.msra.mxu0 0.0
        %3463 = vmatprep.subr.mxu0 0.0
        %3464 = vmatpush1.msra.mxu0 0.0
        %3465 = vmatprep.subr.mxu0 0.0
        %3466 = vmatpush1.msra.mxu0 0.0
        %3467 = vmatprep.subr.mxu0 0.0
        %3468 = vmatpush1.msra.mxu0 0.0
        %3469 = vmatprep.subr.mxu0 0.0
        %3470 = vmatpush1.msra.mxu0 0.0
        %3471 = vmatprep.subr.mxu0 0.0
        %3472 = vmatpush1.msra.mxu0 0.0
        %3473 = vmatprep.subr.mxu0 0.0
        %3474 = vmatpush1.msra.mxu0 %v1383
        %3475 = vmatprep.subr.mxu0 0.0
        %3476 = vmatpush1.msra.mxu0 %v1381
        %3477 = vmatprep.subr.mxu0 0.0
        %3478 = vmatpush1.msra.mxu0 %v1379
        %3479 = vmatprep.subr.mxu0 0.0
        %3480 = vmatpush1.msra.mxu0 %v1377
        %3481 = vmatprep.subr.mxu0 0.0
        %3482 = vmatpush1.msra.mxu0 %v1375
        %3483 = vmatprep.subr.mxu0 0.0
        %3484 = vmatpush1.msra.mxu0 %v1373
        %3485 = vmatprep.subr.mxu0 0.0
        %3486 = vmatpush1.msra.mxu0 %v1371
        %3487 = vmatprep.subr.mxu0 0.0
        %3488 = vmatpush1.msra.mxu0 %v1369
        %3489 = vmatprep.subr.mxu0 0.0
        %3490 = vmatpush2.msra.mxu0 0.0
        %3491 = vmatprep.subr.mxu0 0.0
        %3492 = vmatpush2.msra.mxu0 0.0
        %3493 = vmatprep.subr.mxu0 0.0
        %3494 = vmatpush2.msra.mxu0 0.0
        %3495 = vmatprep.subr.mxu0 0.0
        %3496 = vmatpush2.msra.mxu0 0.0
        %3497 = vmatprep.subr.mxu0 0.0
        %3498 = vmatpush2.msra.mxu0 0.0
        %3499 = vmatprep.subr.mxu0 0.0
        %3500 = vmatpush2.msra.mxu0 0.0
        %3501 = vmatprep.subr.mxu0 0.0
        %3502 = vmatpush2.msra.mxu0 0.0
        %3503 = vmatprep.subr.mxu0 0.0
        %3504 = vmatpush2.msra.mxu0 0.0
        %3505 = vmatprep.subr.mxu0 0.0
        %3506 = vmatpush2.msra.mxu0 0.0
        %3507 = vmatprep.subr.mxu0 0.0
        %3508 = vmatpush2.msra.mxu0 0.0
        %3509 = vmatprep.subr.mxu0 0.0
        %3510 = vmatpush2.msra.mxu0 0.0
        %3511 = vmatprep.subr.mxu0 0.0
        %3512 = vmatpush2.msra.mxu0 0.0
        %3513 = vmatprep.subr.mxu0 0.0
        %3514 = vmatpush2.msra.mxu0 0.0
        %3515 = vmatprep.subr.mxu0 0.0
        %3516 = vmatpush2.msra.mxu0 0.0
        %3517 = vmatprep.subr.mxu0 0.0
        %3518 = vmatpush2.msra.mxu0 0.0
        %3519 = vmatprep.subr.mxu0 0.0
        %3520 = vmatpush2.msra.mxu0 0.0
        %3521 = vmatprep.mubr.f32.mxu0 0.0
        %3522 = vmatmul.mubr.f32.gmra.mxu0 %v3446
        %v3523 = vpop.f32.mrf.mxu0
        %v3524 = vadd.f32 0.0, %v3523
        %v3525 = vpop.f32.mrf.mxu0
        %3526 = vmatprep.mubr.f32.mxu0 0.0
        %3527 = vmatmul.mubr.f32.gmra.mxu0 %v3449
        %v3528 = vpop.f32.mrf.mxu0
        %v3529 = vadd.f32 0.0, %v3528
        %v3530 = vpop.f32.mrf.mxu0
        %3531 = vmatprep.mubr.f32.mxu0 0.0
        %3532 = vmatmul.mubr.f32.gmra.mxu0 %v3452
        %v3533 = vpop.f32.mrf.mxu0
        %v3534 = vadd.f32 0.0, %v3533
        %v3535 = vpop.f32.mrf.mxu0
        %3536 = vmatprep.mubr.f32.mxu0 0.0
        %3537 = vmatmul.mubr.f32.gmra.mxu0 %v3455
        %v3538 = vpop.f32.mrf.mxu0
        %v3539 = vadd.f32 0.0, %v3538
        %v3540 = vpop.f32.mrf.mxu0
        %3541 = vdwg.mxu0
        %v3543 = vsel %vm2479, %v2920, 0
        %v3546 = vsel %vm2479, %v2921, 0
        %v3549 = vsel %vm2479, %v2922, 0
        %v3552 = vsel %vm2479, %v2923, 0
        %3554 = vmatprep.subr.mxu0 0.0
        %3555 = vmatpush1.msra.mxu0 0.0
        %3556 = vmatprep.subr.mxu0 0.0
        %3557 = vmatpush1.msra.mxu0 0.0
        %3558 = vmatprep.subr.mxu0 0.0
        %3559 = vmatpush1.msra.mxu0 0.0
        %3560 = vmatprep.subr.mxu0 0.0
        %3561 = vmatpush1.msra.mxu0 0.0
        %3562 = vmatprep.subr.mxu0 0.0
        %3563 = vmatpush1.msra.mxu0 0.0
        %3564 = vmatprep.subr.mxu0 0.0
        %3565 = vmatpush1.msra.mxu0 0.0
        %3566 = vmatprep.subr.mxu0 0.0
        %3567 = vmatpush1.msra.mxu0 0.0
        %3568 = vmatprep.subr.mxu0 0.0
        %3569 = vmatpush1.msra.mxu0 0.0
        %3570 = vmatprep.subr.mxu0 0.0
        %3571 = vmatpush1.msra.mxu0 %v1431
        %3572 = vmatprep.subr.mxu0 0.0
        %3573 = vmatpush1.msra.mxu0 %v1429
        %3574 = vmatprep.subr.mxu0 0.0
        %3575 = vmatpush1.msra.mxu0 %v1427
        %3576 = vmatprep.subr.mxu0 0.0
        %3577 = vmatpush1.msra.mxu0 %v1425
        %3578 = vmatprep.subr.mxu0 0.0
        %3579 = vmatpush1.msra.mxu0 %v1423
        %3580 = vmatprep.subr.mxu0 0.0
        %3581 = vmatpush1.msra.mxu0 %v1421
        %3582 = vmatprep.subr.mxu0 0.0
        %3583 = vmatpush1.msra.mxu0 %v1419
        %3584 = vmatprep.subr.mxu0 0.0
        %3585 = vmatpush1.msra.mxu0 %v1417
        %3586 = vmatprep.subr.mxu0 0.0
        %3587 = vmatpush2.msra.mxu0 0.0
        %3588 = vmatprep.subr.mxu0 0.0
        %3589 = vmatpush2.msra.mxu0 0.0
        %3590 = vmatprep.subr.mxu0 0.0
        %3591 = vmatpush2.msra.mxu0 0.0
        %3592 = vmatprep.subr.mxu0 0.0
        %3593 = vmatpush2.msra.mxu0 0.0
        %3594 = vmatprep.subr.mxu0 0.0
        %3595 = vmatpush2.msra.mxu0 0.0
        %3596 = vmatprep.subr.mxu0 0.0
        %3597 = vmatpush2.msra.mxu0 0.0
        %3598 = vmatprep.subr.mxu0 0.0
        %3599 = vmatpush2.msra.mxu0 0.0
        %3600 = vmatprep.subr.mxu0 0.0
        %3601 = vmatpush2.msra.mxu0 0.0
        %3602 = vmatprep.subr.mxu0 0.0
        %3603 = vmatpush2.msra.mxu0 0.0
        %3604 = vmatprep.subr.mxu0 0.0
        %3605 = vmatpush2.msra.mxu0 0.0
        %3606 = vmatprep.subr.mxu0 0.0
        %3607 = vmatpush2.msra.mxu0 0.0
        %3608 = vmatprep.subr.mxu0 0.0
        %3609 = vmatpush2.msra.mxu0 0.0
        %3610 = vmatprep.subr.mxu0 0.0
        %3611 = vmatpush2.msra.mxu0 0.0
        %3612 = vmatprep.subr.mxu0 0.0
        %3613 = vmatpush2.msra.mxu0 0.0
        %3614 = vmatprep.subr.mxu0 0.0
        %3615 = vmatpush2.msra.mxu0 0.0
        %3616 = vmatprep.subr.mxu0 0.0
        %3617 = vmatpush2.msra.mxu0 0.0
        %3618 = vmatprep.mubr.f32.mxu0 0.0
        %3619 = vmatmul.mubr.f32.gmra.mxu0 %v3543
        %v3620 = vpop.f32.mrf.mxu0
        %v3621 = vadd.f32 0.0, %v3620
        %v3622 = vpop.f32.mrf.mxu0
        %3623 = vmatprep.mubr.f32.mxu0 0.0
        %3624 = vmatmul.mubr.f32.gmra.mxu0 %v3546
        %v3625 = vpop.f32.mrf.mxu0
        %v3626 = vadd.f32 0.0, %v3625
        %v3627 = vpop.f32.mrf.mxu0
        %3628 = vmatprep.mubr.f32.mxu0 0.0
        %3629 = vmatmul.mubr.f32.gmra.mxu0 %v3549
        %v3630 = vpop.f32.mrf.mxu0
        %v3631 = vadd.f32 0.0, %v3630
        %v3632 = vpop.f32.mrf.mxu0
        %3633 = vmatprep.mubr.f32.mxu0 0.0
        %3634 = vmatmul.mubr.f32.gmra.mxu0 %v3552
        %v3635 = vpop.f32.mrf.mxu0
        %v3636 = vadd.f32 0.0, %v3635
        %v3637 = vpop.f32.mrf.mxu0
        %3638 = vdwg.mxu0
        %v3640 = vsel %vm2479, %v2924, 0
        %v3643 = vsel %vm2479, %v2925, 0
        %v3646 = vsel %vm2479, %v2926, 0
        %v3649 = vsel %vm2479, %v2927, 0
        %3651 = vmatprep.subr.mxu0 0.0
        %3652 = vmatpush1.msra.mxu0 0.0
        %3653 = vmatprep.subr.mxu0 0.0
        %3654 = vmatpush1.msra.mxu0 0.0
        %3655 = vmatprep.subr.mxu0 0.0
        %3656 = vmatpush1.msra.mxu0 0.0
        %3657 = vmatprep.subr.mxu0 0.0
        %3658 = vmatpush1.msra.mxu0 0.0
        %3659 = vmatprep.subr.mxu0 0.0
        %3660 = vmatpush1.msra.mxu0 0.0
        %3661 = vmatprep.subr.mxu0 0.0
        %3662 = vmatpush1.msra.mxu0 0.0
        %3663 = vmatprep.subr.mxu0 0.0
        %3664 = vmatpush1.msra.mxu0 0.0
        %3665 = vmatprep.subr.mxu0 0.0
        %3666 = vmatpush1.msra.mxu0 0.0
        %3667 = vmatprep.subr.mxu0 0.0
        %3668 = vmatpush1.msra.mxu0 %v1479
        %3669 = vmatprep.subr.mxu0 0.0
        %3670 = vmatpush1.msra.mxu0 %v1477
        %3671 = vmatprep.subr.mxu0 0.0
        %3672 = vmatpush1.msra.mxu0 %v1475
        %3673 = vmatprep.subr.mxu0 0.0
        %3674 = vmatpush1.msra.mxu0 %v1473
        %3675 = vmatprep.subr.mxu0 0.0
        %3676 = vmatpush1.msra.mxu0 %v1471
        %3677 = vmatprep.subr.mxu0 0.0
        %3678 = vmatpush1.msra.mxu0 %v1469
        %3679 = vmatprep.subr.mxu0 0.0
        %3680 = vmatpush1.msra.mxu0 %v1467
        %3681 = vmatprep.subr.mxu0 0.0
        %3682 = vmatpush1.msra.mxu0 %v1465
        %3683 = vmatprep.subr.mxu0 0.0
        %3684 = vmatpush2.msra.mxu0 0.0
        %3685 = vmatprep.subr.mxu0 0.0
        %3686 = vmatpush2.msra.mxu0 0.0
        %3687 = vmatprep.subr.mxu0 0.0
        %3688 = vmatpush2.msra.mxu0 0.0
        %3689 = vmatprep.subr.mxu0 0.0
        %3690 = vmatpush2.msra.mxu0 0.0
        %3691 = vmatprep.subr.mxu0 0.0
        %3692 = vmatpush2.msra.mxu0 0.0
        %3693 = vmatprep.subr.mxu0 0.0
        %3694 = vmatpush2.msra.mxu0 0.0
        %3695 = vmatprep.subr.mxu0 0.0
        %3696 = vmatpush2.msra.mxu0 0.0
        %3697 = vmatprep.subr.mxu0 0.0
        %3698 = vmatpush2.msra.mxu0 0.0
        %3699 = vmatprep.subr.mxu0 0.0
        %3700 = vmatpush2.msra.mxu0 0.0
        %3701 = vmatprep.subr.mxu0 0.0
        %3702 = vmatpush2.msra.mxu0 0.0
        %3703 = vmatprep.subr.mxu0 0.0
        %3704 = vmatpush2.msra.mxu0 0.0
        %3705 = vmatprep.subr.mxu0 0.0
        %3706 = vmatpush2.msra.mxu0 0.0
        %3707 = vmatprep.subr.mxu0 0.0
        %3708 = vmatpush2.msra.mxu0 0.0
        %3709 = vmatprep.subr.mxu0 0.0
        %3710 = vmatpush2.msra.mxu0 0.0
        %3711 = vmatprep.subr.mxu0 0.0
        %3712 = vmatpush2.msra.mxu0 0.0
        %3713 = vmatprep.subr.mxu0 0.0
        %3714 = vmatpush2.msra.mxu0 0.0
        %3715 = vmatprep.mubr.f32.mxu0 0.0
        %3716 = vmatmul.mubr.f32.gmra.mxu0 %v3640
        %v3717 = vpop.f32.mrf.mxu0
        %v3718 = vadd.f32 0.0, %v3717
        %v3719 = vpop.f32.mrf.mxu0
        %3720 = vmatprep.mubr.f32.mxu0 0.0
        %3721 = vmatmul.mubr.f32.gmra.mxu0 %v3643
        %v3722 = vpop.f32.mrf.mxu0
        %v3723 = vadd.f32 0.0, %v3722
        %v3724 = vpop.f32.mrf.mxu0
        %3725 = vmatprep.mubr.f32.mxu0 0.0
        %3726 = vmatmul.mubr.f32.gmra.mxu0 %v3646
        %v3727 = vpop.f32.mrf.mxu0
        %v3728 = vadd.f32 0.0, %v3727
        %v3729 = vpop.f32.mrf.mxu0
        %3730 = vmatprep.mubr.f32.mxu0 0.0
        %3731 = vmatmul.mubr.f32.gmra.mxu0 %v3649
        %v3732 = vpop.f32.mrf.mxu0
        %v3733 = vadd.f32 0.0, %v3732
        %v3734 = vpop.f32.mrf.mxu0
        %3735 = vdwg.mxu0
        %v3736 = vld [vmem:[%s7] sm:$0xff]
        %v3737 = vld [vmem:[%s7 + $0x8] sm:$0xff]
        %v3738 = vld [vmem:[%s7 + $0x10] sm:$0xff]
        %v3739 = vld [vmem:[%s7 + $0x18] sm:$0xff]
        %v3741 = vsel %vm1496, %v3136, 0
        %v3744 = vsel %vm1496, %v3141, 0
        %v3747 = vsel %vm1496, %v3146, 0
        %v3750 = vsel %vm1496, %v3151, 0
        %v3753 = vsel %vm1496, %v3524, 0
        %v3756 = vsel %vm1496, %v3529, 0
        %v3759 = vsel %vm1496, %v3534, 0
        %v3762 = vsel %vm1496, %v3539, 0
        %3764 = vmatprep.subr.mxu0 0.0
        %3765 = vmatpush1.msra.mxu0 0.0
        %3766 = vmatprep.subr.mxu0 0.0
        %3767 = vmatpush1.msra.mxu0 0.0
        %3768 = vmatprep.subr.mxu0 0.0
        %3769 = vmatpush1.msra.mxu0 0.0
        %3770 = vmatprep.subr.mxu0 0.0
        %3771 = vmatpush1.msra.mxu0 0.0
        %3772 = vmatprep.subr.mxu0 0.0
        %3773 = vmatpush1.msra.mxu0 0.0
        %3774 = vmatprep.subr.mxu0 0.0
        %3775 = vmatpush1.msra.mxu0 0.0
        %3776 = vmatprep.subr.mxu0 0.0
        %3777 = vmatpush1.msra.mxu0 0.0
        %3778 = vmatprep.subr.mxu0 0.0
        %3779 = vmatpush1.msra.mxu0 0.0
        %3780 = vmatprep.subr.mxu0 0.0
        %3781 = vmatpush1.msra.mxu0 0.0
        %3782 = vmatprep.subr.mxu0 0.0
        %3783 = vmatpush1.msra.mxu0 0.0
        %3784 = vmatprep.subr.mxu0 0.0
        %3785 = vmatpush1.msra.mxu0 0.0
        %3786 = vmatprep.subr.mxu0 0.0
        %3787 = vmatpush1.msra.mxu0 0.0
        %3788 = vmatprep.subr.mxu0 0.0
        %3789 = vmatpush1.msra.mxu0 0.0
        %3790 = vmatprep.subr.mxu0 0.0
        %3791 = vmatpush1.msra.mxu0 0.0
        %3792 = vmatprep.subr.mxu0 0.0
        %3793 = vmatpush1.msra.mxu0 0.0
        %3794 = vmatprep.subr.mxu0 0.0
        %3795 = vmatpush1.msra.mxu0 %v3737
        %3796 = vmatprep.subr.mxu0 0.0
        %3797 = vmatpush2.msra.mxu0 0.0
        %3798 = vmatprep.subr.mxu0 0.0
        %3799 = vmatpush2.msra.mxu0 0.0
        %3800 = vmatprep.subr.mxu0 0.0
        %3801 = vmatpush2.msra.mxu0 0.0
        %3802 = vmatprep.subr.mxu0 0.0
        %3803 = vmatpush2.msra.mxu0 0.0
        %3804 = vmatprep.subr.mxu0 0.0
        %3805 = vmatpush2.msra.mxu0 0.0
        %3806 = vmatprep.subr.mxu0 0.0
        %3807 = vmatpush2.msra.mxu0 0.0
        %3808 = vmatprep.subr.mxu0 0.0
        %3809 = vmatpush2.msra.mxu0 0.0
        %3810 = vmatprep.subr.mxu0 0.0
        %3811 = vmatpush2.msra.mxu0 0.0
        %3812 = vmatprep.subr.mxu0 0.0
        %3813 = vmatpush2.msra.mxu0 0.0
        %3814 = vmatprep.subr.mxu0 0.0
        %3815 = vmatpush2.msra.mxu0 0.0
        %3816 = vmatprep.subr.mxu0 0.0
        %3817 = vmatpush2.msra.mxu0 0.0
        %3818 = vmatprep.subr.mxu0 0.0
        %3819 = vmatpush2.msra.mxu0 0.0
        %3820 = vmatprep.subr.mxu0 0.0
        %3821 = vmatpush2.msra.mxu0 0.0
        %3822 = vmatprep.subr.mxu0 0.0
        %3823 = vmatpush2.msra.mxu0 0.0
        %3824 = vmatprep.subr.mxu0 0.0
        %3825 = vmatpush2.msra.mxu0 0.0
        %3826 = vmatprep.subr.mxu0 0.0
        %3827 = vmatpush2.msra.mxu0 0.0
        %3828 = vmatprep.mubr.f32.mxu0 0.0
        %3829 = vmatmul.mubr.f32.gmra.mxu0 %v3741
        %v3830 = vpop.f32.mrf.mxu0
        %v3831 = vadd.f32 0.0, %v3830
        %v3832 = vpop.f32.mrf.mxu0
        %3833 = vmatprep.mubr.f32.mxu0 0.0
        %3834 = vmatmul.mubr.f32.gmra.mxu0 %v3744
        %v3835 = vpop.f32.mrf.mxu0
        %v3836 = vadd.f32 0.0, %v3835
        %v3837 = vpop.f32.mrf.mxu0
        %3838 = vmatprep.mubr.f32.mxu0 0.0
        %3839 = vmatmul.mubr.f32.gmra.mxu0 %v3747
        %v3840 = vpop.f32.mrf.mxu0
        %v3841 = vadd.f32 0.0, %v3840
        %v3842 = vpop.f32.mrf.mxu0
        %3843 = vmatprep.mubr.f32.mxu0 0.0
        %3844 = vmatmul.mubr.f32.gmra.mxu0 %v3750
        %v3845 = vpop.f32.mrf.mxu0
        %v3846 = vadd.f32 0.0, %v3845
        %v3847 = vpop.f32.mrf.mxu0
        %3848 = vmatprep.mubr.f32.mxu0 0.0
        %3849 = vmatmul.mubr.f32.gmra.mxu0 %v3753
        %v3850 = vpop.f32.mrf.mxu0
        %v3851 = vadd.f32 0.0, %v3850
        %v3852 = vpop.f32.mrf.mxu0
        %3853 = vmatprep.mubr.f32.mxu0 0.0
        %3854 = vmatmul.mubr.f32.gmra.mxu0 %v3756
        %v3855 = vpop.f32.mrf.mxu0
        %v3856 = vadd.f32 0.0, %v3855
        %v3857 = vpop.f32.mrf.mxu0
        %3858 = vmatprep.mubr.f32.mxu0 0.0
        %3859 = vmatmul.mubr.f32.gmra.mxu0 %v3759
        %v3860 = vpop.f32.mrf.mxu0
        %v3861 = vadd.f32 0.0, %v3860
        %v3862 = vpop.f32.mrf.mxu0
        %3863 = vmatprep.mubr.f32.mxu0 0.0
        %3864 = vmatmul.mubr.f32.gmra.mxu0 %v3762
        %v3865 = vpop.f32.mrf.mxu0
        %v3866 = vadd.f32 0.0, %v3865
        %v3867 = vpop.f32.mrf.mxu0
        %3868 = vdwg.mxu0
        %v3870 = vsel %vm1496, %v3039, 0
        %v3873 = vsel %vm1496, %v3044, 0
        %v3876 = vsel %vm1496, %v3049, 0
        %v3879 = vsel %vm1496, %v3054, 0
        %v3882 = vsel %vm1496, %v3427, 0
        %v3885 = vsel %vm1496, %v3432, 0
        %v3888 = vsel %vm1496, %v3437, 0
        %v3891 = vsel %vm1496, %v3442, 0
        %3893 = vmatprep.subr.mxu0 0.0
        %3894 = vmatpush1.msra.mxu0 0.0
        %3895 = vmatprep.subr.mxu0 0.0
        %3896 = vmatpush1.msra.mxu0 0.0
        %3897 = vmatprep.subr.mxu0 0.0
        %3898 = vmatpush1.msra.mxu0 0.0
        %3899 = vmatprep.subr.mxu0 0.0
        %3900 = vmatpush1.msra.mxu0 0.0
        %3901 = vmatprep.subr.mxu0 0.0
        %3902 = vmatpush1.msra.mxu0 0.0
        %3903 = vmatprep.subr.mxu0 0.0
        %3904 = vmatpush1.msra.mxu0 0.0
        %3905 = vmatprep.subr.mxu0 0.0
        %3906 = vmatpush1.msra.mxu0 0.0
        %3907 = vmatprep.subr.mxu0 0.0
        %3908 = vmatpush1.msra.mxu0 0.0
        %3909 = vmatprep.subr.mxu0 0.0
        %3910 = vmatpush1.msra.mxu0 0.0
        %3911 = vmatprep.subr.mxu0 0.0
        %3912 = vmatpush1.msra.mxu0 0.0
        %3913 = vmatprep.subr.mxu0 0.0
        %3914 = vmatpush1.msra.mxu0 0.0
        %3915 = vmatprep.subr.mxu0 0.0
        %3916 = vmatpush1.msra.mxu0 0.0
        %3917 = vmatprep.subr.mxu0 0.0
        %3918 = vmatpush1.msra.mxu0 0.0
        %3919 = vmatprep.subr.mxu0 0.0
        %3920 = vmatpush1.msra.mxu0 0.0
        %3921 = vmatprep.subr.mxu0 0.0
        %3922 = vmatpush1.msra.mxu0 0.0
        %3923 = vmatprep.subr.mxu0 0.0
        %3924 = vmatpush1.msra.mxu0 %v3736
        %3925 = vmatprep.subr.mxu0 0.0
        %3926 = vmatpush2.msra.mxu0 0.0
        %3927 = vmatprep.subr.mxu0 0.0
        %3928 = vmatpush2.msra.mxu0 0.0
        %3929 = vmatprep.subr.mxu0 0.0
        %3930 = vmatpush2.msra.mxu0 0.0
        %3931 = vmatprep.subr.mxu0 0.0
        %3932 = vmatpush2.msra.mxu0 0.0
        %3933 = vmatprep.subr.mxu0 0.0
        %3934 = vmatpush2.msra.mxu0 0.0
        %3935 = vmatprep.subr.mxu0 0.0
        %3936 = vmatpush2.msra.mxu0 0.0
        %3937 = vmatprep.subr.mxu0 0.0
        %3938 = vmatpush2.msra.mxu0 0.0
        %3939 = vmatprep.subr.mxu0 0.0
        %3940 = vmatpush2.msra.mxu0 0.0
        %3941 = vmatprep.subr.mxu0 0.0
        %3942 = vmatpush2.msra.mxu0 0.0
        %3943 = vmatprep.subr.mxu0 0.0
        %3944 = vmatpush2.msra.mxu0 0.0
        %3945 = vmatprep.subr.mxu0 0.0
        %3946 = vmatpush2.msra.mxu0 0.0
        %3947 = vmatprep.subr.mxu0 0.0
        %3948 = vmatpush2.msra.mxu0 0.0
        %3949 = vmatprep.subr.mxu0 0.0
        %3950 = vmatpush2.msra.mxu0 0.0
        %3951 = vmatprep.subr.mxu0 0.0
        %3952 = vmatpush2.msra.mxu0 0.0
        %3953 = vmatprep.subr.mxu0 0.0
        %3954 = vmatpush2.msra.mxu0 0.0
        %3955 = vmatprep.subr.mxu0 0.0
        %3956 = vmatpush2.msra.mxu0 0.0
        %3957 = vmatprep.mubr.f32.mxu0 0.0
        %3958 = vmatmul.mubr.f32.gmra.mxu0 %v3870
        %v3959 = vpop.f32.mrf.mxu0
        %v3960 = vadd.f32 %v3831, %v3959
        %v3961 = vpop.f32.mrf.mxu0
        %3962 = vmatprep.mubr.f32.mxu0 0.0
        %3963 = vmatmul.mubr.f32.gmra.mxu0 %v3873
        %v3964 = vpop.f32.mrf.mxu0
        %v3965 = vadd.f32 %v3836, %v3964
        %v3966 = vpop.f32.mrf.mxu0
        %3967 = vmatprep.mubr.f32.mxu0 0.0
        %3968 = vmatmul.mubr.f32.gmra.mxu0 %v3876
        %v3969 = vpop.f32.mrf.mxu0
        %v3970 = vadd.f32 %v3841, %v3969
        %v3971 = vpop.f32.mrf.mxu0
        %3972 = vmatprep.mubr.f32.mxu0 0.0
        %3973 = vmatmul.mubr.f32.gmra.mxu0 %v3879
        %v3974 = vpop.f32.mrf.mxu0
        %v3975 = vadd.f32 %v3846, %v3974
        %v3976 = vpop.f32.mrf.mxu0
        %3977 = vmatprep.mubr.f32.mxu0 0.0
        %3978 = vmatmul.mubr.f32.gmra.mxu0 %v3882
        %v3979 = vpop.f32.mrf.mxu0
        %v3980 = vadd.f32 %v3851, %v3979
        %v3981 = vpop.f32.mrf.mxu0
        %3982 = vmatprep.mubr.f32.mxu0 0.0
        %3983 = vmatmul.mubr.f32.gmra.mxu0 %v3885
        %v3984 = vpop.f32.mrf.mxu0
        %v3985 = vadd.f32 %v3856, %v3984
        %v3986 = vpop.f32.mrf.mxu0
        %3987 = vmatprep.mubr.f32.mxu0 0.0
        %3988 = vmatmul.mubr.f32.gmra.mxu0 %v3888
        %v3989 = vpop.f32.mrf.mxu0
        %v3990 = vadd.f32 %v3861, %v3989
        %v3991 = vpop.f32.mrf.mxu0
        %3992 = vmatprep.mubr.f32.mxu0 0.0
        %3993 = vmatmul.mubr.f32.gmra.mxu0 %v3891
        %v3994 = vpop.f32.mrf.mxu0
        %v3995 = vadd.f32 %v3866, %v3994
        %v3996 = vpop.f32.mrf.mxu0
        %3997 = vdwg.mxu0
        %v3999 = vsel %vm1496, %v3233, 0
        %v4002 = vsel %vm1496, %v3238, 0
        %v4005 = vsel %vm1496, %v3243, 0
        %v4008 = vsel %vm1496, %v3248, 0
        %v4011 = vsel %vm1496, %v3621, 0
        %v4014 = vsel %vm1496, %v3626, 0
        %v4017 = vsel %vm1496, %v3631, 0
        %v4020 = vsel %vm1496, %v3636, 0
        %4022 = vmatprep.subr.mxu0 0.0
        %4023 = vmatpush1.msra.mxu0 0.0
        %4024 = vmatprep.subr.mxu0 0.0
        %4025 = vmatpush1.msra.mxu0 0.0
        %4026 = vmatprep.subr.mxu0 0.0
        %4027 = vmatpush1.msra.mxu0 0.0
        %4028 = vmatprep.subr.mxu0 0.0
        %4029 = vmatpush1.msra.mxu0 0.0
        %4030 = vmatprep.subr.mxu0 0.0
        %4031 = vmatpush1.msra.mxu0 0.0
        %4032 = vmatprep.subr.mxu0 0.0
        %4033 = vmatpush1.msra.mxu0 0.0
        %4034 = vmatprep.subr.mxu0 0.0
        %4035 = vmatpush1.msra.mxu0 0.0
        %4036 = vmatprep.subr.mxu0 0.0
        %4037 = vmatpush1.msra.mxu0 0.0
        %4038 = vmatprep.subr.mxu0 0.0
        %4039 = vmatpush1.msra.mxu0 0.0
        %4040 = vmatprep.subr.mxu0 0.0
        %4041 = vmatpush1.msra.mxu0 0.0
        %4042 = vmatprep.subr.mxu0 0.0
        %4043 = vmatpush1.msra.mxu0 0.0
        %4044 = vmatprep.subr.mxu0 0.0
        %4045 = vmatpush1.msra.mxu0 0.0
        %4046 = vmatprep.subr.mxu0 0.0
        %4047 = vmatpush1.msra.mxu0 0.0
        %4048 = vmatprep.subr.mxu0 0.0
        %4049 = vmatpush1.msra.mxu0 0.0
        %4050 = vmatprep.subr.mxu0 0.0
        %4051 = vmatpush1.msra.mxu0 0.0
        %4052 = vmatprep.subr.mxu0 0.0
        %4053 = vmatpush1.msra.mxu0 %v3738
        %4054 = vmatprep.subr.mxu0 0.0
        %4055 = vmatpush2.msra.mxu0 0.0
        %4056 = vmatprep.subr.mxu0 0.0
        %4057 = vmatpush2.msra.mxu0 0.0
        %4058 = vmatprep.subr.mxu0 0.0
        %4059 = vmatpush2.msra.mxu0 0.0
        %4060 = vmatprep.subr.mxu0 0.0
        %4061 = vmatpush2.msra.mxu0 0.0
        %4062 = vmatprep.subr.mxu0 0.0
        %4063 = vmatpush2.msra.mxu0 0.0
        %4064 = vmatprep.subr.mxu0 0.0
        %4065 = vmatpush2.msra.mxu0 0.0
        %4066 = vmatprep.subr.mxu0 0.0
        %4067 = vmatpush2.msra.mxu0 0.0
        %4068 = vmatprep.subr.mxu0 0.0
        %4069 = vmatpush2.msra.mxu0 0.0
        %4070 = vmatprep.subr.mxu0 0.0
        %4071 = vmatpush2.msra.mxu0 0.0
        %4072 = vmatprep.subr.mxu0 0.0
        %4073 = vmatpush2.msra.mxu0 0.0
        %4074 = vmatprep.subr.mxu0 0.0
        %4075 = vmatpush2.msra.mxu0 0.0
        %4076 = vmatprep.subr.mxu0 0.0
        %4077 = vmatpush2.msra.mxu0 0.0
        %4078 = vmatprep.subr.mxu0 0.0
        %4079 = vmatpush2.msra.mxu0 0.0
        %4080 = vmatprep.subr.mxu0 0.0
        %4081 = vmatpush2.msra.mxu0 0.0
        %4082 = vmatprep.subr.mxu0 0.0
        %4083 = vmatpush2.msra.mxu0 0.0
        %4084 = vmatprep.subr.mxu0 0.0
        %4085 = vmatpush2.msra.mxu0 0.0
        %4086 = vmatprep.mubr.f32.mxu0 0.0
        %4087 = vmatmul.mubr.f32.gmra.mxu0 %v3999
        %v4088 = vpop.f32.mrf.mxu0
        %v4089 = vadd.f32 0.0, %v4088
        %v4090 = vpop.f32.mrf.mxu0
        %4091 = vmatprep.mubr.f32.mxu0 0.0
        %4092 = vmatmul.mubr.f32.gmra.mxu0 %v4002
        %v4093 = vpop.f32.mrf.mxu0
        %v4094 = vadd.f32 0.0, %v4093
        %v4095 = vpop.f32.mrf.mxu0
        %4096 = vmatprep.mubr.f32.mxu0 0.0
        %4097 = vmatmul.mubr.f32.gmra.mxu0 %v4005
        %v4098 = vpop.f32.mrf.mxu0
        %v4099 = vadd.f32 0.0, %v4098
        %v4100 = vpop.f32.mrf.mxu0
        %4101 = vmatprep.mubr.f32.mxu0 0.0
        %4102 = vmatmul.mubr.f32.gmra.mxu0 %v4008
        %v4103 = vpop.f32.mrf.mxu0
        %v4104 = vadd.f32 0.0, %v4103
        %v4105 = vpop.f32.mrf.mxu0
        %4106 = vmatprep.mubr.f32.mxu0 0.0
        %4107 = vmatmul.mubr.f32.gmra.mxu0 %v4011
        %v4108 = vpop.f32.mrf.mxu0
        %v4109 = vadd.f32 0.0, %v4108
        %v4110 = vpop.f32.mrf.mxu0
        %4111 = vmatprep.mubr.f32.mxu0 0.0
        %4112 = vmatmul.mubr.f32.gmra.mxu0 %v4014
        %v4113 = vpop.f32.mrf.mxu0
        %v4114 = vadd.f32 0.0, %v4113
        %v4115 = vpop.f32.mrf.mxu0
        %4116 = vmatprep.mubr.f32.mxu0 0.0
        %4117 = vmatmul.mubr.f32.gmra.mxu0 %v4017
        %v4118 = vpop.f32.mrf.mxu0
        %v4119 = vadd.f32 0.0, %v4118
        %v4120 = vpop.f32.mrf.mxu0
        %4121 = vmatprep.mubr.f32.mxu0 0.0
        %4122 = vmatmul.mubr.f32.gmra.mxu0 %v4020
        %v4123 = vpop.f32.mrf.mxu0
        %v4124 = vadd.f32 0.0, %v4123
        %v4125 = vpop.f32.mrf.mxu0
        %4126 = vdwg.mxu0
        %v4127 = vadd.f32 %v3960, %v4089
        %v4128 = vadd.f32 %v3965, %v4094
        %v4129 = vadd.f32 %v3970, %v4099
        %v4130 = vadd.f32 %v3975, %v4104
        %v4131 = vadd.f32 %v3980, %v4109
        %v4132 = vadd.f32 %v3985, %v4114
        %v4133 = vadd.f32 %v3990, %v4119
        %v4134 = vadd.f32 %v3995, %v4124
        %v4136 = vsel %vm1496, %v3330, 0
        %v4139 = vsel %vm1496, %v3335, 0
        %v4142 = vsel %vm1496, %v3340, 0
        %v4145 = vsel %vm1496, %v3345, 0
        %v4148 = vsel %vm1496, %v3718, 0
        %v4151 = vsel %vm1496, %v3723, 0
        %v4154 = vsel %vm1496, %v3728, 0
        %v4157 = vsel %vm1496, %v3733, 0
        %4159 = vmatprep.subr.mxu0 0.0
        %4160 = vmatpush1.msra.mxu0 0.0
        %4161 = vmatprep.subr.mxu0 0.0
        %4162 = vmatpush1.msra.mxu0 0.0
        %4163 = vmatprep.subr.mxu0 0.0
        %4164 = vmatpush1.msra.mxu0 0.0
        %4165 = vmatprep.subr.mxu0 0.0
        %4166 = vmatpush1.msra.mxu0 0.0
        %4167 = vmatprep.subr.mxu0 0.0
        %4168 = vmatpush1.msra.mxu0 0.0
        %4169 = vmatprep.subr.mxu0 0.0
        %4170 = vmatpush1.msra.mxu0 0.0
        %4171 = vmatprep.subr.mxu0 0.0
        %4172 = vmatpush1.msra.mxu0 0.0
        %4173 = vmatprep.subr.mxu0 0.0
        %4174 = vmatpush1.msra.mxu0 0.0
        %4175 = vmatprep.subr.mxu0 0.0
        %4176 = vmatpush1.msra.mxu0 0.0
        %4177 = vmatprep.subr.mxu0 0.0
        %4178 = vmatpush1.msra.mxu0 0.0
        %4179 = vmatprep.subr.mxu0 0.0
        %4180 = vmatpush1.msra.mxu0 0.0
        %4181 = vmatprep.subr.mxu0 0.0
        %4182 = vmatpush1.msra.mxu0 0.0
        %4183 = vmatprep.subr.mxu0 0.0
        %4184 = vmatpush1.msra.mxu0 0.0
        %4185 = vmatprep.subr.mxu0 0.0
        %4186 = vmatpush1.msra.mxu0 0.0
        %4187 = vmatprep.subr.mxu0 0.0
        %4188 = vmatpush1.msra.mxu0 0.0
        %4189 = vmatprep.subr.mxu0 0.0
        %4190 = vmatpush1.msra.mxu0 %v3739
        %4191 = vmatprep.subr.mxu0 0.0
        %4192 = vmatpush2.msra.mxu0 0.0
        %4193 = vmatprep.subr.mxu0 0.0
        %4194 = vmatpush2.msra.mxu0 0.0
        %4195 = vmatprep.subr.mxu0 0.0
        %4196 = vmatpush2.msra.mxu0 0.0
        %4197 = vmatprep.subr.mxu0 0.0
        %4198 = vmatpush2.msra.mxu0 0.0
        %4199 = vmatprep.subr.mxu0 0.0
        %4200 = vmatpush2.msra.mxu0 0.0
        %4201 = vmatprep.subr.mxu0 0.0
        %4202 = vmatpush2.msra.mxu0 0.0
        %4203 = vmatprep.subr.mxu0 0.0
        %4204 = vmatpush2.msra.mxu0 0.0
        %4205 = vmatprep.subr.mxu0 0.0
        %4206 = vmatpush2.msra.mxu0 0.0
        %4207 = vmatprep.subr.mxu0 0.0
        %4208 = vmatpush2.msra.mxu0 0.0
        %4209 = vmatprep.subr.mxu0 0.0
        %4210 = vmatpush2.msra.mxu0 0.0
        %4211 = vmatprep.subr.mxu0 0.0
        %4212 = vmatpush2.msra.mxu0 0.0
        %4213 = vmatprep.subr.mxu0 0.0
        %4214 = vmatpush2.msra.mxu0 0.0
        %4215 = vmatprep.subr.mxu0 0.0
        %4216 = vmatpush2.msra.mxu0 0.0
        %4217 = vmatprep.subr.mxu0 0.0
        %4218 = vmatpush2.msra.mxu0 0.0
        %4219 = vmatprep.subr.mxu0 0.0
        %4220 = vmatpush2.msra.mxu0 0.0
        %4221 = vmatprep.subr.mxu0 0.0
        %4222 = vmatpush2.msra.mxu0 0.0
        %4223 = vmatprep.mubr.f32.mxu0 0.0
        %4224 = vmatmul.mubr.f32.gmra.mxu0 %v4136
        %v4225 = vpop.f32.mrf.mxu0
        %v4226 = vadd.f32 0.0, %v4225
        %v4227 = vpop.f32.mrf.mxu0
        %4228 = vmatprep.mubr.f32.mxu0 0.0
        %4229 = vmatmul.mubr.f32.gmra.mxu0 %v4139
        %v4230 = vpop.f32.mrf.mxu0
        %v4231 = vadd.f32 0.0, %v4230
        %v4232 = vpop.f32.mrf.mxu0
        %4233 = vmatprep.mubr.f32.mxu0 0.0
        %4234 = vmatmul.mubr.f32.gmra.mxu0 %v4142
        %v4235 = vpop.f32.mrf.mxu0
        %v4236 = vadd.f32 0.0, %v4235
        %v4237 = vpop.f32.mrf.mxu0
        %4238 = vmatprep.mubr.f32.mxu0 0.0
        %4239 = vmatmul.mubr.f32.gmra.mxu0 %v4145
        %v4240 = vpop.f32.mrf.mxu0
        %v4241 = vadd.f32 0.0, %v4240
        %v4242 = vpop.f32.mrf.mxu0
        %4243 = vmatprep.mubr.f32.mxu0 0.0
        %4244 = vmatmul.mubr.f32.gmra.mxu0 %v4148
        %v4245 = vpop.f32.mrf.mxu0
        %v4246 = vadd.f32 0.0, %v4245
        %v4247 = vpop.f32.mrf.mxu0
        %4248 = vmatprep.mubr.f32.mxu0 0.0
        %4249 = vmatmul.mubr.f32.gmra.mxu0 %v4151
        %v4250 = vpop.f32.mrf.mxu0
        %v4251 = vadd.f32 0.0, %v4250
        %v4252 = vpop.f32.mrf.mxu0
        %4253 = vmatprep.mubr.f32.mxu0 0.0
        %4254 = vmatmul.mubr.f32.gmra.mxu0 %v4154
        %v4255 = vpop.f32.mrf.mxu0
        %v4256 = vadd.f32 0.0, %v4255
        %v4257 = vpop.f32.mrf.mxu0
        %4258 = vmatprep.mubr.f32.mxu0 0.0
        %4259 = vmatmul.mubr.f32.gmra.mxu0 %v4157
        %v4260 = vpop.f32.mrf.mxu0
        %v4261 = vadd.f32 0.0, %v4260
        %v4262 = vpop.f32.mrf.mxu0
        %4263 = vdwg.mxu0
        %v4264 = vadd.f32 %v4127, %v4226
        %v4265 = vadd.f32 %v4128, %v4231
        %v4266 = vadd.f32 %v4129, %v4236
        %v4267 = vadd.f32 %v4130, %v4241
        %v4268 = vadd.f32 %v4131, %v4246
        %v4269 = vadd.f32 %v4132, %v4251
        %v4270 = vadd.f32 %v4133, %v4256
        %v4271 = vadd.f32 %v4134, %v4261
        %v4272 = vadd.f32 %v4264, %v600
        %v4273 = vadd.f32 %v4265, %v601
        %v4274 = vadd.f32 %v4266, %v602
        %v4275 = vadd.f32 %v4267, %v603
        %v4276 = vadd.f32 %v4268, %v604
        %v4277 = vadd.f32 %v4269, %v605
        %v4278 = vadd.f32 %v4270, %v606
        %v4279 = vadd.f32 %v4271, %v607
        %v4280 = vsel %vm612, %v4272, 0.0
        %4281 = vadd.xlane.f32.xlu0 %v4280
        %v4282 = vpop.xlane.xlu0 %4281
        %v4283 = vsel %vm612, %v4273, 0.0
        %4284 = vadd.xlane.f32.xlu0 %v4283
        %v4285 = vpop.xlane.xlu0 %4284
        %v4286 = vsel %vm612, %v4274, 0.0
        %4287 = vadd.xlane.f32.xlu0 %v4286
        %v4288 = vpop.xlane.xlu0 %4287
        %v4289 = vsel %vm612, %v4275, 0.0
        %4290 = vadd.xlane.f32.xlu0 %v4289
        %v4291 = vpop.xlane.xlu0 %4290
        %v4292 = vsel %vm612, %v4276, 0.0
        %4293 = vadd.xlane.f32.xlu0 %v4292
        %v4294 = vpop.xlane.xlu0 %4293
        %v4295 = vsel %vm612, %v4277, 0.0
        %4296 = vadd.xlane.f32.xlu0 %v4295
        %v4297 = vpop.xlane.xlu0 %4296
        %v4298 = vsel %vm612, %v4278, 0.0
        %4299 = vadd.xlane.f32.xlu0 %v4298
        %v4300 = vpop.xlane.xlu0 %4299
        %v4301 = vsel %vm612, %v4279, 0.0
        %4302 = vadd.xlane.f32.xlu0 %v4301
        %v4303 = vpop.xlane.xlu0 %4302
        %v4304 = vrcp.pop 32.0
        %v4305 = vmul.f32 %v4282, %v4304
        %v4306 = vmul.f32 %v4285, %v4304
        %v4307 = vmul.f32 %v4288, %v4304
        %v4308 = vmul.f32 %v4291, %v4304
        %v4309 = vmul.f32 %v4294, %v4304
        %v4310 = vmul.f32 %v4297, %v4304
        %v4311 = vmul.f32 %v4300, %v4304
        %v4312 = vmul.f32 %v4303, %v4304
        %v4313 = vsub.f32 %v4272, %v4305
        %v4314 = vsub.f32 %v4273, %v4306
        %v4315 = vsub.f32 %v4274, %v4307
        %v4316 = vsub.f32 %v4275, %v4308
        %v4317 = vsub.f32 %v4276, %v4309
        %v4318 = vsub.f32 %v4277, %v4310
        %v4319 = vsub.f32 %v4278, %v4311
        %v4320 = vsub.f32 %v4279, %v4312
        %v4321 = vmul.f32 %v4313, %v4313
        %v4322 = vmul.f32 %v4314, %v4314
        %v4323 = vmul.f32 %v4315, %v4315
        %v4324 = vmul.f32 %v4316, %v4316
        %v4325 = vmul.f32 %v4317, %v4317
        %v4326 = vmul.f32 %v4318, %v4318
        %v4327 = vmul.f32 %v4319, %v4319
        %v4328 = vmul.f32 %v4320, %v4320
        %v4329 = vsel %vm612, %v4321, 0.0
        %4330 = vadd.xlane.f32.xlu0 %v4329
        %v4331 = vpop.xlane.xlu0 %4330
        %v4332 = vsel %vm612, %v4322, 0.0
        %4333 = vadd.xlane.f32.xlu0 %v4332
        %v4334 = vpop.xlane.xlu0 %4333
        %v4335 = vsel %vm612, %v4323, 0.0
        %4336 = vadd.xlane.f32.xlu0 %v4335
        %v4337 = vpop.xlane.xlu0 %4336
        %v4338 = vsel %vm612, %v4324, 0.0
        %4339 = vadd.xlane.f32.xlu0 %v4338
        %v4340 = vpop.xlane.xlu0 %4339
        %v4341 = vsel %vm612, %v4325, 0.0
        %4342 = vadd.xlane.f32.xlu0 %v4341
        %v4343 = vpop.xlane.xlu0 %4342
        %v4344 = vsel %vm612, %v4326, 0.0
        %4345 = vadd.xlane.f32.xlu0 %v4344
        %v4346 = vpop.xlane.xlu0 %4345
        %v4347 = vsel %vm612, %v4327, 0.0
        %4348 = vadd.xlane.f32.xlu0 %v4347
        %v4349 = vpop.xlane.xlu0 %4348
        %v4350 = vsel %vm612, %v4328, 0.0
        %4351 = vadd.xlane.f32.xlu0 %v4350
        %v4352 = vpop.xlane.xlu0 %4351
        %v4353 = vmul.f32 %v4331, %v4304
        %v4354 = vmul.f32 %v4334, %v4304
        %v4355 = vmul.f32 %v4337, %v4304
        %v4356 = vmul.f32 %v4340, %v4304
        %v4357 = vmul.f32 %v4343, %v4304
        %v4358 = vmul.f32 %v4346, %v4304
        %v4359 = vmul.f32 %v4349, %v4304
        %v4360 = vmul.f32 %v4352, %v4304
        %v4361 = vadd.f32 %v4353, 1e-05
        %v4362 = vadd.f32 %v4354, 1e-05
        %v4363 = vadd.f32 %v4355, 1e-05
        %v4364 = vadd.f32 %v4356, 1e-05
        %v4365 = vadd.f32 %v4357, 1e-05
        %v4366 = vadd.f32 %v4358, 1e-05
        %v4367 = vadd.f32 %v4359, 1e-05
        %v4368 = vadd.f32 %v4360, 1e-05
        %v4369 = vrsqrt.pop %v4361
        %v4370 = vrsqrt.pop %v4362
        %v4371 = vrsqrt.pop %v4363
        %v4372 = vrsqrt.pop %v4364
        %v4373 = vrsqrt.pop %v4365
        %v4374 = vrsqrt.pop %v4366
        %v4375 = vrsqrt.pop %v4367
        %v4376 = vrsqrt.pop %v4368
        %v4377 = vmul.f32 %v4313, %v4369
        %v4378 = vmul.f32 %v4314, %v4370
        %v4379 = vmul.f32 %v4315, %v4371
        %v4380 = vmul.f32 %v4316, %v4372
        %v4381 = vmul.f32 %v4317, %v4373
        %v4382 = vmul.f32 %v4318, %v4374
        %v4383 = vmul.f32 %v4319, %v4375
        %v4384 = vmul.f32 %v4320, %v4376
        %v4385 = vld [vmem:[%s8] sm:$0x1]
        %v4387 = vlaneseq
        %v4388 = vshrl.u32 %v4387, 7
        %v4389 = vsub.s32 0, %v4388
        %v4390 = vrot.slane %v4385, %v4389
        %v4392 = vmul.f32 %v4377, %v4390
        %v4393 = vmul.f32 %v4378, %v4390
        %v4394 = vmul.f32 %v4379, %v4390
        %v4395 = vmul.f32 %v4380, %v4390
        %v4396 = vmul.f32 %v4381, %v4390
        %v4397 = vmul.f32 %v4382, %v4390
        %v4398 = vmul.f32 %v4383, %v4390
        %v4399 = vmul.f32 %v4384, %v4390
        %v4400 = vld [vmem:[%s9] sm:$0x1]
        %v4402 = vlaneseq
        %v4403 = vshrl.u32 %v4402, 7
        %v4404 = vsub.s32 0, %v4403
        %v4405 = vrot.slane %v4400, %v4404
        %v4407 = vadd.f32 %v4392, %v4405
        %v4408 = vadd.f32 %v4393, %v4405
        %v4409 = vadd.f32 %v4394, %v4405
        %v4410 = vadd.f32 %v4395, %v4405
        %v4411 = vadd.f32 %v4396, %v4405
        %v4412 = vadd.f32 %v4397, %v4405
        %v4413 = vadd.f32 %v4398, %v4405
        %v4414 = vadd.f32 %v4399, %v4405
        %4415 = vst.msk [vmem:[%s569] sm:$0xff] %vm612, %v4407
        %4416 = vst.msk [vmem:[%s569 + $0x8] sm:$0xff] %vm612, %v4408
        %4417 = vst.msk [vmem:[%s569 + $0x10] sm:$0xff] %vm612, %v4409
        %4418 = vst.msk [vmem:[%s569 + $0x18] sm:$0xff] %vm612, %v4410
        %4419 = vst.msk [vmem:[%s569 + $0x20] sm:$0xff] %vm612, %v4411
        %4420 = vst.msk [vmem:[%s569 + $0x28] sm:$0xff] %vm612, %v4412
        %4421 = vst.msk [vmem:[%s569 + $0x30] sm:$0xff] %vm612, %v4413
        %4422 = vst.msk [vmem:[%s569 + $0x38] sm:$0xff] %vm612, %v4414
        %s4423 = sand.u32 %s282, 1
        %s4424 = sand.u32 %s282, 1
        %s4425 = smul.addr %s4424, 64
        %s4426 = scalar_lea.vmem [#allocation4], %s4425
        %s4427 = sand.u32 %s310, 1
        %s4428 = scalar_lea.sflag [#allocation6], %s4427
        %s4429 = sand.u32 %s310, 1
        %s4430 = smul.addr %s4429, 256
        %s4431 = scalar_lea.vmem [#allocation5], %s4430
        // Predicated region
        $region137: #{multi_head_attention.1} parent=127 // pred_check
          %p4432 = pneg %p292
        $region138: #{multi_head_attention.1} parent=127 // pred_check_branch
          %4434 = sbr.rel (%p4432) target = $region140
        $region139: #{multi_head_attention.1} parent=127 // pred_region
          %s4435 = smul.u32 2, %s30
          %s4436 = smul.u32 4, %s31
          %s4437 = smul.addr %s4435, 8
          %s4438 = sadd.s32 %s4436, %s4437
          %s4439 = smul.addr %s4438, 8
          %s4440 = scalar_lea.vmem %s10, %s4439
          // Predicated region
          $region141: #{multi_head_attention.1} parent=139 // pred_check
            _
          $region142: #{multi_head_attention.1} parent=139 // pred_check_branch
            %4442 = sbr.rel (0) target = $region144
          $region143: #{multi_head_attention.1} parent=139 // pred_region
            // Predicated region
            $region145: #{multi_head_attention.1} parent=143 // pred_check
              _
            $region146: #{multi_head_attention.1} parent=143 // pred_check_branch
              %4444 = sbr.rel (0) target = $region148
            $region147: #{multi_head_attention.1} parent=143 // pred_region
              // Predicated region
              $region160: #{multi_head_attention.1} parent=147 // pred_check
                _
              $region161: #{multi_head_attention.1} parent=147 // pred_check_branch
                %4474 = sbr.rel (0) target = $region163
              $region162: #{multi_head_attention.1} parent=147 // pred_region
                loop: start=0, step=1, limit=1
                $region164: #{multi_head_attention.1} parent=162 // loop_pre_header
                  _
                $region165: #{multi_head_attention.1} parent=162 // loop_header
                  %s4476 = sphi 0, %s4480
                  %p4477 = scmp.ge.s32.totalorder %s4476, 1
                  %s4481 = sphi %s4426, %s4426
                  %s4482 = sphi %s4440, %s4440
                $region166: #{multi_head_attention.1} parent=162 // loop_header_branch
                  %4479 = sbr.rel (%p4477) target = $region170
                $region167: #{multi_head_attention.1} parent=162 // loop_body
                  %v4483 = vld [vmem:[%s4481] sm:$0xff]
                  %4484 = vst [vmem:[%s4482] sm:$0xff] %v4483
                  %v4485 = vld [vmem:[%s4481 + $0x8] sm:$0xff]
                  %4486 = vst [vmem:[%s4482 + $0x8] sm:$0xff] %v4485
                  %v4487 = vld [vmem:[%s4481 + $0x10] sm:$0xff]
                  %4488 = vst [vmem:[%s4482 + $0x10] sm:$0xff] %v4487
                  %v4489 = vld [vmem:[%s4481 + $0x18] sm:$0xff]
                  %4490 = vst [vmem:[%s4482 + $0x18] sm:$0xff] %v4489
                  %v4491 = vld [vmem:[%s4481 + $0x20] sm:$0xff]
                  %4492 = vst [vmem:[%s4482 + $0x40] sm:$0xff] %v4491
                  %v4493 = vld [vmem:[%s4481 + $0x28] sm:$0xff]
                  %4494 = vst [vmem:[%s4482 + $0x48] sm:$0xff] %v4493
                  %v4495 = vld [vmem:[%s4481 + $0x30] sm:$0xff]
                  %4496 = vst [vmem:[%s4482 + $0x50] sm:$0xff] %v4495
                  %v4497 = vld [vmem:[%s4481 + $0x38] sm:$0xff]
                  %4498 = vst [vmem:[%s4482 + $0x58] sm:$0xff] %v4497
                $region168: #{multi_head_attention.1} parent=162 // loop_footer
                  %s4480 = sadd.s32 1, %s4476
                $region169: #{multi_head_attention.1} parent=162 // loop_footer_branch
                  %4475 = sbr.rel target = $region165
                $region170: #{multi_head_attention.1} parent=162 // loop_exit
                  _
              $region163: #{multi_head_attention.1} parent=147 // pred_fallthru
                _
              // Predicated region
              $region171: #{multi_head_attention.1} parent=147 // pred_check
                _
              $region172: #{multi_head_attention.1} parent=147 // pred_check_branch
                %4500 = sbr.rel target = $region174
              $region173: #{multi_head_attention.1} parent=147 // pred_region
                _
              $region174: #{multi_head_attention.1} parent=147 // pred_fallthru
                _
            $region148: #{multi_head_attention.1} parent=143 // pred_fallthru
              _
            // Predicated region
            $region149: #{multi_head_attention.1} parent=143 // pred_check
              _
            $region150: #{multi_head_attention.1} parent=143 // pred_check_branch
              %4446 = sbr.rel target = $region152
            $region151: #{multi_head_attention.1} parent=143 // pred_region
              %s4448 = ssub.s32 256, 1
              loop: start=0, step=1, limit=1
              $region153: #{multi_head_attention.1} parent=151 // loop_pre_header
                _
              $region154: #{multi_head_attention.1} parent=151 // loop_header
                %s4450 = sphi 0, %s4454
                %p4451 = scmp.ge.s32.totalorder %s4450, 1
                %s4455 = sphi %s4426, %s4426
                %s4456 = sphi %s4440, %s4440
              $region155: #{multi_head_attention.1} parent=151 // loop_header_branch
                %4453 = sbr.rel (%p4451) target = $region159
              $region156: #{multi_head_attention.1} parent=151 // loop_body
                %v4457 = vld [vmem:[%s4455] sm:%s4448]
                %4458 = vst [vmem:[%s4456] sm:%s4448] %v4457
                %v4459 = vld [vmem:[%s4455 + $0x8] sm:%s4448]
                %4460 = vst [vmem:[%s4456 + $0x8] sm:%s4448] %v4459
                %v4461 = vld [vmem:[%s4455 + $0x10] sm:%s4448]
                %4462 = vst [vmem:[%s4456 + $0x10] sm:%s4448] %v4461
                %v4463 = vld [vmem:[%s4455 + $0x18] sm:%s4448]
                %4464 = vst [vmem:[%s4456 + $0x18] sm:%s4448] %v4463
                %v4465 = vld [vmem:[%s4455 + $0x20] sm:%s4448]
                %4466 = vst [vmem:[%s4456 + $0x40] sm:%s4448] %v4465
                %v4467 = vld [vmem:[%s4455 + $0x28] sm:%s4448]
                %4468 = vst [vmem:[%s4456 + $0x48] sm:%s4448] %v4467
                %v4469 = vld [vmem:[%s4455 + $0x30] sm:%s4448]
                %4470 = vst [vmem:[%s4456 + $0x50] sm:%s4448] %v4469
                %v4471 = vld [vmem:[%s4455 + $0x38] sm:%s4448]
                %4472 = vst [vmem:[%s4456 + $0x58] sm:%s4448] %v4471
              $region157: #{multi_head_attention.1} parent=151 // loop_footer
                %s4454 = sadd.s32 1, %s4450
              $region158: #{multi_head_attention.1} parent=151 // loop_footer_branch
                %4449 = sbr.rel target = $region154
              $region159: #{multi_head_attention.1} parent=151 // loop_exit
                _
            $region152: #{multi_head_attention.1} parent=143 // pred_fallthru
              _
          $region144: #{multi_head_attention.1} parent=139 // pred_fallthru
            _
          %4501 = vnop
        $region140: #{multi_head_attention.1} parent=127 // pred_fallthru
          _
        // Predicated region
        $region175: #{multi_head_attention.1} parent=127 // pred_check
          %p4502 = pneg %p320
        $region176: #{multi_head_attention.1} parent=127 // pred_check_branch
          %4504 = sbr.rel (%p4502) target = $region178
        $region177: #{multi_head_attention.1} parent=127 // pred_region
          #allocation8 [shape = 'u32[6]{0}', space=smem, size = 0x18, scoped, tag = 'DMA stride descriptor']
          %s4505 = smul.u32 2, %s30
          %s4506 = smul.u32 4, %s31
          %s4508 = ssub.s32 4096, 4096
          %4509 = vsyncadd %s4428, %s4508
          %s4510 = smul.addr %s4505, 32
          %s4511 = sadd.s32 %s4506, %s4510
          %s4512 = smul.addr %s4511, 128
          %s4513 = scalar_lea.hbm %s11, %s4512
          %s4515 = sshll.u32 1, 14
          %s4516 = sxor.u32 4294967295, %s4515
          %s4519 = sshll.u32 7, 18
          %s4520 = sxor.u32 4294967295, %s4519
          %s4521 = sand.u32 0, %s4520
          %s4523 = sor.u32 %s4521, 0
          %s4524 = sshll.u32 %s4431, 4
          %s4525 = int_to_ptr.vmem [resolvable:$true] %s4524
          %4531 = sst [smem:[#allocation8]] 512
          %s4532 = scalar_lea.smem [#allocation8], 1
          %4533 = sst [smem:[%s4532]] 1024
          %s4534 = scalar_lea.smem [#allocation8], 2
          %4535 = sst [smem:[%s4534]] 4
          %s4536 = scalar_lea.smem [#allocation8], 3
          %4537 = sst [smem:[%s4536]] 128
          %s4538 = scalar_lea.smem [#allocation8], 4
          %4539 = sst [smem:[%s4538]] 128
          %s4540 = scalar_lea.smem [#allocation8], 5
          %4541 = sst [smem:[%s4540]] 8
          %4543 = dma.general %s4525, 4096, %s4513, %s4428, 131072, [#allocation8], %s4523, 0
        $region178: #{multi_head_attention.1} parent=127 // pred_fallthru
          _
      $region128: #{multi_head_attention.1} parent=5 // pred_fallthru
        _
      %p4544 = scmp.le.s32.totalorder 2, %s21
      // Predicated region
      $region179: #{multi_head_attention.1} parent=5 // pred_check
        %p4545 = pneg %p4544
      $region180: #{multi_head_attention.1} parent=5 // pred_check_branch
        %4547 = sbr.rel (%p4545) target = $region182
      $region181: #{multi_head_attention.1} parent=5 // pred_region
        %s4548 = ssub.s32 %s21, 2
        // Predicated region
        $region183: #{multi_head_attention.1} parent=181 // pred_check
          %p4549 = pneg %p298
        $region184: #{multi_head_attention.1} parent=181 // pred_check_branch
          %4551 = sbr.rel (%p4549) target = $region186
        $region185: #{multi_head_attention.1} parent=181 // pred_region
          %s4552 = sand.u32 %s283, 1
          %s4553 = sand.u32 %s283, 1
          %s4554 = smul.addr %s4553, 64
          %s4555 = scalar_lea.vmem [#allocation4], %s4554
        $region186: #{multi_head_attention.1} parent=181 // pred_fallthru
          _
        // Predicated region
        $region187: #{multi_head_attention.1} parent=181 // pred_check
          %p4556 = pneg %p326
        $region188: #{multi_head_attention.1} parent=181 // pred_check_branch
          %4558 = sbr.rel (%p4556) target = $region190
        $region189: #{multi_head_attention.1} parent=181 // pred_region
          %s4559 = sand.u32 %s311, 1
          %s4560 = scalar_lea.sflag [#allocation6], %s4559
          %s4561 = sand.u32 %s311, 1
          %s4562 = smul.addr %s4561, 256
          %s4563 = scalar_lea.vmem [#allocation5], %s4562
          %4564 = dma.done %s4560, 4096
        $region190: #{multi_head_attention.1} parent=181 // pred_fallthru
          _
      $region182: #{multi_head_attention.1} parent=5 // pred_fallthru
        _
    $region6: #{multi_head_attention.1} parent=1 // loop_footer
      %s25 = sadd.s32 1, %s21
    $region7: #{multi_head_attention.1} parent=1 // loop_footer_branch
      %20 = sbr.rel target = $region3
    $region8: #{multi_head_attention.1} parent=1 // loop_exit
      _
    %4565 = vsyncpa [#allocation6], 1
    %s4566 = scalar_lea.sflag [#allocation6], 1
    %4567 = vsyncpa %s4566, 1

</llo_original>
